<compile_context>
chip_gen: v7x
topology: tpu7x:2x2x1
jax: 0.10.0
libtpu: 0.0.40
codegen_flags: <defaults>
</compile_context>

<pallas_src>
import jax
import jax.numpy as jnp
from jax import lax
from jax.experimental import pallas as pl
from jax.experimental.pallas import tpu as pltpu


def _round_up(x, m):
    return (x + m - 1) // m * m


# --------------------------- packed-weight layout --------------------------- #
# bf16 weight slab: (512, 128) — each weight stored (out, in), columns zero-
# padded to 128, row offsets multiples of 16 (bf16 sublane packing).
_R_W1A, _R_W1B, _R_W2, _R_WA, _R_WB, _R_W4, _R_W5, _R_W6T = (
    0, 144, 288, 320, 384, 448, 480, 496)
_SLAB_ROWS, _SLAB_COLS = 512, 128
# f32 bias slab: (288, 1) — column biases, row offsets multiples of 8.
_B_BC1, _B_B2, _B_BA, _B_B4, _B_B5 = 0, 144, 176, 240, 272
_BIAS_ROWS = 288


# ----------------------------- Pallas kernel ------------------------------ #
def _model_kernel(x1_ref, x2_ref, w_ref, b_ref, b6_ref, out_ref):
    bf16 = jnp.bfloat16
    f32 = jnp.float32
    relu = lambda v: jnp.maximum(v, 0.0)

    x1 = x1_ref[...].astype(bf16)            # (TB, 10) batch-major input
    x2 = x2_ref[...].astype(bf16)            # (TB, 6)

    def dot_bt(w, x):   # w:(out,in) . x:(TB,in) -> (out,TB)   (rhs transposed)
        return lax.dot_general(w, x, (((1,), (1,)), ((), ())),
                               preferred_element_type=f32)

    def dot_bn(w, h):   # w:(out,in) . h:(in,TB) -> (out,TB)
        return lax.dot_general(w, h, (((1,), (0,)), ((), ())),
                               preferred_element_type=f32)

    # ---- fused first layer: rows of g = [h1(0:32); h2(32:64); x3(64:144)] ----
    g = relu(dot_bt(w_ref[_R_W1A:_R_W1A + 144, 0:10], x1)
             + dot_bt(w_ref[_R_W1B:_R_W1B + 144, 0:6], x2)
             + b_ref[_B_BC1:_B_BC1 + 144, :]).astype(bf16)            # (144, TB)

    # ---- net3_.fc2 on cat(h1, h2) = g[0:64]  (single K=64 matmul) ----
    x12 = relu(dot_bn(w_ref[_R_W2:_R_W2 + 32, 0:64], g[0:64, :])
               + b_ref[_B_B2:_B_B2 + 32, :]).astype(bf16)             # (32, TB)

    # ---- fc2_1..5 folded with fc3 (x6 never materialised) ----
    h = relu(dot_bn(w_ref[_R_WA:_R_WA + 64, 0:32], x12)
             + dot_bn(w_ref[_R_WB:_R_WB + 64, 0:80], g[64:144, :])
             + b_ref[_B_BA:_B_BA + 64, :]).astype(bf16)               # (64, TB)

    h = relu(dot_bn(w_ref[_R_W4:_R_W4 + 32, 0:64], h)
             + b_ref[_B_B4:_B_B4 + 32, :]).astype(bf16)               # (32, TB)
    h = relu(dot_bn(w_ref[_R_W5:_R_W5 + 16, 0:32], h)
             + b_ref[_B_B5:_B_B5 + 16, :]).astype(bf16)               # (16, TB)

    # ---- final layer emitted batch-major: h^T @ W6^T + b6  -> (TB, 6) ----
    out = lax.dot_general(h, w_ref[_R_W6T:_R_W6T + 16, 0:6],
                          (((0,), (0,)), ((), ())),
                          preferred_element_type=f32)                 # (TB, 6)
    out_ref[...] = (out + b6_ref[...]).astype(out_ref.dtype)


# ------------------------------ JAX wrapper -------------------------------- #
def model_forward(x1, x2, params, *, tile_b=2048, out_dtype=jnp.float32):
    """x1: (B,10) f32, x2: (B,6) f32  ->  (B,6). No wrapper-side HBM passes."""
    B = x1.shape[0]
    tile = max(128, min(_round_up(tile_b, 128), _round_up(B, 128)))
    num_tiles = pl.cdiv(B, tile)           # ragged last block handled by Pallas

    w_slab, b_slab, b6 = params["w_slab"], params["b_slab"], params["b6"]

    in_specs = [
        pl.BlockSpec((tile, 10), lambda i: (i, 0)),
        pl.BlockSpec((tile, 6), lambda i: (i, 0)),
        pl.BlockSpec(w_slab.shape, lambda i: (0, 0)),   # grid-invariant: DMA'd once
        pl.BlockSpec(b_slab.shape, lambda i: (0, 0)),
        pl.BlockSpec(b6.shape, lambda i: (0, 0)),
    ]
    out_spec = pl.BlockSpec((tile, 6), lambda i: (i, 0))

    macs = (144 * 10 + 144 * 6 + 32 * 64 + 64 * 32 + 64 * 80
            + 32 * 64 + 16 * 32 + 16 * 6)
    cost = pl.CostEstimate(
        flops=2 * macs * B, transcendentals=0,
        bytes_accessed=int(x1.size * 4 + x2.size * 4
                           + B * 6 * jnp.dtype(out_dtype).itemsize
                           + w_slab.size * 2 + b_slab.size * 4 + b6.size * 4))

    def run(dim_sem):
        return pl.pallas_call(
            _model_kernel,
            out_shape=jax.ShapeDtypeStruct((B, 6), out_dtype),
            grid_spec=pltpu.PrefetchScalarGridSpec(
                num_scalar_prefetch=0,
                grid=(num_tiles,),
                in_specs=in_specs,
                out_specs=out_spec),
            compiler_params=pltpu.CompilerParams(
                dimension_semantics=(dim_sem,),
                vmem_limit_bytes=64 * 1024 * 1024),
            cost_estimate=cost,
        )(x1, x2, w_slab, b_slab, b6)

    # v7x: shard batch tiles across both TensorCores; fall back if unsupported.
    candidates = []
    core_par = getattr(pltpu, "CORE_PARALLEL", None)
    if core_par is not None and num_tiles > 1:
        candidates.append(core_par)
    candidates.append("parallel")
    err = None
    for ds in candidates:
        try:
            return run(ds)
        except Exception as e:   # unsupported semantics on this chip/runtime
            err = e
    raise err


# ------------------------- deterministic parameters ------------------------ #
def _linear(key, in_f, out_f):
    kw, kb = jax.random.split(key)
    scale = 1.0 / jnp.sqrt(in_f)
    w = jax.random.uniform(kw, (out_f, in_f), jnp.float32, -scale, scale)  # torch (out,in)
    b = jax.random.uniform(kb, (out_f,), jnp.float32, -scale, scale)
    return w, b


def build_params(seed=0):
    # TODO(synk): Net5/Net3_ widths (fc1_3_i: 2->16, net3_ out: 32) are assumed and
    # weights are synthesized instead of loading kube_mm_scheduler/weight/net5.pt.
    keys = jax.random.split(jax.random.PRNGKey(seed), 20)
    ki = iter(keys)

    raw = {}
    raw["w11"], raw["b11"] = _linear(next(ki), 10, 32)   # net3_.fc1_1
    raw["w12"], raw["b12"] = _linear(next(ki), 6, 32)    # net3_.fc1_2
    raw["w2"], raw["b2"] = _linear(next(ki), 64, 32)     # net3_.fc2
    raw["w13"], raw["b13"] = [], []
    for _ in range(5):                                    # fc1_3_1..5
        w, b = _linear(next(ki), 2, 16)
        raw["w13"].append(w); raw["b13"].append(b)
    raw["w2_"], raw["b2_"] = [], []
    for _ in range(5):                                    # fc2_1..5
        w, b = _linear(next(ki), 48, 16)
        raw["w2_"].append(w); raw["b2_"].append(b)
    raw["w3"], raw["b3"] = _linear(next(ki), 80, 64)
    raw["w4"], raw["b4"] = _linear(next(ki), 64, 32)
    raw["w5"], raw["b5"] = _linear(next(ki), 32, 16)
    raw["w6"], raw["b6"] = _linear(next(ki), 16, 6)

    # block-diagonal fc1_3_* acting on x1
    wbd = jnp.zeros((80, 10), jnp.float32)
    for i in range(5):
        wbd = wbd.at[16 * i:16 * (i + 1), 2 * i:2 * i + 2].set(raw["w13"][i])
    b3cat = jnp.concatenate(raw["b13"])                   # (80,)

    # fused first layer: rows [h1; h2; x3]
    w1a = jnp.concatenate([raw["w11"], jnp.zeros((32, 10), jnp.float32), wbd], axis=0)  # (144,10)
    w1b = jnp.concatenate([jnp.zeros((32, 6), jnp.float32), raw["w12"],
                           jnp.zeros((80, 6), jnp.float32)], axis=0)                    # (144,6)
    bc1 = jnp.concatenate([raw["b11"], raw["b12"], b3cat])                              # (144,)

    # fold fc2_1..5 (no activation on x5_i) into fc3
    wa_full = jnp.concatenate([w[:, :32] for w in raw["w2_"]], axis=0)    # (80,32)
    wbbd = jnp.zeros((80, 80), jnp.float32)
    for i in range(5):
        wbbd = wbbd.at[16 * i:16 * (i + 1), 16 * i:16 * (i + 1)].set(raw["w2_"][i][:, 32:])
    b5cat = jnp.concatenate(raw["b2_"])                                   # (80,)
    wA = raw["w3"] @ wa_full                                              # (64,32)
    wB = raw["w3"] @ wbbd                                                 # (64,80)
    bA = raw["w3"] @ b5cat + raw["b3"]                                    # (64,)
    w6t = raw["w6"].T                                                     # (16,6)

    # ---- pack into one bf16 weight slab + one f32 bias slab ----
    def put(slab, r, w):
        return slab.at[r:r + w.shape[0], :w.shape[1]].set(w)

    w_slab = jnp.zeros((_SLAB_ROWS, _SLAB_COLS), jnp.float32)
    w_slab = put(w_slab, _R_W1A, w1a)
    w_slab = put(w_slab, _R_W1B, w1b)
    w_slab = put(w_slab, _R_W2, raw["w2"])
    w_slab = put(w_slab, _R_WA, wA)
    w_slab = put(w_slab, _R_WB, wB)
    w_slab = put(w_slab, _R_W4, raw["w4"])
    w_slab = put(w_slab, _R_W5, raw["w5"])
    w_slab = put(w_slab, _R_W6T, w6t)
    w_slab = w_slab.astype(jnp.bfloat16)

    b_slab = jnp.concatenate([bc1, raw["b2"], bA, raw["b4"], raw["b5"]]).reshape(-1, 1)
    assert b_slab.shape[0] == _BIAS_ROWS
    b6 = raw["b6"].reshape(1, 6)

    kernel_params = dict(w_slab=w_slab,
                         b_slab=b_slab.astype(jnp.float32),
                         b6=b6.astype(jnp.float32))
    return kernel_params, raw


# ------------------------------- reference --------------------------------- #
def reference_forward(x1, x2, raw):
    # Mirrors the PyTorch forward structure exactly (f32).
    relu = lambda v: jnp.maximum(v, 0.0)
    lin = lambda x, w, b: x @ w.T + b
    h1 = relu(lin(x1, raw["w11"], raw["b11"]))
    h2 = relu(lin(x2, raw["w12"], raw["b12"]))
    x12 = relu(lin(jnp.concatenate([h1, h2], axis=1), raw["w2"], raw["b2"]))
    x3 = [relu(lin(x1[:, 2 * i:2 * i + 2], raw["w13"][i], raw["b13"][i])) for i in range(5)]
    x5 = [lin(jnp.concatenate([x12, x3[i]], axis=1), raw["w2_"][i], raw["b2_"][i]) for i in range(5)]
    x6 = jnp.concatenate(x5, axis=1)
    h = relu(lin(x6, raw["w3"], raw["b3"]))
    h = relu(lin(h, raw["w4"], raw["b4"]))
    h = relu(lin(h, raw["w5"], raw["b5"]))
    return lin(h, raw["w6"], raw["b6"])


if __name__ == "__main__":
    B = 900   # small; exercises a ragged block (default tile) and a 4-step grid (tile 256)
    k1, k2 = jax.random.split(jax.random.PRNGKey(0))
    x1 = jax.random.normal(k1, (B, 10), jnp.float32)
    x2 = jax.random.normal(k2, (B, 6), jnp.float32)

    kernel_params, raw = build_params(seed=0)

    out = jax.block_until_ready(model_forward(x1, x2, kernel_params))                 # 1 ragged tile
    out_small = jax.block_until_ready(model_forward(x1, x2, kernel_params, tile_b=256))  # multi-step grid

    ref = reference_forward(x1, x2, raw)
    assert out.shape == (B, 6)
    err = float(jnp.max(jnp.abs(out - ref)))
    err2 = float(jnp.max(jnp.abs(out_small - ref)))
    assert err < 5e-2 and err2 < 5e-2, f"max abs err {err} / {err2}"
    print("KERNEL_OK")
</pallas_src>

<mosaic_0001>
module attributes {stable_mosaic.version = 11 : i64} {
  func.func @_model_kernel(%arg0: i32, %arg1: memref<1024x10xf32, #tpu.memory_space<vmem>>, %arg2: memref<1024x6xf32, #tpu.memory_space<vmem>>, %arg3: memref<512x128xbf16, #tpu.memory_space<vmem>>, %arg4: memref<288x1xf32, #tpu.memory_space<vmem>>, %arg5: memref<1x6xf32, #tpu.memory_space<vmem>>, %arg6: memref<1024x6xf32, #tpu.memory_space<vmem>>) attributes {dimension_semantics = [#tpu.dimension_semantics<parallel>], iteration_bounds = array<i64: 1>, scalar_prefetch = 0 : i64, scratch_operands = 0 : i64, tpu.core_type = #tpu.core_type<tc>, window_params = [{transform_indices = @transform_0, window_bounds = array<i64: 1024, 10>}, {transform_indices = @transform_1, window_bounds = array<i64: 1024, 6>}, {pipeline_mode = #tpu.pipeline_mode<synchronous>, transform_indices = @transform_2, window_bounds = array<i64: 512, 128>}, {pipeline_mode = #tpu.pipeline_mode<synchronous>, transform_indices = @transform_3, window_bounds = array<i64: 288, 1>}, {pipeline_mode = #tpu.pipeline_mode<synchronous>, transform_indices = @transform_4, window_bounds = array<i64: 1, 6>}, {transform_indices = @transform_5, window_bounds = array<i64: 1024, 6>}]} {
    %c0 = arith.constant 0 : index
    %c0_0 = arith.constant 0 : index
    %0 = vector.load %arg1[%c0, %c0_0] : memref<1024x10xf32, #tpu.memory_space<vmem>>, vector<1024x10xf32>
    %1 = arith.truncf %0 : vector<1024x10xf32> to vector<1024x10xbf16>
    %c0_1 = arith.constant 0 : index
    %c0_2 = arith.constant 0 : index
    %2 = vector.load %arg2[%c0_1, %c0_2] : memref<1024x6xf32, #tpu.memory_space<vmem>>, vector<1024x6xf32>
    %3 = arith.truncf %2 : vector<1024x6xf32> to vector<1024x6xbf16>
    %c0_3 = arith.constant 0 : index
    %c0_4 = arith.constant 0 : index
    %4 = vector.load %arg3[%c0_3, %c0_4] : memref<512x128xbf16, #tpu.memory_space<vmem>>, vector<144x10xbf16>
    %cst = arith.constant dense<0.000000e+00> : vector<144x1024xf32>
    %5 = tpu.matmul %4, %1, %cst {dimension_numbers = #tpu.dot_dimension_numbers<[1], [1], [0], [0], [0, 0, 1, 0], [], []>} : vector<144x10xbf16>, vector<1024x10xbf16>, vector<144x1024xf32> -> vector<144x1024xf32>
    %c144 = arith.constant 144 : index
    %c0_5 = arith.constant 0 : index
    %6 = vector.load %arg3[%c144, %c0_5] : memref<512x128xbf16, #tpu.memory_space<vmem>>, vector<144x6xbf16>
    %cst_6 = arith.constant dense<0.000000e+00> : vector<144x1024xf32>
    %7 = tpu.matmul %6, %3, %cst_6 {dimension_numbers = #tpu.dot_dimension_numbers<[1], [1], [0], [0], [0, 0, 1, 0], [], []>} : vector<144x6xbf16>, vector<1024x6xbf16>, vector<144x1024xf32> -> vector<144x1024xf32>
    %8 = arith.addf %5, %7 : vector<144x1024xf32>
    %c0_7 = arith.constant 0 : index
    %c0_8 = arith.constant 0 : index
    %9 = vector.load %arg4[%c0_7, %c0_8] : memref<288x1xf32, #tpu.memory_space<vmem>>, vector<144x1xf32>
    %10 = vector.broadcast %9 : vector<144x1xf32> to vector<144x1024xf32>
    %11 = arith.addf %8, %10 : vector<144x1024xf32>
    %cst_9 = arith.constant 0.000000e+00 : f32
    %12 = vector.broadcast %cst_9 : f32 to vector<144x1024xf32>
    %13 = arith.maximumf %11, %12 : vector<144x1024xf32>
    %14 = arith.truncf %13 : vector<144x1024xf32> to vector<144x1024xbf16>
    %c288 = arith.constant 288 : index
    %c0_10 = arith.constant 0 : index
    %15 = vector.load %arg3[%c288, %c0_10] : memref<512x128xbf16, #tpu.memory_space<vmem>>, vector<32x64xbf16>
    %16 = vector.extract_strided_slice %14 {offsets = [0, 0], sizes = [64, 1024], strides = [1, 1]} : vector<144x1024xbf16> to vector<64x1024xbf16>
    %cst_11 = arith.constant dense<0.000000e+00> : vector<32x1024xf32>
    %17 = tpu.matmul %15, %16, %cst_11 {dimension_numbers = #tpu.dot_dimension_numbers<[1], [0], [0], [1], [0, 0, 1, 1], [], []>} : vector<32x64xbf16>, vector<64x1024xbf16>, vector<32x1024xf32> -> vector<32x1024xf32>
    %c144_12 = arith.constant 144 : index
    %c0_13 = arith.constant 0 : index
    %18 = vector.load %arg4[%c144_12, %c0_13] : memref<288x1xf32, #tpu.memory_space<vmem>>, vector<32x1xf32>
    %19 = vector.broadcast %18 : vector<32x1xf32> to vector<32x1024xf32>
    %20 = arith.addf %17, %19 : vector<32x1024xf32>
    %cst_14 = arith.constant 0.000000e+00 : f32
    %21 = vector.broadcast %cst_14 : f32 to vector<32x1024xf32>
    %22 = arith.maximumf %20, %21 : vector<32x1024xf32>
    %23 = arith.truncf %22 : vector<32x1024xf32> to vector<32x1024xbf16>
    %c320 = arith.constant 320 : index
    %c0_15 = arith.constant 0 : index
    %24 = vector.load %arg3[%c320, %c0_15] : memref<512x128xbf16, #tpu.memory_space<vmem>>, vector<64x32xbf16>
    %cst_16 = arith.constant dense<0.000000e+00> : vector<64x1024xf32>
    %25 = tpu.matmul %24, %23, %cst_16 {dimension_numbers = #tpu.dot_dimension_numbers<[1], [0], [0], [1], [0, 0, 1, 1], [], []>} : vector<64x32xbf16>, vector<32x1024xbf16>, vector<64x1024xf32> -> vector<64x1024xf32>
    %c384 = arith.constant 384 : index
    %c0_17 = arith.constant 0 : index
    %26 = vector.load %arg3[%c384, %c0_17] : memref<512x128xbf16, #tpu.memory_space<vmem>>, vector<64x80xbf16>
    %27 = vector.extract_strided_slice %14 {offsets = [64, 0], sizes = [80, 1024], strides = [1, 1]} : vector<144x1024xbf16> to vector<80x1024xbf16>
    %cst_18 = arith.constant dense<0.000000e+00> : vector<64x1024xf32>
    %28 = tpu.matmul %26, %27, %cst_18 {dimension_numbers = #tpu.dot_dimension_numbers<[1], [0], [0], [1], [0, 0, 1, 1], [], []>} : vector<64x80xbf16>, vector<80x1024xbf16>, vector<64x1024xf32> -> vector<64x1024xf32>
    %29 = arith.addf %25, %28 : vector<64x1024xf32>
    %c176 = arith.constant 176 : index
    %c0_19 = arith.constant 0 : index
    %30 = vector.load %arg4[%c176, %c0_19] : memref<288x1xf32, #tpu.memory_space<vmem>>, vector<64x1xf32>
    %31 = vector.broadcast %30 : vector<64x1xf32> to vector<64x1024xf32>
    %32 = arith.addf %29, %31 : vector<64x1024xf32>
    %cst_20 = arith.constant 0.000000e+00 : f32
    %33 = vector.broadcast %cst_20 : f32 to vector<64x1024xf32>
    %34 = arith.maximumf %32, %33 : vector<64x1024xf32>
    %35 = arith.truncf %34 : vector<64x1024xf32> to vector<64x1024xbf16>
    %c448 = arith.constant 448 : index
    %c0_21 = arith.constant 0 : index
    %36 = vector.load %arg3[%c448, %c0_21] : memref<512x128xbf16, #tpu.memory_space<vmem>>, vector<32x64xbf16>
    %cst_22 = arith.constant dense<0.000000e+00> : vector<32x1024xf32>
    %37 = tpu.matmul %36, %35, %cst_22 {dimension_numbers = #tpu.dot_dimension_numbers<[1], [0], [0], [1], [0, 0, 1, 1], [], []>} : vector<32x64xbf16>, vector<64x1024xbf16>, vector<32x1024xf32> -> vector<32x1024xf32>
    %c240 = arith.constant 240 : index
    %c0_23 = arith.constant 0 : index
    %38 = vector.load %arg4[%c240, %c0_23] : memref<288x1xf32, #tpu.memory_space<vmem>>, vector<32x1xf32>
    %39 = vector.broadcast %38 : vector<32x1xf32> to vector<32x1024xf32>
    %40 = arith.addf %37, %39 : vector<32x1024xf32>
    %cst_24 = arith.constant 0.000000e+00 : f32
    %41 = vector.broadcast %cst_24 : f32 to vector<32x1024xf32>
    %42 = arith.maximumf %40, %41 : vector<32x1024xf32>
    %43 = arith.truncf %42 : vector<32x1024xf32> to vector<32x1024xbf16>
    %c480 = arith.constant 480 : index
    %c0_25 = arith.constant 0 : index
    %44 = vector.load %arg3[%c480, %c0_25] : memref<512x128xbf16, #tpu.memory_space<vmem>>, vector<16x32xbf16>
    %cst_26 = arith.constant dense<0.000000e+00> : vector<16x1024xf32>
    %45 = tpu.matmul %44, %43, %cst_26 {dimension_numbers = #tpu.dot_dimension_numbers<[1], [0], [0], [1], [0, 0, 1, 1], [], []>} : vector<16x32xbf16>, vector<32x1024xbf16>, vector<16x1024xf32> -> vector<16x1024xf32>
    %c272 = arith.constant 272 : index
    %c0_27 = arith.constant 0 : index
    %46 = vector.load %arg4[%c272, %c0_27] : memref<288x1xf32, #tpu.memory_space<vmem>>, vector<16x1xf32>
    %47 = vector.broadcast %46 : vector<16x1xf32> to vector<16x1024xf32>
    %48 = arith.addf %45, %47 : vector<16x1024xf32>
    %cst_28 = arith.constant 0.000000e+00 : f32
    %49 = vector.broadcast %cst_28 : f32 to vector<16x1024xf32>
    %50 = arith.maximumf %48, %49 : vector<16x1024xf32>
    %51 = arith.truncf %50 : vector<16x1024xf32> to vector<16x1024xbf16>
    %c496 = arith.constant 496 : index
    %c0_29 = arith.constant 0 : index
    %52 = vector.load %arg3[%c496, %c0_29] : memref<512x128xbf16, #tpu.memory_space<vmem>>, vector<16x6xbf16>
    %cst_30 = arith.constant dense<0.000000e+00> : vector<1024x6xf32>
    %53 = tpu.matmul %51, %52, %cst_30 {dimension_numbers = #tpu.dot_dimension_numbers<[0], [0], [1], [1], [0, 1, 1, 1], [], []>} : vector<16x1024xbf16>, vector<16x6xbf16>, vector<1024x6xf32> -> vector<1024x6xf32>
    %c0_31 = arith.constant 0 : index
    %c0_32 = arith.constant 0 : index
    %54 = vector.load %arg5[%c0_31, %c0_32] : memref<1x6xf32, #tpu.memory_space<vmem>>, vector<1x6xf32>
    %55 = vector.broadcast %54 : vector<1x6xf32> to vector<1024x6xf32>
    %56 = arith.addf %53, %55 : vector<1024x6xf32>
    %c0_33 = arith.constant 0 : index
    %c0_34 = arith.constant 0 : index
    %57 = vector.load %arg6[%c0_33, %c0_34] : memref<1024x6xf32, #tpu.memory_space<vmem>>, vector<1024x6xf32>
    tpu.vector_store %arg6[%c0_33, %c0_34], %56 {strides = array<i32>} : memref<1024x6xf32, #tpu.memory_space<vmem>>, vector<1024x6xf32>,
    return
  }
  func.func @transform_0(%arg0: i32) -> (i32, i32) {
    %c0_i32 = arith.constant 0 : i32
    %c0_i32_0 = arith.constant 0 : i32
    return %arg0, %c0_i32 : i32, i32
  }
  func.func @transform_1(%arg0: i32) -> (i32, i32) {
    %c0_i32 = arith.constant 0 : i32
    %c0_i32_0 = arith.constant 0 : i32
    return %arg0, %c0_i32 : i32, i32
  }
  func.func @transform_2(%arg0: i32) -> (i32, i32) {
    %c0_i32 = arith.constant 0 : i32
    %c0_i32_0 = arith.constant 0 : i32
    %c0_i32_1 = arith.constant 0 : i32
    return %c0_i32, %c0_i32_0 : i32, i32
  }
  func.func @transform_3(%arg0: i32) -> (i32, i32) {
    %c0_i32 = arith.constant 0 : i32
    %c0_i32_0 = arith.constant 0 : i32
    %c0_i32_1 = arith.constant 0 : i32
    return %c0_i32, %c0_i32_0 : i32, i32
  }
  func.func @transform_4(%arg0: i32) -> (i32, i32) {
    %c0_i32 = arith.constant 0 : i32
    %c0_i32_0 = arith.constant 0 : i32
    %c0_i32_1 = arith.constant 0 : i32
    return %c0_i32, %c0_i32_0 : i32, i32
  }
  func.func @transform_5(%arg0: i32) -> (i32, i32) {
    %c0_i32 = arith.constant 0 : i32
    %c0_i32_0 = arith.constant 0 : i32
    return %arg0, %c0_i32 : i32, i32
  }
}

</mosaic_0001>

<llo_original>
// kernel: tpu_custom_call.1
$region0: #{tpu_custom_call.1}
  #allocation0 [shape = 'u32[]', space=smem, size = 0x4, offset = 0x4, fixed_abs, tag = 'smem constant byte address 0x4 - core index']
  #allocation1 [shape = 'u32[144,128]{1,0:T(1,128)}', space=vmem, size = 0x12000, scoped, tag = 'internal scratch']
  %s0 = inlined_call_operand.hbm [shape: f32[900,10], index: 0, kind: input, shape index: {}]
  %s1 = inlined_call_operand.hbm [shape: f32[900,6], index: 1, kind: input, shape index: {}]
  %s2 = inlined_call_operand.hbm [shape: bf16[512,128], index: 2, kind: input, shape index: {}]
  %s3 = inlined_call_operand.hbm [shape: f32[288,1], index: 3, kind: input, shape index: {}]
  %s4 = inlined_call_operand.hbm [shape: f32[1,6], index: 4, kind: input, shape index: {}]
  %s5 = inlined_call_operand.hbm [shape: f32[900,6], index: 5, kind: output, shape index: {}]
  %s6 = sld [smem:[#allocation0]]
  $region50: #{tpu_custom_call.1} parent=0
    _
  %s8 = ssub.s32 1, %s6
  %s9 = scalar_select 0, %s8, %s6
  $region1: #{tpu_custom_call.1} parent=0
    #allocation2 [shape = 'u8[524288]{0}', space=vmem, size = 0x80000, scoped, tag = 'input window, operand 0, single buffered']
    #allocation3 [shape = 's32[1]{0}', space=sflag, size = 0x4, scoped, tag = 'scoped memory for tpu_custom_call.1']
    #allocation4 [shape = 's32[1]{0}', space=sflag, size = 0x4, scoped, tag = 'scoped memory for tpu_custom_call.1']
    #allocation5 [shape = 'u8[524288]{0}', space=vmem, size = 0x80000, scoped, tag = 'input window, operand 1, single buffered']
    #allocation6 [shape = 's32[1]{0}', space=sflag, size = 0x4, scoped, tag = 'scoped memory for tpu_custom_call.1']
    #allocation7 [shape = 'u8[131072]{0}', space=vmem, size = 0x20000, scoped, tag = 'input window, operand 2, single buffered']
    #allocation8 [shape = 'u8[147456]{0}', space=vmem, size = 0x24000, scoped, tag = 'input window, operand 3, single buffered']
    #allocation9 [shape = 's32[1]{0}', space=sflag, size = 0x4, scoped, tag = 'scoped memory for tpu_custom_call.1']
    #allocation10 [shape = 'u8[512]{0}', space=vmem, size = 0x400, scoped, tag = 'input window, operand 4, single buffered']
    #allocation11 [shape = 'u8[524288]{0}', space=vmem, size = 0x80000, scoped, tag = 'output window, operand 0, single buffered']
    %10 = vsyncpa [#allocation3], 0
    %11 = vsyncpa [#allocation6], 0
    %12 = vsyncpa [#allocation9], 0
    %13 = vsyncpa [#allocation4], 0
    // Predicated region
    $region2: #{tpu_custom_call.1} parent=1 // pred_check
      _
    $region3: #{tpu_custom_call.1} parent=1 // pred_check_branch
      %15 = sbr.rel (0) target = $region5
    $region4: #{tpu_custom_call.1} parent=1 // pred_region
      %s17 = ssub.s32 16384, 14464
      %18 = vsyncadd [#allocation3], %s17
      %s19 = sshll.u32 [#allocation2], 4
      %s20 = int_to_ptr.vmem [resolvable:$true] %s19
      %25 = dma.hbm_to_vmem [thread:$0]  %s0, 14464, %s20, [#allocation3], 128, 128, 8
    $region5: #{tpu_custom_call.1} parent=1 // pred_fallthru
      _
    // Predicated region
    $region6: #{tpu_custom_call.1} parent=1 // pred_check
      _
    $region7: #{tpu_custom_call.1} parent=1 // pred_check_branch
      %27 = sbr.rel (0) target = $region9
    $region8: #{tpu_custom_call.1} parent=1 // pred_region
      %s29 = ssub.s32 16384, 14464
      %30 = vsyncadd [#allocation6], %s29
      %s31 = sshll.u32 [#allocation5], 4
      %s32 = int_to_ptr.vmem [resolvable:$true] %s31
      %37 = dma.hbm_to_vmem [thread:$0]  %s1, 14464, %s32, [#allocation6], 128, 128, 8
    $region9: #{tpu_custom_call.1} parent=1 // pred_fallthru
      _
    // Predicated region
    $region10: #{tpu_custom_call.1} parent=1 // pred_check
      _
    $region11: #{tpu_custom_call.1} parent=1 // pred_check_branch
      %39 = sbr.rel (0) target = $region13
    $region12: #{tpu_custom_call.1} parent=1 // pred_region
      %s41 = ssub.s32 4096, 4096
      %42 = vsyncadd [#allocation6], %s41
      %s43 = sshll.u32 [#allocation7], 4
      %s44 = int_to_ptr.vmem [resolvable:$true] %s43
      %49 = dma.hbm_to_vmem [thread:$0]  %s2, 4096, %s44, [#allocation6], 64, 64, 4
    $region13: #{tpu_custom_call.1} parent=1 // pred_fallthru
      _
    // Predicated region
    $region14: #{tpu_custom_call.1} parent=1 // pred_check
      _
    $region15: #{tpu_custom_call.1} parent=1 // pred_check_branch
      %51 = sbr.rel (0) target = $region17
    $region16: #{tpu_custom_call.1} parent=1 // pred_region
      %s53 = ssub.s32 4608, 4608
      %54 = vsyncadd [#allocation9], %s53
      %s55 = sshll.u32 [#allocation8], 4
      %s56 = int_to_ptr.vmem [resolvable:$true] %s55
      %61 = dma.hbm_to_vmem [thread:$0]  %s3, 4608, %s56, [#allocation9], 128, 128, 8
    $region17: #{tpu_custom_call.1} parent=1 // pred_fallthru
      _
    // Predicated region
    $region18: #{tpu_custom_call.1} parent=1 // pred_check
      _
    $region19: #{tpu_custom_call.1} parent=1 // pred_check_branch
      %63 = sbr.rel (0) target = $region21
    $region20: #{tpu_custom_call.1} parent=1 // pred_region
      %s65 = ssub.s32 16, 16
      %66 = vsyncadd [#allocation9], %s65
      %s68 = sshll.u32 [#allocation10], 4
      %s69 = int_to_ptr.vmem [resolvable:$true] %s68
      %71 = dma.hbm_to_vmem [thread:$0]  %s4, 16, %s69, [#allocation9]
    $region21: #{tpu_custom_call.1} parent=1 // pred_fallthru
      _
    // Predicated region
    $region22: #{tpu_custom_call.1} parent=1 // pred_check
      _
    $region23: #{tpu_custom_call.1} parent=1 // pred_check_branch
      %73 = sbr.rel (0) target = $region25
    $region24: #{tpu_custom_call.1} parent=1 // pred_region
      %74 = dma.done [#allocation3], 16384
    $region25: #{tpu_custom_call.1} parent=1 // pred_fallthru
      _
    // Predicated region
    $region26: #{tpu_custom_call.1} parent=1 // pred_check
      _
    $region27: #{tpu_custom_call.1} parent=1 // pred_check_branch
      %76 = sbr.rel (0) target = $region29
    $region28: #{tpu_custom_call.1} parent=1 // pred_region
      %77 = dma.done [#allocation6], 16384
    $region29: #{tpu_custom_call.1} parent=1 // pred_fallthru
      _
    // Predicated region
    $region30: #{tpu_custom_call.1} parent=1 // pred_check
      _
    $region31: #{tpu_custom_call.1} parent=1 // pred_check_branch
      %79 = sbr.rel (0) target = $region33
    $region32: #{tpu_custom_call.1} parent=1 // pred_region
      %80 = dma.done [#allocation6], 4096
    $region33: #{tpu_custom_call.1} parent=1 // pred_fallthru
      _
    // Predicated region
    $region34: #{tpu_custom_call.1} parent=1 // pred_check
      _
    $region35: #{tpu_custom_call.1} parent=1 // pred_check_branch
      %82 = sbr.rel (0) target = $region37
    $region36: #{tpu_custom_call.1} parent=1 // pred_region
      %83 = dma.done [#allocation9], 4608
    $region37: #{tpu_custom_call.1} parent=1 // pred_fallthru
      _
    // Predicated region
    $region38: #{tpu_custom_call.1} parent=1 // pred_check
      _
    $region39: #{tpu_custom_call.1} parent=1 // pred_check_branch
      %85 = sbr.rel (0) target = $region41
    $region40: #{tpu_custom_call.1} parent=1 // pred_region
      %86 = dma.done [#allocation9], 16
    $region41: #{tpu_custom_call.1} parent=1 // pred_fallthru
      _
    %v88 = vld [vmem:[#allocation2] sm:$0xff]
    %v89 = vld [vmem:[#allocation2 + $0x8] sm:$0xff]
    %v90 = vld [vmem:[#allocation2 + $0x10] sm:$0xff]
    %v91 = vld [vmem:[#allocation2 + $0x18] sm:$0xff]
    %v92 = vld [vmem:[#allocation2 + $0x20] sm:$0xff]
    %v93 = vld [vmem:[#allocation2 + $0x28] sm:$0xff]
    %v94 = vld [vmem:[#allocation2 + $0x30] sm:$0xff]
    %v95 = vld [vmem:[#allocation2 + $0x38] sm:$0xff]
    %v96 = vld [vmem:[#allocation2 + $0x40] sm:$0xff]
    %v97 = vld [vmem:[#allocation2 + $0x48] sm:$0xff]
    %v98 = vld [vmem:[#allocation2 + $0x50] sm:$0xff]
    %v99 = vld [vmem:[#allocation2 + $0x58] sm:$0xff]
    %v100 = vld [vmem:[#allocation2 + $0x60] sm:$0xff]
    %v101 = vld [vmem:[#allocation2 + $0x68] sm:$0xff]
    %v102 = vld [vmem:[#allocation2 + $0x70] sm:$0xff]
    %v103 = vld [vmem:[#allocation2 + $0x78] sm:$0xff]
    %v104 = vld [vmem:[#allocation2 + $0x80] sm:$0xff]
    %v105 = vld [vmem:[#allocation2 + $0x88] sm:$0xff]
    %v106 = vld [vmem:[#allocation2 + $0x90] sm:$0xff]
    %v107 = vld [vmem:[#allocation2 + $0x98] sm:$0xff]
    %v108 = vld [vmem:[#allocation2 + $0xa0] sm:$0xff]
    %v109 = vld [vmem:[#allocation2 + $0xa8] sm:$0xff]
    %v110 = vld [vmem:[#allocation2 + $0xb0] sm:$0xff]
    %v111 = vld [vmem:[#allocation2 + $0xb8] sm:$0xff]
    %v112 = vld [vmem:[#allocation2 + $0xc0] sm:$0xff]
    %v113 = vld [vmem:[#allocation2 + $0xc8] sm:$0xff]
    %v114 = vld [vmem:[#allocation2 + $0xd0] sm:$0xff]
    %v115 = vld [vmem:[#allocation2 + $0xd8] sm:$0xff]
    %v116 = vld [vmem:[#allocation2 + $0xe0] sm:$0xff]
    %v117 = vld [vmem:[#allocation2 + $0xe8] sm:$0xff]
    %v118 = vld [vmem:[#allocation2 + $0xf0] sm:$0xff]
    %v119 = vld [vmem:[#allocation2 + $0xf8] sm:$0xff]
    %v120 = vld [vmem:[#allocation2 + $0x100] sm:$0xff]
    %v121 = vld [vmem:[#allocation2 + $0x108] sm:$0xff]
    %v122 = vld [vmem:[#allocation2 + $0x110] sm:$0xff]
    %v123 = vld [vmem:[#allocation2 + $0x118] sm:$0xff]
    %v124 = vld [vmem:[#allocation2 + $0x120] sm:$0xff]
    %v125 = vld [vmem:[#allocation2 + $0x128] sm:$0xff]
    %v126 = vld [vmem:[#allocation2 + $0x130] sm:$0xff]
    %v127 = vld [vmem:[#allocation2 + $0x138] sm:$0xff]
    %v128 = vld [vmem:[#allocation2 + $0x140] sm:$0xff]
    %v129 = vld [vmem:[#allocation2 + $0x148] sm:$0xff]
    %v130 = vld [vmem:[#allocation2 + $0x150] sm:$0xff]
    %v131 = vld [vmem:[#allocation2 + $0x158] sm:$0xff]
    %v132 = vld [vmem:[#allocation2 + $0x160] sm:$0xff]
    %v133 = vld [vmem:[#allocation2 + $0x168] sm:$0xff]
    %v134 = vld [vmem:[#allocation2 + $0x170] sm:$0xff]
    %v135 = vld [vmem:[#allocation2 + $0x178] sm:$0xff]
    %v136 = vld [vmem:[#allocation2 + $0x180] sm:$0xff]
    %v137 = vld [vmem:[#allocation2 + $0x188] sm:$0xff]
    %v138 = vld [vmem:[#allocation2 + $0x190] sm:$0xff]
    %v139 = vld [vmem:[#allocation2 + $0x198] sm:$0xff]
    %v140 = vld [vmem:[#allocation2 + $0x1a0] sm:$0xff]
    %v141 = vld [vmem:[#allocation2 + $0x1a8] sm:$0xff]
    %v142 = vld [vmem:[#allocation2 + $0x1b0] sm:$0xff]
    %v143 = vld [vmem:[#allocation2 + $0x1b8] sm:$0xff]
    %v144 = vld [vmem:[#allocation2 + $0x1c0] sm:$0xff]
    %v145 = vld [vmem:[#allocation2 + $0x1c8] sm:$0xff]
    %v146 = vld [vmem:[#allocation2 + $0x1d0] sm:$0xff]
    %v147 = vld [vmem:[#allocation2 + $0x1d8] sm:$0xff]
    %v148 = vld [vmem:[#allocation2 + $0x1e0] sm:$0xff]
    %v149 = vld [vmem:[#allocation2 + $0x1e8] sm:$0xff]
    %v150 = vld [vmem:[#allocation2 + $0x1f0] sm:$0xff]
    %v151 = vld [vmem:[#allocation2 + $0x1f8] sm:$0xff]
    %v152 = vld [vmem:[#allocation2 + $0x200] sm:$0xff]
    %v153 = vld [vmem:[#allocation2 + $0x208] sm:$0xff]
    %v154 = vld [vmem:[#allocation2 + $0x210] sm:$0xff]
    %v155 = vld [vmem:[#allocation2 + $0x218] sm:$0xff]
    %v156 = vld [vmem:[#allocation2 + $0x220] sm:$0xff]
    %v157 = vld [vmem:[#allocation2 + $0x228] sm:$0xff]
    %v158 = vld [vmem:[#allocation2 + $0x230] sm:$0xff]
    %v159 = vld [vmem:[#allocation2 + $0x238] sm:$0xff]
    %v160 = vld [vmem:[#allocation2 + $0x240] sm:$0xff]
    %v161 = vld [vmem:[#allocation2 + $0x248] sm:$0xff]
    %v162 = vld [vmem:[#allocation2 + $0x250] sm:$0xff]
    %v163 = vld [vmem:[#allocation2 + $0x258] sm:$0xff]
    %v164 = vld [vmem:[#allocation2 + $0x260] sm:$0xff]
    %v165 = vld [vmem:[#allocation2 + $0x268] sm:$0xff]
    %v166 = vld [vmem:[#allocation2 + $0x270] sm:$0xff]
    %v167 = vld [vmem:[#allocation2 + $0x278] sm:$0xff]
    %v168 = vld [vmem:[#allocation2 + $0x280] sm:$0xff]
    %v169 = vld [vmem:[#allocation2 + $0x288] sm:$0xff]
    %v170 = vld [vmem:[#allocation2 + $0x290] sm:$0xff]
    %v171 = vld [vmem:[#allocation2 + $0x298] sm:$0xff]
    %v172 = vld [vmem:[#allocation2 + $0x2a0] sm:$0xff]
    %v173 = vld [vmem:[#allocation2 + $0x2a8] sm:$0xff]
    %v174 = vld [vmem:[#allocation2 + $0x2b0] sm:$0xff]
    %v175 = vld [vmem:[#allocation2 + $0x2b8] sm:$0xff]
    %v176 = vld [vmem:[#allocation2 + $0x2c0] sm:$0xff]
    %v177 = vld [vmem:[#allocation2 + $0x2c8] sm:$0xff]
    %v178 = vld [vmem:[#allocation2 + $0x2d0] sm:$0xff]
    %v179 = vld [vmem:[#allocation2 + $0x2d8] sm:$0xff]
    %v180 = vld [vmem:[#allocation2 + $0x2e0] sm:$0xff]
    %v181 = vld [vmem:[#allocation2 + $0x2e8] sm:$0xff]
    %v182 = vld [vmem:[#allocation2 + $0x2f0] sm:$0xff]
    %v183 = vld [vmem:[#allocation2 + $0x2f8] sm:$0xff]
    %v184 = vld [vmem:[#allocation2 + $0x300] sm:$0xff]
    %v185 = vld [vmem:[#allocation2 + $0x308] sm:$0xff]
    %v186 = vld [vmem:[#allocation2 + $0x310] sm:$0xff]
    %v187 = vld [vmem:[#allocation2 + $0x318] sm:$0xff]
    %v188 = vld [vmem:[#allocation2 + $0x320] sm:$0xff]
    %v189 = vld [vmem:[#allocation2 + $0x328] sm:$0xff]
    %v190 = vld [vmem:[#allocation2 + $0x330] sm:$0xff]
    %v191 = vld [vmem:[#allocation2 + $0x338] sm:$0xff]
    %v192 = vld [vmem:[#allocation2 + $0x340] sm:$0xff]
    %v193 = vld [vmem:[#allocation2 + $0x348] sm:$0xff]
    %v194 = vld [vmem:[#allocation2 + $0x350] sm:$0xff]
    %v195 = vld [vmem:[#allocation2 + $0x358] sm:$0xff]
    %v196 = vld [vmem:[#allocation2 + $0x360] sm:$0xff]
    %v197 = vld [vmem:[#allocation2 + $0x368] sm:$0xff]
    %v198 = vld [vmem:[#allocation2 + $0x370] sm:$0xff]
    %v199 = vld [vmem:[#allocation2 + $0x378] sm:$0xff]
    %v200 = vld [vmem:[#allocation2 + $0x380] sm:$0xff]
    %v201 = vld [vmem:[#allocation2 + $0x388] sm:$0xff]
    %v202 = vld [vmem:[#allocation2 + $0x390] sm:$0xff]
    %v203 = vld [vmem:[#allocation2 + $0x398] sm:$0xff]
    %v204 = vld [vmem:[#allocation2 + $0x3a0] sm:$0xff]
    %v205 = vld [vmem:[#allocation2 + $0x3a8] sm:$0xff]
    %v206 = vld [vmem:[#allocation2 + $0x3b0] sm:$0xff]
    %v207 = vld [vmem:[#allocation2 + $0x3b8] sm:$0xff]
    %v208 = vld [vmem:[#allocation2 + $0x3c0] sm:$0xff]
    %v209 = vld [vmem:[#allocation2 + $0x3c8] sm:$0xff]
    %v210 = vld [vmem:[#allocation2 + $0x3d0] sm:$0xff]
    %v211 = vld [vmem:[#allocation2 + $0x3d8] sm:$0xff]
    %v212 = vld [vmem:[#allocation2 + $0x3e0] sm:$0xff]
    %v213 = vld [vmem:[#allocation2 + $0x3e8] sm:$0xff]
    %v214 = vld [vmem:[#allocation2 + $0x3f0] sm:$0xff]
    %v215 = vld [vmem:[#allocation2 + $0x3f8] sm:$0xff]
    %v216 = vpack.c.bf16 %v89, %v88
    %v217 = vpack.c.bf16 %v91, %v90
    %v218 = vpack.c.bf16 %v93, %v92
    %v219 = vpack.c.bf16 %v95, %v94
    %v220 = vpack.c.bf16 %v97, %v96
    %v221 = vpack.c.bf16 %v99, %v98
    %v222 = vpack.c.bf16 %v101, %v100
    %v223 = vpack.c.bf16 %v103, %v102
    %v224 = vpack.c.bf16 %v105, %v104
    %v225 = vpack.c.bf16 %v107, %v106
    %v226 = vpack.c.bf16 %v109, %v108
    %v227 = vpack.c.bf16 %v111, %v110
    %v228 = vpack.c.bf16 %v113, %v112
    %v229 = vpack.c.bf16 %v115, %v114
    %v230 = vpack.c.bf16 %v117, %v116
    %v231 = vpack.c.bf16 %v119, %v118
    %v232 = vpack.c.bf16 %v121, %v120
    %v233 = vpack.c.bf16 %v123, %v122
    %v234 = vpack.c.bf16 %v125, %v124
    %v235 = vpack.c.bf16 %v127, %v126
    %v236 = vpack.c.bf16 %v129, %v128
    %v237 = vpack.c.bf16 %v131, %v130
    %v238 = vpack.c.bf16 %v133, %v132
    %v239 = vpack.c.bf16 %v135, %v134
    %v240 = vpack.c.bf16 %v137, %v136
    %v241 = vpack.c.bf16 %v139, %v138
    %v242 = vpack.c.bf16 %v141, %v140
    %v243 = vpack.c.bf16 %v143, %v142
    %v244 = vpack.c.bf16 %v145, %v144
    %v245 = vpack.c.bf16 %v147, %v146
    %v246 = vpack.c.bf16 %v149, %v148
    %v247 = vpack.c.bf16 %v151, %v150
    %v248 = vpack.c.bf16 %v153, %v152
    %v249 = vpack.c.bf16 %v155, %v154
    %v250 = vpack.c.bf16 %v157, %v156
    %v251 = vpack.c.bf16 %v159, %v158
    %v252 = vpack.c.bf16 %v161, %v160
    %v253 = vpack.c.bf16 %v163, %v162
    %v254 = vpack.c.bf16 %v165, %v164
    %v255 = vpack.c.bf16 %v167, %v166
    %v256 = vpack.c.bf16 %v169, %v168
    %v257 = vpack.c.bf16 %v171, %v170
    %v258 = vpack.c.bf16 %v173, %v172
    %v259 = vpack.c.bf16 %v175, %v174
    %v260 = vpack.c.bf16 %v177, %v176
    %v261 = vpack.c.bf16 %v179, %v178
    %v262 = vpack.c.bf16 %v181, %v180
    %v263 = vpack.c.bf16 %v183, %v182
    %v264 = vpack.c.bf16 %v185, %v184
    %v265 = vpack.c.bf16 %v187, %v186
    %v266 = vpack.c.bf16 %v189, %v188
    %v267 = vpack.c.bf16 %v191, %v190
    %v268 = vpack.c.bf16 %v193, %v192
    %v269 = vpack.c.bf16 %v195, %v194
    %v270 = vpack.c.bf16 %v197, %v196
    %v271 = vpack.c.bf16 %v199, %v198
    %v272 = vpack.c.bf16 %v201, %v200
    %v273 = vpack.c.bf16 %v203, %v202
    %v274 = vpack.c.bf16 %v205, %v204
    %v275 = vpack.c.bf16 %v207, %v206
    %v276 = vpack.c.bf16 %v209, %v208
    %v277 = vpack.c.bf16 %v211, %v210
    %v278 = vpack.c.bf16 %v213, %v212
    %v279 = vpack.c.bf16 %v215, %v214
    %v280 = vld [vmem:[#allocation5] sm:$0xff]
    %v281 = vld [vmem:[#allocation5 + $0x8] sm:$0xff]
    %v282 = vld [vmem:[#allocation5 + $0x10] sm:$0xff]
    %v283 = vld [vmem:[#allocation5 + $0x18] sm:$0xff]
    %v284 = vld [vmem:[#allocation5 + $0x20] sm:$0xff]
    %v285 = vld [vmem:[#allocation5 + $0x28] sm:$0xff]
    %v286 = vld [vmem:[#allocation5 + $0x30] sm:$0xff]
    %v287 = vld [vmem:[#allocation5 + $0x38] sm:$0xff]
    %v288 = vld [vmem:[#allocation5 + $0x40] sm:$0xff]
    %v289 = vld [vmem:[#allocation5 + $0x48] sm:$0xff]
    %v290 = vld [vmem:[#allocation5 + $0x50] sm:$0xff]
    %v291 = vld [vmem:[#allocation5 + $0x58] sm:$0xff]
    %v292 = vld [vmem:[#allocation5 + $0x60] sm:$0xff]
    %v293 = vld [vmem:[#allocation5 + $0x68] sm:$0xff]
    %v294 = vld [vmem:[#allocation5 + $0x70] sm:$0xff]
    %v295 = vld [vmem:[#allocation5 + $0x78] sm:$0xff]
    %v296 = vld [vmem:[#allocation5 + $0x80] sm:$0xff]
    %v297 = vld [vmem:[#allocation5 + $0x88] sm:$0xff]
    %v298 = vld [vmem:[#allocation5 + $0x90] sm:$0xff]
    %v299 = vld [vmem:[#allocation5 + $0x98] sm:$0xff]
    %v300 = vld [vmem:[#allocation5 + $0xa0] sm:$0xff]
    %v301 = vld [vmem:[#allocation5 + $0xa8] sm:$0xff]
    %v302 = vld [vmem:[#allocation5 + $0xb0] sm:$0xff]
    %v303 = vld [vmem:[#allocation5 + $0xb8] sm:$0xff]
    %v304 = vld [vmem:[#allocation5 + $0xc0] sm:$0xff]
    %v305 = vld [vmem:[#allocation5 + $0xc8] sm:$0xff]
    %v306 = vld [vmem:[#allocation5 + $0xd0] sm:$0xff]
    %v307 = vld [vmem:[#allocation5 + $0xd8] sm:$0xff]
    %v308 = vld [vmem:[#allocation5 + $0xe0] sm:$0xff]
    %v309 = vld [vmem:[#allocation5 + $0xe8] sm:$0xff]
    %v310 = vld [vmem:[#allocation5 + $0xf0] sm:$0xff]
    %v311 = vld [vmem:[#allocation5 + $0xf8] sm:$0xff]
    %v312 = vld [vmem:[#allocation5 + $0x100] sm:$0xff]
    %v313 = vld [vmem:[#allocation5 + $0x108] sm:$0xff]
    %v314 = vld [vmem:[#allocation5 + $0x110] sm:$0xff]
    %v315 = vld [vmem:[#allocation5 + $0x118] sm:$0xff]
    %v316 = vld [vmem:[#allocation5 + $0x120] sm:$0xff]
    %v317 = vld [vmem:[#allocation5 + $0x128] sm:$0xff]
    %v318 = vld [vmem:[#allocation5 + $0x130] sm:$0xff]
    %v319 = vld [vmem:[#allocation5 + $0x138] sm:$0xff]
    %v320 = vld [vmem:[#allocation5 + $0x140] sm:$0xff]
    %v321 = vld [vmem:[#allocation5 + $0x148] sm:$0xff]
    %v322 = vld [vmem:[#allocation5 + $0x150] sm:$0xff]
    %v323 = vld [vmem:[#allocation5 + $0x158] sm:$0xff]
    %v324 = vld [vmem:[#allocation5 + $0x160] sm:$0xff]
    %v325 = vld [vmem:[#allocation5 + $0x168] sm:$0xff]
    %v326 = vld [vmem:[#allocation5 + $0x170] sm:$0xff]
    %v327 = vld [vmem:[#allocation5 + $0x178] sm:$0xff]
    %v328 = vld [vmem:[#allocation5 + $0x180] sm:$0xff]
    %v329 = vld [vmem:[#allocation5 + $0x188] sm:$0xff]
    %v330 = vld [vmem:[#allocation5 + $0x190] sm:$0xff]
    %v331 = vld [vmem:[#allocation5 + $0x198] sm:$0xff]
    %v332 = vld [vmem:[#allocation5 + $0x1a0] sm:$0xff]
    %v333 = vld [vmem:[#allocation5 + $0x1a8] sm:$0xff]
    %v334 = vld [vmem:[#allocation5 + $0x1b0] sm:$0xff]
    %v335 = vld [vmem:[#allocation5 + $0x1b8] sm:$0xff]
    %v336 = vld [vmem:[#allocation5 + $0x1c0] sm:$0xff]
    %v337 = vld [vmem:[#allocation5 + $0x1c8] sm:$0xff]
    %v338 = vld [vmem:[#allocation5 + $0x1d0] sm:$0xff]
    %v339 = vld [vmem:[#allocation5 + $0x1d8] sm:$0xff]
    %v340 = vld [vmem:[#allocation5 + $0x1e0] sm:$0xff]
    %v341 = vld [vmem:[#allocation5 + $0x1e8] sm:$0xff]
    %v342 = vld [vmem:[#allocation5 + $0x1f0] sm:$0xff]
    %v343 = vld [vmem:[#allocation5 + $0x1f8] sm:$0xff]
    %v344 = vld [vmem:[#allocation5 + $0x200] sm:$0xff]
    %v345 = vld [vmem:[#allocation5 + $0x208] sm:$0xff]
    %v346 = vld [vmem:[#allocation5 + $0x210] sm:$0xff]
    %v347 = vld [vmem:[#allocation5 + $0x218] sm:$0xff]
    %v348 = vld [vmem:[#allocation5 + $0x220] sm:$0xff]
    %v349 = vld [vmem:[#allocation5 + $0x228] sm:$0xff]
    %v350 = vld [vmem:[#allocation5 + $0x230] sm:$0xff]
    %v351 = vld [vmem:[#allocation5 + $0x238] sm:$0xff]
    %v352 = vld [vmem:[#allocation5 + $0x240] sm:$0xff]
    %v353 = vld [vmem:[#allocation5 + $0x248] sm:$0xff]
    %v354 = vld [vmem:[#allocation5 + $0x250] sm:$0xff]
    %v355 = vld [vmem:[#allocation5 + $0x258] sm:$0xff]
    %v356 = vld [vmem:[#allocation5 + $0x260] sm:$0xff]
    %v357 = vld [vmem:[#allocation5 + $0x268] sm:$0xff]
    %v358 = vld [vmem:[#allocation5 + $0x270] sm:$0xff]
    %v359 = vld [vmem:[#allocation5 + $0x278] sm:$0xff]
    %v360 = vld [vmem:[#allocation5 + $0x280] sm:$0xff]
    %v361 = vld [vmem:[#allocation5 + $0x288] sm:$0xff]
    %v362 = vld [vmem:[#allocation5 + $0x290] sm:$0xff]
    %v363 = vld [vmem:[#allocation5 + $0x298] sm:$0xff]
    %v364 = vld [vmem:[#allocation5 + $0x2a0] sm:$0xff]
    %v365 = vld [vmem:[#allocation5 + $0x2a8] sm:$0xff]
    %v366 = vld [vmem:[#allocation5 + $0x2b0] sm:$0xff]
    %v367 = vld [vmem:[#allocation5 + $0x2b8] sm:$0xff]
    %v368 = vld [vmem:[#allocation5 + $0x2c0] sm:$0xff]
    %v369 = vld [vmem:[#allocation5 + $0x2c8] sm:$0xff]
    %v370 = vld [vmem:[#allocation5 + $0x2d0] sm:$0xff]
    %v371 = vld [vmem:[#allocation5 + $0x2d8] sm:$0xff]
    %v372 = vld [vmem:[#allocation5 + $0x2e0] sm:$0xff]
    %v373 = vld [vmem:[#allocation5 + $0x2e8] sm:$0xff]
    %v374 = vld [vmem:[#allocation5 + $0x2f0] sm:$0xff]
    %v375 = vld [vmem:[#allocation5 + $0x2f8] sm:$0xff]
    %v376 = vld [vmem:[#allocation5 + $0x300] sm:$0xff]
    %v377 = vld [vmem:[#allocation5 + $0x308] sm:$0xff]
    %v378 = vld [vmem:[#allocation5 + $0x310] sm:$0xff]
    %v379 = vld [vmem:[#allocation5 + $0x318] sm:$0xff]
    %v380 = vld [vmem:[#allocation5 + $0x320] sm:$0xff]
    %v381 = vld [vmem:[#allocation5 + $0x328] sm:$0xff]
    %v382 = vld [vmem:[#allocation5 + $0x330] sm:$0xff]
    %v383 = vld [vmem:[#allocation5 + $0x338] sm:$0xff]
    %v384 = vld [vmem:[#allocation5 + $0x340] sm:$0xff]
    %v385 = vld [vmem:[#allocation5 + $0x348] sm:$0xff]
    %v386 = vld [vmem:[#allocation5 + $0x350] sm:$0xff]
    %v387 = vld [vmem:[#allocation5 + $0x358] sm:$0xff]
    %v388 = vld [vmem:[#allocation5 + $0x360] sm:$0xff]
    %v389 = vld [vmem:[#allocation5 + $0x368] sm:$0xff]
    %v390 = vld [vmem:[#allocation5 + $0x370] sm:$0xff]
    %v391 = vld [vmem:[#allocation5 + $0x378] sm:$0xff]
    %v392 = vld [vmem:[#allocation5 + $0x380] sm:$0xff]
    %v393 = vld [vmem:[#allocation5 + $0x388] sm:$0xff]
    %v394 = vld [vmem:[#allocation5 + $0x390] sm:$0xff]
    %v395 = vld [vmem:[#allocation5 + $0x398] sm:$0xff]
    %v396 = vld [vmem:[#allocation5 + $0x3a0] sm:$0xff]
    %v397 = vld [vmem:[#allocation5 + $0x3a8] sm:$0xff]
    %v398 = vld [vmem:[#allocation5 + $0x3b0] sm:$0xff]
    %v399 = vld [vmem:[#allocation5 + $0x3b8] sm:$0xff]
    %v400 = vld [vmem:[#allocation5 + $0x3c0] sm:$0xff]
    %v401 = vld [vmem:[#allocation5 + $0x3c8] sm:$0xff]
    %v402 = vld [vmem:[#allocation5 + $0x3d0] sm:$0xff]
    %v403 = vld [vmem:[#allocation5 + $0x3d8] sm:$0xff]
    %v404 = vld [vmem:[#allocation5 + $0x3e0] sm:$0xff]
    %v405 = vld [vmem:[#allocation5 + $0x3e8] sm:$0xff]
    %v406 = vld [vmem:[#allocation5 + $0x3f0] sm:$0xff]
    %v407 = vld [vmem:[#allocation5 + $0x3f8] sm:$0xff]
    %v408 = vpack.c.bf16 %v281, %v280
    %v409 = vpack.c.bf16 %v283, %v282
    %v410 = vpack.c.bf16 %v285, %v284
    %v411 = vpack.c.bf16 %v287, %v286
    %v412 = vpack.c.bf16 %v289, %v288
    %v413 = vpack.c.bf16 %v291, %v290
    %v414 = vpack.c.bf16 %v293, %v292
    %v415 = vpack.c.bf16 %v295, %v294
    %v416 = vpack.c.bf16 %v297, %v296
    %v417 = vpack.c.bf16 %v299, %v298
    %v418 = vpack.c.bf16 %v301, %v300
    %v419 = vpack.c.bf16 %v303, %v302
    %v420 = vpack.c.bf16 %v305, %v304
    %v421 = vpack.c.bf16 %v307, %v306
    %v422 = vpack.c.bf16 %v309, %v308
    %v423 = vpack.c.bf16 %v311, %v310
    %v424 = vpack.c.bf16 %v313, %v312
    %v425 = vpack.c.bf16 %v315, %v314
    %v426 = vpack.c.bf16 %v317, %v316
    %v427 = vpack.c.bf16 %v319, %v318
    %v428 = vpack.c.bf16 %v321, %v320
    %v429 = vpack.c.bf16 %v323, %v322
    %v430 = vpack.c.bf16 %v325, %v324
    %v431 = vpack.c.bf16 %v327, %v326
    %v432 = vpack.c.bf16 %v329, %v328
    %v433 = vpack.c.bf16 %v331, %v330
    %v434 = vpack.c.bf16 %v333, %v332
    %v435 = vpack.c.bf16 %v335, %v334
    %v436 = vpack.c.bf16 %v337, %v336
    %v437 = vpack.c.bf16 %v339, %v338
    %v438 = vpack.c.bf16 %v341, %v340
    %v439 = vpack.c.bf16 %v343, %v342
    %v440 = vpack.c.bf16 %v345, %v344
    %v441 = vpack.c.bf16 %v347, %v346
    %v442 = vpack.c.bf16 %v349, %v348
    %v443 = vpack.c.bf16 %v351, %v350
    %v444 = vpack.c.bf16 %v353, %v352
    %v445 = vpack.c.bf16 %v355, %v354
    %v446 = vpack.c.bf16 %v357, %v356
    %v447 = vpack.c.bf16 %v359, %v358
    %v448 = vpack.c.bf16 %v361, %v360
    %v449 = vpack.c.bf16 %v363, %v362
    %v450 = vpack.c.bf16 %v365, %v364
    %v451 = vpack.c.bf16 %v367, %v366
    %v452 = vpack.c.bf16 %v369, %v368
    %v453 = vpack.c.bf16 %v371, %v370
    %v454 = vpack.c.bf16 %v373, %v372
    %v455 = vpack.c.bf16 %v375, %v374
    %v456 = vpack.c.bf16 %v377, %v376
    %v457 = vpack.c.bf16 %v379, %v378
    %v458 = vpack.c.bf16 %v381, %v380
    %v459 = vpack.c.bf16 %v383, %v382
    %v460 = vpack.c.bf16 %v385, %v384
    %v461 = vpack.c.bf16 %v387, %v386
    %v462 = vpack.c.bf16 %v389, %v388
    %v463 = vpack.c.bf16 %v391, %v390
    %v464 = vpack.c.bf16 %v393, %v392
    %v465 = vpack.c.bf16 %v395, %v394
    %v466 = vpack.c.bf16 %v397, %v396
    %v467 = vpack.c.bf16 %v399, %v398
    %v468 = vpack.c.bf16 %v401, %v400
    %v469 = vpack.c.bf16 %v403, %v402
    %v470 = vpack.c.bf16 %v405, %v404
    %v471 = vpack.c.bf16 %v407, %v406
    %v472 = vld [vmem:[#allocation7] sm:$0xf]
    %v473 = vld [vmem:[#allocation7 + $0x4] sm:$0xf]
    %v474 = vld [vmem:[#allocation7 + $0x8] sm:$0xf]
    %v475 = vld [vmem:[#allocation7 + $0xc] sm:$0xf]
    %v476 = vld [vmem:[#allocation7 + $0x10] sm:$0xf]
    %v477 = vld [vmem:[#allocation7 + $0x14] sm:$0xf]
    %v478 = vld [vmem:[#allocation7 + $0x18] sm:$0xf]
    %v479 = vld [vmem:[#allocation7 + $0x1c] sm:$0xf]
    %v480 = vld [vmem:[#allocation7 + $0x20] sm:$0xf]
    %v481 = vld [vmem:[#allocation7 + $0x24] sm:$0xf]
    %v482 = vld [vmem:[#allocation7 + $0x28] sm:$0xf]
    %v483 = vld [vmem:[#allocation7 + $0x2c] sm:$0xf]
    %v484 = vld [vmem:[#allocation7 + $0x30] sm:$0xf]
    %v485 = vld [vmem:[#allocation7 + $0x34] sm:$0xf]
    %v486 = vld [vmem:[#allocation7 + $0x38] sm:$0xf]
    %v487 = vld [vmem:[#allocation7 + $0x3c] sm:$0xf]
    %v488 = vld [vmem:[#allocation7 + $0x40] sm:$0xf]
    %v489 = vld [vmem:[#allocation7 + $0x44] sm:$0xf]
    %v490 = vld [vmem:[#allocation7 + $0x48] sm:$0xf]
    %v491 = vld [vmem:[#allocation7 + $0x4c] sm:$0xf]
    %v492 = vld [vmem:[#allocation7 + $0x50] sm:$0xf]
    %v493 = vld [vmem:[#allocation7 + $0x54] sm:$0xf]
    %v494 = vld [vmem:[#allocation7 + $0x58] sm:$0xf]
    %v495 = vld [vmem:[#allocation7 + $0x5c] sm:$0xf]
    %v496 = vld [vmem:[#allocation7 + $0x60] sm:$0xf]
    %v497 = vld [vmem:[#allocation7 + $0x64] sm:$0xf]
    %v498 = vld [vmem:[#allocation7 + $0x68] sm:$0xf]
    %v499 = vld [vmem:[#allocation7 + $0x6c] sm:$0xf]
    %v500 = vld [vmem:[#allocation7 + $0x70] sm:$0xf]
    %v501 = vld [vmem:[#allocation7 + $0x74] sm:$0xf]
    %v502 = vld [vmem:[#allocation7 + $0x78] sm:$0xf]
    %v503 = vld [vmem:[#allocation7 + $0x7c] sm:$0xf]
    %v504 = vld [vmem:[#allocation7 + $0x80] sm:$0xf]
    %v505 = vld [vmem:[#allocation7 + $0x84] sm:$0xf]
    %v506 = vld [vmem:[#allocation7 + $0x88] sm:$0xf]
    %v507 = vld [vmem:[#allocation7 + $0x8c] sm:$0xf]
    %v526 = vunpack.c.l.b16 %v490
    %v527 = vunpack.c.l.b16 %v491
    %v528 = vunpack.c.l.b16 %v492
    %v529 = vunpack.c.l.b16 %v493
    %v530 = vunpack.c.l.b16 %v494
    %v531 = vunpack.c.l.b16 %v495
    %v532 = vunpack.c.l.b16 %v496
    %v533 = vunpack.c.l.b16 %v497
    %v534 = vunpack.c.l.b16 %v498
    %v535 = vunpack.c.l.b16 %v499
    %v536 = vunpack.c.l.b16 %v500
    %v537 = vunpack.c.l.b16 %v501
    %v538 = vunpack.c.l.b16 %v502
    %v539 = vunpack.c.l.b16 %v503
    %v540 = vunpack.c.l.b16 %v504
    %v541 = vunpack.c.l.b16 %v505
    %v542 = vunpack.c.l.b16 %v506
    %v543 = vunpack.c.l.b16 %v507
    %v544 = vpack.c.b16 %v527, %v526
    %v545 = vpack.c.b16 %v529, %v528
    %v546 = vpack.c.b16 %v531, %v530
    %v547 = vpack.c.b16 %v533, %v532
    %v548 = vpack.c.b16 %v535, %v534
    %v549 = vpack.c.b16 %v537, %v536
    %v550 = vpack.c.b16 %v539, %v538
    %v551 = vpack.c.b16 %v541, %v540
    %v552 = vpack.c.b16 %v543, %v542
    %vm553 = vcmask 48128
    %v555 = vsel %vm553, %v544, 0
    %v558 = vsel %vm553, %v545, 0
    %v561 = vsel %vm553, %v546, 0
    %v564 = vsel %vm553, %v547, 0
    %v567 = vsel %vm553, %v548, 0
    %v570 = vsel %vm553, %v549, 0
    %v573 = vsel %vm553, %v550, 0
    %v576 = vsel %vm553, %v551, 0
    %v579 = vsel %vm553, %v552, 0
    %v582 = vsel %vm553, %v408, 0
    %v585 = vsel %vm553, %v409, 0
    %v588 = vsel %vm553, %v410, 0
    %v591 = vsel %vm553, %v411, 0
    %v594 = vsel %vm553, %v412, 0
    %v597 = vsel %vm553, %v413, 0
    %v600 = vsel %vm553, %v414, 0
    %v603 = vsel %vm553, %v415, 0
    %v606 = vsel %vm553, %v416, 0
    %v609 = vsel %vm553, %v417, 0
    %v612 = vsel %vm553, %v418, 0
    %v615 = vsel %vm553, %v419, 0
    %v618 = vsel %vm553, %v420, 0
    %v621 = vsel %vm553, %v421, 0
    %v624 = vsel %vm553, %v422, 0
    %v627 = vsel %vm553, %v423, 0
    %v630 = vsel %vm553, %v424, 0
    %v633 = vsel %vm553, %v425, 0
    %v636 = vsel %vm553, %v426, 0
    %v639 = vsel %vm553, %v427, 0
    %v642 = vsel %vm553, %v428, 0
    %v645 = vsel %vm553, %v429, 0
    %v648 = vsel %vm553, %v430, 0
    %v651 = vsel %vm553, %v431, 0
    %v654 = vsel %vm553, %v432, 0
    %v657 = vsel %vm553, %v433, 0
    %v660 = vsel %vm553, %v434, 0
    %v663 = vsel %vm553, %v435, 0
    %v666 = vsel %vm553, %v436, 0
    %v669 = vsel %vm553, %v437, 0
    %v672 = vsel %vm553, %v438, 0
    %v675 = vsel %vm553, %v439, 0
    %v678 = vsel %vm553, %v440, 0
    %v681 = vsel %vm553, %v441, 0
    %v684 = vsel %vm553, %v442, 0
    %v687 = vsel %vm553, %v443, 0
    %v690 = vsel %vm553, %v444, 0
    %v693 = vsel %vm553, %v445, 0
    %v696 = vsel %vm553, %v446, 0
    %v699 = vsel %vm553, %v447, 0
    %v702 = vsel %vm553, %v448, 0
    %v705 = vsel %vm553, %v449, 0
    %v708 = vsel %vm553, %v450, 0
    %v711 = vsel %vm553, %v451, 0
    %v714 = vsel %vm553, %v452, 0
    %v717 = vsel %vm553, %v453, 0
    %v720 = vsel %vm553, %v454, 0
    %v723 = vsel %vm553, %v455, 0
    %v726 = vsel %vm553, %v456, 0
    %v729 = vsel %vm553, %v457, 0
    %v732 = vsel %vm553, %v458, 0
    %v735 = vsel %vm553, %v459, 0
    %v738 = vsel %vm553, %v460, 0
    %v741 = vsel %vm553, %v461, 0
    %v744 = vsel %vm553, %v462, 0
    %v747 = vsel %vm553, %v463, 0
    %v750 = vsel %vm553, %v464, 0
    %v753 = vsel %vm553, %v465, 0
    %v756 = vsel %vm553, %v466, 0
    %v759 = vsel %vm553, %v467, 0
    %v762 = vsel %vm553, %v468, 0
    %v765 = vsel %vm553, %v469, 0
    %v768 = vsel %vm553, %v470, 0
    %v771 = vsel %vm553, %v471, 0
    %773 = vmatprep.subr.bf16.mxu0 0
    %774 = vmatpush1.bf16.xpose.msra.mxu0 %v582
    %775 = vmatprep.subr.bf16.mxu0 0
    %776 = vmatpush1.bf16.xpose.msra.mxu0 %v585
    %777 = vmatprep.subr.bf16.mxu0 0
    %778 = vmatpush1.bf16.xpose.msra.mxu0 %v588
    %779 = vmatprep.subr.bf16.mxu0 0
    %780 = vmatpush1.bf16.xpose.msra.mxu0 %v591
    %781 = vmatprep.subr.bf16.mxu0 0
    %782 = vmatpush1.bf16.xpose.msra.mxu0 %v594
    %783 = vmatprep.subr.bf16.mxu0 0
    %784 = vmatpush1.bf16.xpose.msra.mxu0 %v597
    %785 = vmatprep.subr.bf16.mxu0 0
    %786 = vmatpush1.bf16.xpose.msra.mxu0 %v600
    %787 = vmatprep.subr.bf16.mxu0 0
    %788 = vmatpush1.bf16.xpose.msra.mxu0 %v603
    %789 = vmatprep.subr.bf16.mxu0 0
    %790 = vmatpush1.bf16.xpose.msra.mxu0 %v606
    %791 = vmatprep.subr.bf16.mxu0 0
    %792 = vmatpush1.bf16.xpose.msra.mxu0 %v609
    %793 = vmatprep.subr.bf16.mxu0 0
    %794 = vmatpush1.bf16.xpose.msra.mxu0 %v612
    %795 = vmatprep.subr.bf16.mxu0 0
    %796 = vmatpush1.bf16.xpose.msra.mxu0 %v615
    %797 = vmatprep.subr.bf16.mxu0 0
    %798 = vmatpush1.bf16.xpose.msra.mxu0 %v618
    %799 = vmatprep.subr.bf16.mxu0 0
    %800 = vmatpush1.bf16.xpose.msra.mxu0 %v621
    %801 = vmatprep.subr.bf16.mxu0 0
    %802 = vmatpush1.bf16.xpose.msra.mxu0 %v624
    %803 = vmatprep.subr.bf16.mxu0 0
    %804 = vmatpush1.bf16.xpose.msra.mxu0 %v627
    %805 = vmatprep.mubr.bf16.mxu0 0
    %806 = vmatmul.mubr.bf16.gmra.mrb[0].mxu0 %v555
    %v807 = vpop.f32.mrb[0].mxu0
    %v808 = vadd.f32 0.0, %v807
    %v809 = vpop.f32.mrb[0].mxu0
    %v810 = vadd.f32 0.0, %v809
    %v811 = vpop.f32.mrb[0].mxu0
    %v812 = vadd.f32 0.0, %v811
    %v813 = vpop.f32.mrb[0].mxu0
    %v814 = vadd.f32 0.0, %v813
    %815 = vmatprep.mubr.bf16.mxu0 0
    %816 = vmatmul.mubr.bf16.gmra.mrb[0].mxu0 %v558
    %v817 = vpop.f32.mrb[0].mxu0
    %v818 = vadd.f32 0.0, %v817
    %v819 = vpop.f32.mrb[0].mxu0
    %v820 = vadd.f32 0.0, %v819
    %v821 = vpop.f32.mrb[0].mxu0
    %v822 = vadd.f32 0.0, %v821
    %v823 = vpop.f32.mrb[0].mxu0
    %v824 = vadd.f32 0.0, %v823
    %825 = vmatprep.mubr.bf16.mxu0 0
    %826 = vmatmul.mubr.bf16.gmra.mrb[0].mxu0 %v561
    %v827 = vpop.f32.mrb[0].mxu0
    %v828 = vadd.f32 0.0, %v827
    %v829 = vpop.f32.mrb[0].mxu0
    %v830 = vadd.f32 0.0, %v829
    %v831 = vpop.f32.mrb[0].mxu0
    %v832 = vadd.f32 0.0, %v831
    %v833 = vpop.f32.mrb[0].mxu0
    %v834 = vadd.f32 0.0, %v833
    %835 = vmatprep.mubr.bf16.mxu0 0
    %836 = vmatmul.mubr.bf16.gmra.mrb[0].mxu0 %v564
    %v837 = vpop.f32.mrb[0].mxu0
    %v838 = vadd.f32 0.0, %v837
    %v839 = vpop.f32.mrb[0].mxu0
    %v840 = vadd.f32 0.0, %v839
    %v841 = vpop.f32.mrb[0].mxu0
    %v842 = vadd.f32 0.0, %v841
    %v843 = vpop.f32.mrb[0].mxu0
    %v844 = vadd.f32 0.0, %v843
    %845 = vmatprep.mubr.bf16.mxu0 0
    %846 = vmatmul.mubr.bf16.gmra.mrb[0].mxu0 %v567
    %v847 = vpop.f32.mrb[0].mxu0
    %v848 = vadd.f32 0.0, %v847
    %v849 = vpop.f32.mrb[0].mxu0
    %v850 = vadd.f32 0.0, %v849
    %v851 = vpop.f32.mrb[0].mxu0
    %v852 = vadd.f32 0.0, %v851
    %v853 = vpop.f32.mrb[0].mxu0
    %v854 = vadd.f32 0.0, %v853
    %855 = vmatprep.mubr.bf16.mxu0 0
    %856 = vmatmul.mubr.bf16.gmra.mrb[0].mxu0 %v570
    %v857 = vpop.f32.mrb[0].mxu0
    %v858 = vadd.f32 0.0, %v857
    %v859 = vpop.f32.mrb[0].mxu0
    %v860 = vadd.f32 0.0, %v859
    %v861 = vpop.f32.mrb[0].mxu0
    %v862 = vadd.f32 0.0, %v861
    %v863 = vpop.f32.mrb[0].mxu0
    %v864 = vadd.f32 0.0, %v863
    %865 = vmatprep.mubr.bf16.mxu0 0
    %866 = vmatmul.mubr.bf16.gmra.mrb[0].mxu0 %v573
    %v867 = vpop.f32.mrb[0].mxu0
    %v868 = vadd.f32 0.0, %v867
    %v869 = vpop.f32.mrb[0].mxu0
    %v870 = vadd.f32 0.0, %v869
    %v871 = vpop.f32.mrb[0].mxu0
    %v872 = vadd.f32 0.0, %v871
    %v873 = vpop.f32.mrb[0].mxu0
    %v874 = vadd.f32 0.0, %v873
    %875 = vmatprep.mubr.bf16.mxu0 0
    %876 = vmatmul.mubr.bf16.gmra.mrb[0].mxu0 %v576
    %v877 = vpop.f32.mrb[0].mxu0
    %v878 = vadd.f32 0.0, %v877
    %v879 = vpop.f32.mrb[0].mxu0
    %v880 = vadd.f32 0.0, %v879
    %v881 = vpop.f32.mrb[0].mxu0
    %v882 = vadd.f32 0.0, %v881
    %v883 = vpop.f32.mrb[0].mxu0
    %v884 = vadd.f32 0.0, %v883
    %885 = vmatprep.mubr.bf16.mxu0 0
    %886 = vmatmul.mubr.bf16.gmra.mrb[0].mxu0 %v579
    %v887 = vpop.f32.mrb[0].mxu0
    %v888 = vadd.f32 0.0, %v887
    %v889 = vpop.f32.mrb[0].mxu0
    %v890 = vadd.f32 0.0, %v889
    %v891 = vpop.f32.mrb[0].mxu0
    %v892 = vadd.f32 0.0, %v891
    %v893 = vpop.f32.mrb[0].mxu0
    %v894 = vadd.f32 0.0, %v893
    %895 = vdwg.mxu0
    %896 = vmatprep.subr.bf16.mxu0 0
    %897 = vmatpush1.bf16.xpose.msra.mxu0 %v630
    %898 = vmatprep.subr.bf16.mxu0 0
    %899 = vmatpush1.bf16.xpose.msra.mxu0 %v633
    %900 = vmatprep.subr.bf16.mxu0 0
    %901 = vmatpush1.bf16.xpose.msra.mxu0 %v636
    %902 = vmatprep.subr.bf16.mxu0 0
    %903 = vmatpush1.bf16.xpose.msra.mxu0 %v639
    %904 = vmatprep.subr.bf16.mxu0 0
    %905 = vmatpush1.bf16.xpose.msra.mxu0 %v642
    %906 = vmatprep.subr.bf16.mxu0 0
    %907 = vmatpush1.bf16.xpose.msra.mxu0 %v645
    %908 = vmatprep.subr.bf16.mxu0 0
    %909 = vmatpush1.bf16.xpose.msra.mxu0 %v648
    %910 = vmatprep.subr.bf16.mxu0 0
    %911 = vmatpush1.bf16.xpose.msra.mxu0 %v651
    %912 = vmatprep.subr.bf16.mxu0 0
    %913 = vmatpush1.bf16.xpose.msra.mxu0 %v654
    %914 = vmatprep.subr.bf16.mxu0 0
    %915 = vmatpush1.bf16.xpose.msra.mxu0 %v657
    %916 = vmatprep.subr.bf16.mxu0 0
    %917 = vmatpush1.bf16.xpose.msra.mxu0 %v660
    %918 = vmatprep.subr.bf16.mxu0 0
    %919 = vmatpush1.bf16.xpose.msra.mxu0 %v663
    %920 = vmatprep.subr.bf16.mxu0 0
    %921 = vmatpush1.bf16.xpose.msra.mxu0 %v666
    %922 = vmatprep.subr.bf16.mxu0 0
    %923 = vmatpush1.bf16.xpose.msra.mxu0 %v669
    %924 = vmatprep.subr.bf16.mxu0 0
    %925 = vmatpush1.bf16.xpose.msra.mxu0 %v672
    %926 = vmatprep.subr.bf16.mxu0 0
    %927 = vmatpush1.bf16.xpose.msra.mxu0 %v675
    %928 = vmatprep.mubr.bf16.mxu0 0
    %929 = vmatmul.mubr.bf16.gmra.mrb[0].mxu0 %v555
    %v930 = vpop.f32.mrb[0].mxu0
    %v931 = vadd.f32 0.0, %v930
    %v932 = vpop.f32.mrb[0].mxu0
    %v933 = vadd.f32 0.0, %v932
    %v934 = vpop.f32.mrb[0].mxu0
    %v935 = vadd.f32 0.0, %v934
    %v936 = vpop.f32.mrb[0].mxu0
    %v937 = vadd.f32 0.0, %v936
    %938 = vmatprep.mubr.bf16.mxu0 0
    %939 = vmatmul.mubr.bf16.gmra.mrb[0].mxu0 %v558
    %v940 = vpop.f32.mrb[0].mxu0
    %v941 = vadd.f32 0.0, %v940
    %v942 = vpop.f32.mrb[0].mxu0
    %v943 = vadd.f32 0.0, %v942
    %v944 = vpop.f32.mrb[0].mxu0
    %v945 = vadd.f32 0.0, %v944
    %v946 = vpop.f32.mrb[0].mxu0
    %v947 = vadd.f32 0.0, %v946
    %948 = vmatprep.mubr.bf16.mxu0 0
    %949 = vmatmul.mubr.bf16.gmra.mrb[0].mxu0 %v561
    %v950 = vpop.f32.mrb[0].mxu0
    %v951 = vadd.f32 0.0, %v950
    %v952 = vpop.f32.mrb[0].mxu0
    %v953 = vadd.f32 0.0, %v952
    %v954 = vpop.f32.mrb[0].mxu0
    %v955 = vadd.f32 0.0, %v954
    %v956 = vpop.f32.mrb[0].mxu0
    %v957 = vadd.f32 0.0, %v956
    %958 = vmatprep.mubr.bf16.mxu0 0
    %959 = vmatmul.mubr.bf16.gmra.mrb[0].mxu0 %v564
    %v960 = vpop.f32.mrb[0].mxu0
    %v961 = vadd.f32 0.0, %v960
    %v962 = vpop.f32.mrb[0].mxu0
    %v963 = vadd.f32 0.0, %v962
    %v964 = vpop.f32.mrb[0].mxu0
    %v965 = vadd.f32 0.0, %v964
    %v966 = vpop.f32.mrb[0].mxu0
    %v967 = vadd.f32 0.0, %v966
    %968 = vmatprep.mubr.bf16.mxu0 0
    %969 = vmatmul.mubr.bf16.gmra.mrb[0].mxu0 %v567
    %v970 = vpop.f32.mrb[0].mxu0
    %v971 = vadd.f32 0.0, %v970
    %v972 = vpop.f32.mrb[0].mxu0
    %v973 = vadd.f32 0.0, %v972
    %v974 = vpop.f32.mrb[0].mxu0
    %v975 = vadd.f32 0.0, %v974
    %v976 = vpop.f32.mrb[0].mxu0
    %v977 = vadd.f32 0.0, %v976
    %978 = vmatprep.mubr.bf16.mxu0 0
    %979 = vmatmul.mubr.bf16.gmra.mrb[0].mxu0 %v570
    %v980 = vpop.f32.mrb[0].mxu0
    %v981 = vadd.f32 0.0, %v980
    %v982 = vpop.f32.mrb[0].mxu0
    %v983 = vadd.f32 0.0, %v982
    %v984 = vpop.f32.mrb[0].mxu0
    %v985 = vadd.f32 0.0, %v984
    %v986 = vpop.f32.mrb[0].mxu0
    %v987 = vadd.f32 0.0, %v986
    %988 = vmatprep.mubr.bf16.mxu0 0
    %989 = vmatmul.mubr.bf16.gmra.mrb[0].mxu0 %v573
    %v990 = vpop.f32.mrb[0].mxu0
    %v991 = vadd.f32 0.0, %v990
    %v992 = vpop.f32.mrb[0].mxu0
    %v993 = vadd.f32 0.0, %v992
    %v994 = vpop.f32.mrb[0].mxu0
    %v995 = vadd.f32 0.0, %v994
    %v996 = vpop.f32.mrb[0].mxu0
    %v997 = vadd.f32 0.0, %v996
    %998 = vmatprep.mubr.bf16.mxu0 0
    %999 = vmatmul.mubr.bf16.gmra.mrb[0].mxu0 %v576
    %v1000 = vpop.f32.mrb[0].mxu0
    %v1001 = vadd.f32 0.0, %v1000
    %v1002 = vpop.f32.mrb[0].mxu0
    %v1003 = vadd.f32 0.0, %v1002
    %v1004 = vpop.f32.mrb[0].mxu0
    %v1005 = vadd.f32 0.0, %v1004
    %v1006 = vpop.f32.mrb[0].mxu0
    %v1007 = vadd.f32 0.0, %v1006
    %1008 = vmatprep.mubr.bf16.mxu0 0
    %1009 = vmatmul.mubr.bf16.gmra.mrb[0].mxu0 %v579
    %v1010 = vpop.f32.mrb[0].mxu0
    %v1011 = vadd.f32 0.0, %v1010
    %v1012 = vpop.f32.mrb[0].mxu0
    %v1013 = vadd.f32 0.0, %v1012
    %v1014 = vpop.f32.mrb[0].mxu0
    %v1015 = vadd.f32 0.0, %v1014
    %v1016 = vpop.f32.mrb[0].mxu0
    %v1017 = vadd.f32 0.0, %v1016
    %1018 = vdwg.mxu0
    %1019 = vmatprep.subr.bf16.mxu0 0
    %1020 = vmatpush1.bf16.xpose.msra.mxu0 %v678
    %1021 = vmatprep.subr.bf16.mxu0 0
    %1022 = vmatpush1.bf16.xpose.msra.mxu0 %v681
    %1023 = vmatprep.subr.bf16.mxu0 0
    %1024 = vmatpush1.bf16.xpose.msra.mxu0 %v684
    %1025 = vmatprep.subr.bf16.mxu0 0
    %1026 = vmatpush1.bf16.xpose.msra.mxu0 %v687
    %1027 = vmatprep.subr.bf16.mxu0 0
    %1028 = vmatpush1.bf16.xpose.msra.mxu0 %v690
    %1029 = vmatprep.subr.bf16.mxu0 0
    %1030 = vmatpush1.bf16.xpose.msra.mxu0 %v693
    %1031 = vmatprep.subr.bf16.mxu0 0
    %1032 = vmatpush1.bf16.xpose.msra.mxu0 %v696
    %1033 = vmatprep.subr.bf16.mxu0 0
    %1034 = vmatpush1.bf16.xpose.msra.mxu0 %v699
    %1035 = vmatprep.subr.bf16.mxu0 0
    %1036 = vmatpush1.bf16.xpose.msra.mxu0 %v702
    %1037 = vmatprep.subr.bf16.mxu0 0
    %1038 = vmatpush1.bf16.xpose.msra.mxu0 %v705
    %1039 = vmatprep.subr.bf16.mxu0 0
    %1040 = vmatpush1.bf16.xpose.msra.mxu0 %v708
    %1041 = vmatprep.subr.bf16.mxu0 0
    %1042 = vmatpush1.bf16.xpose.msra.mxu0 %v711
    %1043 = vmatprep.subr.bf16.mxu0 0
    %1044 = vmatpush1.bf16.xpose.msra.mxu0 %v714
    %1045 = vmatprep.subr.bf16.mxu0 0
    %1046 = vmatpush1.bf16.xpose.msra.mxu0 %v717
    %1047 = vmatprep.subr.bf16.mxu0 0
    %1048 = vmatpush1.bf16.xpose.msra.mxu0 %v720
    %1049 = vmatprep.subr.bf16.mxu0 0
    %1050 = vmatpush1.bf16.xpose.msra.mxu0 %v723
    %1051 = vmatprep.mubr.bf16.mxu0 0
    %1052 = vmatmul.mubr.bf16.gmra.mrb[0].mxu0 %v555
    %v1053 = vpop.f32.mrb[0].mxu0
    %v1054 = vadd.f32 0.0, %v1053
    %v1055 = vpop.f32.mrb[0].mxu0
    %v1056 = vadd.f32 0.0, %v1055
    %v1057 = vpop.f32.mrb[0].mxu0
    %v1058 = vadd.f32 0.0, %v1057
    %v1059 = vpop.f32.mrb[0].mxu0
    %v1060 = vadd.f32 0.0, %v1059
    %1061 = vmatprep.mubr.bf16.mxu0 0
    %1062 = vmatmul.mubr.bf16.gmra.mrb[0].mxu0 %v558
    %v1063 = vpop.f32.mrb[0].mxu0
    %v1064 = vadd.f32 0.0, %v1063
    %v1065 = vpop.f32.mrb[0].mxu0
    %v1066 = vadd.f32 0.0, %v1065
    %v1067 = vpop.f32.mrb[0].mxu0
    %v1068 = vadd.f32 0.0, %v1067
    %v1069 = vpop.f32.mrb[0].mxu0
    %v1070 = vadd.f32 0.0, %v1069
    %1071 = vmatprep.mubr.bf16.mxu0 0
    %1072 = vmatmul.mubr.bf16.gmra.mrb[0].mxu0 %v561
    %v1073 = vpop.f32.mrb[0].mxu0
    %v1074 = vadd.f32 0.0, %v1073
    %v1075 = vpop.f32.mrb[0].mxu0
    %v1076 = vadd.f32 0.0, %v1075
    %v1077 = vpop.f32.mrb[0].mxu0
    %v1078 = vadd.f32 0.0, %v1077
    %v1079 = vpop.f32.mrb[0].mxu0
    %v1080 = vadd.f32 0.0, %v1079
    %1081 = vmatprep.mubr.bf16.mxu0 0
    %1082 = vmatmul.mubr.bf16.gmra.mrb[0].mxu0 %v564
    %v1083 = vpop.f32.mrb[0].mxu0
    %v1084 = vadd.f32 0.0, %v1083
    %v1085 = vpop.f32.mrb[0].mxu0
    %v1086 = vadd.f32 0.0, %v1085
    %v1087 = vpop.f32.mrb[0].mxu0
    %v1088 = vadd.f32 0.0, %v1087
    %v1089 = vpop.f32.mrb[0].mxu0
    %v1090 = vadd.f32 0.0, %v1089
    %1091 = vmatprep.mubr.bf16.mxu0 0
    %1092 = vmatmul.mubr.bf16.gmra.mrb[0].mxu0 %v567
    %v1093 = vpop.f32.mrb[0].mxu0
    %v1094 = vadd.f32 0.0, %v1093
    %v1095 = vpop.f32.mrb[0].mxu0
    %v1096 = vadd.f32 0.0, %v1095
    %v1097 = vpop.f32.mrb[0].mxu0
    %v1098 = vadd.f32 0.0, %v1097
    %v1099 = vpop.f32.mrb[0].mxu0
    %v1100 = vadd.f32 0.0, %v1099
    %1101 = vmatprep.mubr.bf16.mxu0 0
    %1102 = vmatmul.mubr.bf16.gmra.mrb[0].mxu0 %v570
    %v1103 = vpop.f32.mrb[0].mxu0
    %v1104 = vadd.f32 0.0, %v1103
    %v1105 = vpop.f32.mrb[0].mxu0
    %v1106 = vadd.f32 0.0, %v1105
    %v1107 = vpop.f32.mrb[0].mxu0
    %v1108 = vadd.f32 0.0, %v1107
    %v1109 = vpop.f32.mrb[0].mxu0
    %v1110 = vadd.f32 0.0, %v1109
    %1111 = vmatprep.mubr.bf16.mxu0 0
    %1112 = vmatmul.mubr.bf16.gmra.mrb[0].mxu0 %v573
    %v1113 = vpop.f32.mrb[0].mxu0
    %v1114 = vadd.f32 0.0, %v1113
    %v1115 = vpop.f32.mrb[0].mxu0
    %v1116 = vadd.f32 0.0, %v1115
    %v1117 = vpop.f32.mrb[0].mxu0
    %v1118 = vadd.f32 0.0, %v1117
    %v1119 = vpop.f32.mrb[0].mxu0
    %v1120 = vadd.f32 0.0, %v1119
    %1121 = vmatprep.mubr.bf16.mxu0 0
    %1122 = vmatmul.mubr.bf16.gmra.mrb[0].mxu0 %v576
    %v1123 = vpop.f32.mrb[0].mxu0
    %v1124 = vadd.f32 0.0, %v1123
    %v1125 = vpop.f32.mrb[0].mxu0
    %v1126 = vadd.f32 0.0, %v1125
    %v1127 = vpop.f32.mrb[0].mxu0
    %v1128 = vadd.f32 0.0, %v1127
    %v1129 = vpop.f32.mrb[0].mxu0
    %v1130 = vadd.f32 0.0, %v1129
    %1131 = vmatprep.mubr.bf16.mxu0 0
    %1132 = vmatmul.mubr.bf16.gmra.mrb[0].mxu0 %v579
    %v1133 = vpop.f32.mrb[0].mxu0
    %v1134 = vadd.f32 0.0, %v1133
    %v1135 = vpop.f32.mrb[0].mxu0
    %v1136 = vadd.f32 0.0, %v1135
    %v1137 = vpop.f32.mrb[0].mxu0
    %v1138 = vadd.f32 0.0, %v1137
    %v1139 = vpop.f32.mrb[0].mxu0
    %v1140 = vadd.f32 0.0, %v1139
    %1141 = vdwg.mxu0
    %1142 = vmatprep.subr.bf16.mxu0 0
    %1143 = vmatpush1.bf16.xpose.msra.mxu0 %v726
    %1144 = vmatprep.subr.bf16.mxu0 0
    %1145 = vmatpush1.bf16.xpose.msra.mxu0 %v729
    %1146 = vmatprep.subr.bf16.mxu0 0
    %1147 = vmatpush1.bf16.xpose.msra.mxu0 %v732
    %1148 = vmatprep.subr.bf16.mxu0 0
    %1149 = vmatpush1.bf16.xpose.msra.mxu0 %v735
    %1150 = vmatprep.subr.bf16.mxu0 0
    %1151 = vmatpush1.bf16.xpose.msra.mxu0 %v738
    %1152 = vmatprep.subr.bf16.mxu0 0
    %1153 = vmatpush1.bf16.xpose.msra.mxu0 %v741
    %1154 = vmatprep.subr.bf16.mxu0 0
    %1155 = vmatpush1.bf16.xpose.msra.mxu0 %v744
    %1156 = vmatprep.subr.bf16.mxu0 0
    %1157 = vmatpush1.bf16.xpose.msra.mxu0 %v747
    %1158 = vmatprep.subr.bf16.mxu0 0
    %1159 = vmatpush1.bf16.xpose.msra.mxu0 %v750
    %1160 = vmatprep.subr.bf16.mxu0 0
    %1161 = vmatpush1.bf16.xpose.msra.mxu0 %v753
    %1162 = vmatprep.subr.bf16.mxu0 0
    %1163 = vmatpush1.bf16.xpose.msra.mxu0 %v756
    %1164 = vmatprep.subr.bf16.mxu0 0
    %1165 = vmatpush1.bf16.xpose.msra.mxu0 %v759
    %1166 = vmatprep.subr.bf16.mxu0 0
    %1167 = vmatpush1.bf16.xpose.msra.mxu0 %v762
    %1168 = vmatprep.subr.bf16.mxu0 0
    %1169 = vmatpush1.bf16.xpose.msra.mxu0 %v765
    %1170 = vmatprep.subr.bf16.mxu0 0
    %1171 = vmatpush1.bf16.xpose.msra.mxu0 %v768
    %1172 = vmatprep.subr.bf16.mxu0 0
    %1173 = vmatpush1.bf16.xpose.msra.mxu0 %v771
    %1174 = vmatprep.mubr.bf16.mxu0 0
    %1175 = vmatmul.mubr.bf16.gmra.mrb[0].mxu0 %v555
    %v1176 = vpop.f32.mrb[0].mxu0
    %v1177 = vadd.f32 0.0, %v1176
    %v1178 = vpop.f32.mrb[0].mxu0
    %v1179 = vadd.f32 0.0, %v1178
    %v1180 = vpop.f32.mrb[0].mxu0
    %v1181 = vadd.f32 0.0, %v1180
    %v1182 = vpop.f32.mrb[0].mxu0
    %v1183 = vadd.f32 0.0, %v1182
    %1184 = vmatprep.mubr.bf16.mxu0 0
    %1185 = vmatmul.mubr.bf16.gmra.mrb[0].mxu0 %v558
    %v1186 = vpop.f32.mrb[0].mxu0
    %v1187 = vadd.f32 0.0, %v1186
    %v1188 = vpop.f32.mrb[0].mxu0
    %v1189 = vadd.f32 0.0, %v1188
    %v1190 = vpop.f32.mrb[0].mxu0
    %v1191 = vadd.f32 0.0, %v1190
    %v1192 = vpop.f32.mrb[0].mxu0
    %v1193 = vadd.f32 0.0, %v1192
    %1194 = vmatprep.mubr.bf16.mxu0 0
    %1195 = vmatmul.mubr.bf16.gmra.mrb[0].mxu0 %v561
    %v1196 = vpop.f32.mrb[0].mxu0
    %v1197 = vadd.f32 0.0, %v1196
    %v1198 = vpop.f32.mrb[0].mxu0
    %v1199 = vadd.f32 0.0, %v1198
    %v1200 = vpop.f32.mrb[0].mxu0
    %v1201 = vadd.f32 0.0, %v1200
    %v1202 = vpop.f32.mrb[0].mxu0
    %v1203 = vadd.f32 0.0, %v1202
    %1204 = vmatprep.mubr.bf16.mxu0 0
    %1205 = vmatmul.mubr.bf16.gmra.mrb[0].mxu0 %v564
    %v1206 = vpop.f32.mrb[0].mxu0
    %v1207 = vadd.f32 0.0, %v1206
    %v1208 = vpop.f32.mrb[0].mxu0
    %v1209 = vadd.f32 0.0, %v1208
    %v1210 = vpop.f32.mrb[0].mxu0
    %v1211 = vadd.f32 0.0, %v1210
    %v1212 = vpop.f32.mrb[0].mxu0
    %v1213 = vadd.f32 0.0, %v1212
    %1214 = vmatprep.mubr.bf16.mxu0 0
    %1215 = vmatmul.mubr.bf16.gmra.mrb[0].mxu0 %v567
    %v1216 = vpop.f32.mrb[0].mxu0
    %v1217 = vadd.f32 0.0, %v1216
    %v1218 = vpop.f32.mrb[0].mxu0
    %v1219 = vadd.f32 0.0, %v1218
    %v1220 = vpop.f32.mrb[0].mxu0
    %v1221 = vadd.f32 0.0, %v1220
    %v1222 = vpop.f32.mrb[0].mxu0
    %v1223 = vadd.f32 0.0, %v1222
    %1224 = vmatprep.mubr.bf16.mxu0 0
    %1225 = vmatmul.mubr.bf16.gmra.mrb[0].mxu0 %v570
    %v1226 = vpop.f32.mrb[0].mxu0
    %v1227 = vadd.f32 0.0, %v1226
    %v1228 = vpop.f32.mrb[0].mxu0
    %v1229 = vadd.f32 0.0, %v1228
    %v1230 = vpop.f32.mrb[0].mxu0
    %v1231 = vadd.f32 0.0, %v1230
    %v1232 = vpop.f32.mrb[0].mxu0
    %v1233 = vadd.f32 0.0, %v1232
    %1234 = vmatprep.mubr.bf16.mxu0 0
    %1235 = vmatmul.mubr.bf16.gmra.mrb[0].mxu0 %v573
    %v1236 = vpop.f32.mrb[0].mxu0
    %v1237 = vadd.f32 0.0, %v1236
    %v1238 = vpop.f32.mrb[0].mxu0
    %v1239 = vadd.f32 0.0, %v1238
    %v1240 = vpop.f32.mrb[0].mxu0
    %v1241 = vadd.f32 0.0, %v1240
    %v1242 = vpop.f32.mrb[0].mxu0
    %v1243 = vadd.f32 0.0, %v1242
    %1244 = vmatprep.mubr.bf16.mxu0 0
    %1245 = vmatmul.mubr.bf16.gmra.mrb[0].mxu0 %v576
    %v1246 = vpop.f32.mrb[0].mxu0
    %v1247 = vadd.f32 0.0, %v1246
    %v1248 = vpop.f32.mrb[0].mxu0
    %v1249 = vadd.f32 0.0, %v1248
    %v1250 = vpop.f32.mrb[0].mxu0
    %v1251 = vadd.f32 0.0, %v1250
    %v1252 = vpop.f32.mrb[0].mxu0
    %v1253 = vadd.f32 0.0, %v1252
    %1254 = vmatprep.mubr.bf16.mxu0 0
    %1255 = vmatmul.mubr.bf16.gmra.mrb[0].mxu0 %v579
    %v1256 = vpop.f32.mrb[0].mxu0
    %v1257 = vadd.f32 0.0, %v1256
    %v1258 = vpop.f32.mrb[0].mxu0
    %v1259 = vadd.f32 0.0, %v1258
    %v1260 = vpop.f32.mrb[0].mxu0
    %v1261 = vadd.f32 0.0, %v1260
    %v1262 = vpop.f32.mrb[0].mxu0
    %v1263 = vadd.f32 0.0, %v1262
    %1264 = vdwg.mxu0
    %v1283 = vunpack.c.l.b16 %v472
    %v1284 = vunpack.c.l.b16 %v473
    %v1285 = vunpack.c.l.b16 %v474
    %v1286 = vunpack.c.l.b16 %v475
    %v1287 = vunpack.c.l.b16 %v476
    %v1288 = vunpack.c.l.b16 %v477
    %v1289 = vunpack.c.l.b16 %v478
    %v1290 = vunpack.c.l.b16 %v479
    %v1291 = vunpack.c.l.b16 %v480
    %v1292 = vunpack.c.l.b16 %v481
    %v1293 = vunpack.c.l.b16 %v482
    %v1294 = vunpack.c.l.b16 %v483
    %v1295 = vunpack.c.l.b16 %v484
    %v1296 = vunpack.c.l.b16 %v485
    %v1297 = vunpack.c.l.b16 %v486
    %v1298 = vunpack.c.l.b16 %v487
    %v1299 = vunpack.c.l.b16 %v488
    %v1300 = vunpack.c.l.b16 %v489
    %v1301 = vpack.c.b16 %v1284, %v1283
    %v1302 = vpack.c.b16 %v1286, %v1285
    %v1303 = vpack.c.b16 %v1288, %v1287
    %v1304 = vpack.c.b16 %v1290, %v1289
    %v1305 = vpack.c.b16 %v1292, %v1291
    %v1306 = vpack.c.b16 %v1294, %v1293
    %v1307 = vpack.c.b16 %v1296, %v1295
    %v1308 = vpack.c.b16 %v1298, %v1297
    %v1309 = vpack.c.b16 %v1300, %v1299
    %vm1310 = vcmask 80896
    %v1312 = vsel %vm1310, %v1301, 0
    %v1315 = vsel %vm1310, %v1302, 0
    %v1318 = vsel %vm1310, %v1303, 0
    %v1321 = vsel %vm1310, %v1304, 0
    %v1324 = vsel %vm1310, %v1305, 0
    %v1327 = vsel %vm1310, %v1306, 0
    %v1330 = vsel %vm1310, %v1307, 0
    %v1333 = vsel %vm1310, %v1308, 0
    %v1336 = vsel %vm1310, %v1309, 0
    %v1339 = vsel %vm1310, %v216, 0
    %v1342 = vsel %vm1310, %v217, 0
    %v1345 = vsel %vm1310, %v218, 0
    %v1348 = vsel %vm1310, %v219, 0
    %v1351 = vsel %vm1310, %v220, 0
    %v1354 = vsel %vm1310, %v221, 0
    %v1357 = vsel %vm1310, %v222, 0
    %v1360 = vsel %vm1310, %v223, 0
    %v1363 = vsel %vm1310, %v224, 0
    %v1366 = vsel %vm1310, %v225, 0
    %v1369 = vsel %vm1310, %v226, 0
    %v1372 = vsel %vm1310, %v227, 0
    %v1375 = vsel %vm1310, %v228, 0
    %v1378 = vsel %vm1310, %v229, 0
    %v1381 = vsel %vm1310, %v230, 0
    %v1384 = vsel %vm1310, %v231, 0
    %v1387 = vsel %vm1310, %v232, 0
    %v1390 = vsel %vm1310, %v233, 0
    %v1393 = vsel %vm1310, %v234, 0
    %v1396 = vsel %vm1310, %v235, 0
    %v1399 = vsel %vm1310, %v236, 0
    %v1402 = vsel %vm1310, %v237, 0
    %v1405 = vsel %vm1310, %v238, 0
    %v1408 = vsel %vm1310, %v239, 0
    %v1411 = vsel %vm1310, %v240, 0
    %v1414 = vsel %vm1310, %v241, 0
    %v1417 = vsel %vm1310, %v242, 0
    %v1420 = vsel %vm1310, %v243, 0
    %v1423 = vsel %vm1310, %v244, 0
    %v1426 = vsel %vm1310, %v245, 0
    %v1429 = vsel %vm1310, %v246, 0
    %v1432 = vsel %vm1310, %v247, 0
    %v1435 = vsel %vm1310, %v248, 0
    %v1438 = vsel %vm1310, %v249, 0
    %v1441 = vsel %vm1310, %v250, 0
    %v1444 = vsel %vm1310, %v251, 0
    %v1447 = vsel %vm1310, %v252, 0
    %v1450 = vsel %vm1310, %v253, 0
    %v1453 = vsel %vm1310, %v254, 0
    %v1456 = vsel %vm1310, %v255, 0
    %v1459 = vsel %vm1310, %v256, 0
    %v1462 = vsel %vm1310, %v257, 0
    %v1465 = vsel %vm1310, %v258, 0
    %v1468 = vsel %vm1310, %v259, 0
    %v1471 = vsel %vm1310, %v260, 0
    %v1474 = vsel %vm1310, %v261, 0
    %v1477 = vsel %vm1310, %v262, 0
    %v1480 = vsel %vm1310, %v263, 0
    %v1483 = vsel %vm1310, %v264, 0
    %v1486 = vsel %vm1310, %v265, 0
    %v1489 = vsel %vm1310, %v266, 0
    %v1492 = vsel %vm1310, %v267, 0
    %v1495 = vsel %vm1310, %v268, 0
    %v1498 = vsel %vm1310, %v269, 0
    %v1501 = vsel %vm1310, %v270, 0
    %v1504 = vsel %vm1310, %v271, 0
    %v1507 = vsel %vm1310, %v272, 0
    %v1510 = vsel %vm1310, %v273, 0
    %v1513 = vsel %vm1310, %v274, 0
    %v1516 = vsel %vm1310, %v275, 0
    %v1519 = vsel %vm1310, %v276, 0
    %v1522 = vsel %vm1310, %v277, 0
    %v1525 = vsel %vm1310, %v278, 0
    %v1528 = vsel %vm1310, %v279, 0
    %1530 = vmatprep.subr.bf16.mxu0 0
    %1531 = vmatpush1.bf16.xpose.msra.mxu0 %v1339
    %1532 = vmatprep.subr.bf16.mxu0 0
    %1533 = vmatpush1.bf16.xpose.msra.mxu0 %v1342
    %1534 = vmatprep.subr.bf16.mxu0 0
    %1535 = vmatpush1.bf16.xpose.msra.mxu0 %v1345
    %1536 = vmatprep.subr.bf16.mxu0 0
    %1537 = vmatpush1.bf16.xpose.msra.mxu0 %v1348
    %1538 = vmatprep.subr.bf16.mxu0 0
    %1539 = vmatpush1.bf16.xpose.msra.mxu0 %v1351
    %1540 = vmatprep.subr.bf16.mxu0 0
    %1541 = vmatpush1.bf16.xpose.msra.mxu0 %v1354
    %1542 = vmatprep.subr.bf16.mxu0 0
    %1543 = vmatpush1.bf16.xpose.msra.mxu0 %v1357
    %1544 = vmatprep.subr.bf16.mxu0 0
    %1545 = vmatpush1.bf16.xpose.msra.mxu0 %v1360
    %1546 = vmatprep.subr.bf16.mxu0 0
    %1547 = vmatpush1.bf16.xpose.msra.mxu0 %v1363
    %1548 = vmatprep.subr.bf16.mxu0 0
    %1549 = vmatpush1.bf16.xpose.msra.mxu0 %v1366
    %1550 = vmatprep.subr.bf16.mxu0 0
    %1551 = vmatpush1.bf16.xpose.msra.mxu0 %v1369
    %1552 = vmatprep.subr.bf16.mxu0 0
    %1553 = vmatpush1.bf16.xpose.msra.mxu0 %v1372
    %1554 = vmatprep.subr.bf16.mxu0 0
    %1555 = vmatpush1.bf16.xpose.msra.mxu0 %v1375
    %1556 = vmatprep.subr.bf16.mxu0 0
    %1557 = vmatpush1.bf16.xpose.msra.mxu0 %v1378
    %1558 = vmatprep.subr.bf16.mxu0 0
    %1559 = vmatpush1.bf16.xpose.msra.mxu0 %v1381
    %1560 = vmatprep.subr.bf16.mxu0 0
    %1561 = vmatpush1.bf16.xpose.msra.mxu0 %v1384
    %1562 = vmatprep.mubr.bf16.mxu0 0
    %1563 = vmatmul.mubr.bf16.gmra.mrb[0].mxu0 %v1312
    %v1564 = vpop.f32.mrb[0].mxu0
    %v1565 = vadd.f32 %v808, %v1564
    %v1566 = vpop.f32.mrb[0].mxu0
    %v1567 = vadd.f32 %v810, %v1566
    %v1568 = vpop.f32.mrb[0].mxu0
    %v1569 = vadd.f32 %v812, %v1568
    %v1570 = vpop.f32.mrb[0].mxu0
    %v1571 = vadd.f32 %v814, %v1570
    %1572 = vmatprep.mubr.bf16.mxu0 0
    %1573 = vmatmul.mubr.bf16.gmra.mrb[0].mxu0 %v1315
    %v1574 = vpop.f32.mrb[0].mxu0
    %v1575 = vadd.f32 %v818, %v1574
    %v1576 = vpop.f32.mrb[0].mxu0
    %v1577 = vadd.f32 %v820, %v1576
    %v1578 = vpop.f32.mrb[0].mxu0
    %v1579 = vadd.f32 %v822, %v1578
    %v1580 = vpop.f32.mrb[0].mxu0
    %v1581 = vadd.f32 %v824, %v1580
    %1582 = vmatprep.mubr.bf16.mxu0 0
    %1583 = vmatmul.mubr.bf16.gmra.mrb[0].mxu0 %v1318
    %v1584 = vpop.f32.mrb[0].mxu0
    %v1585 = vadd.f32 %v828, %v1584
    %v1586 = vpop.f32.mrb[0].mxu0
    %v1587 = vadd.f32 %v830, %v1586
    %v1588 = vpop.f32.mrb[0].mxu0
    %v1589 = vadd.f32 %v832, %v1588
    %v1590 = vpop.f32.mrb[0].mxu0
    %v1591 = vadd.f32 %v834, %v1590
    %1592 = vmatprep.mubr.bf16.mxu0 0
    %1593 = vmatmul.mubr.bf16.gmra.mrb[0].mxu0 %v1321
    %v1594 = vpop.f32.mrb[0].mxu0
    %v1595 = vadd.f32 %v838, %v1594
    %v1596 = vpop.f32.mrb[0].mxu0
    %v1597 = vadd.f32 %v840, %v1596
    %v1598 = vpop.f32.mrb[0].mxu0
    %v1599 = vadd.f32 %v842, %v1598
    %v1600 = vpop.f32.mrb[0].mxu0
    %v1601 = vadd.f32 %v844, %v1600
    %1602 = vmatprep.mubr.bf16.mxu0 0
    %1603 = vmatmul.mubr.bf16.gmra.mrb[0].mxu0 %v1324
    %v1604 = vpop.f32.mrb[0].mxu0
    %v1605 = vadd.f32 %v848, %v1604
    %v1606 = vpop.f32.mrb[0].mxu0
    %v1607 = vadd.f32 %v850, %v1606
    %v1608 = vpop.f32.mrb[0].mxu0
    %v1609 = vadd.f32 %v852, %v1608
    %v1610 = vpop.f32.mrb[0].mxu0
    %v1611 = vadd.f32 %v854, %v1610
    %1612 = vmatprep.mubr.bf16.mxu0 0
    %1613 = vmatmul.mubr.bf16.gmra.mrb[0].mxu0 %v1327
    %v1614 = vpop.f32.mrb[0].mxu0
    %v1615 = vadd.f32 %v858, %v1614
    %v1616 = vpop.f32.mrb[0].mxu0
    %v1617 = vadd.f32 %v860, %v1616
    %v1618 = vpop.f32.mrb[0].mxu0
    %v1619 = vadd.f32 %v862, %v1618
    %v1620 = vpop.f32.mrb[0].mxu0
    %v1621 = vadd.f32 %v864, %v1620
    %1622 = vmatprep.mubr.bf16.mxu0 0
    %1623 = vmatmul.mubr.bf16.gmra.mrb[0].mxu0 %v1330
    %v1624 = vpop.f32.mrb[0].mxu0
    %v1625 = vadd.f32 %v868, %v1624
    %v1626 = vpop.f32.mrb[0].mxu0
    %v1627 = vadd.f32 %v870, %v1626
    %v1628 = vpop.f32.mrb[0].mxu0
    %v1629 = vadd.f32 %v872, %v1628
    %v1630 = vpop.f32.mrb[0].mxu0
    %v1631 = vadd.f32 %v874, %v1630
    %1632 = vmatprep.mubr.bf16.mxu0 0
    %1633 = vmatmul.mubr.bf16.gmra.mrb[0].mxu0 %v1333
    %v1634 = vpop.f32.mrb[0].mxu0
    %v1635 = vadd.f32 %v878, %v1634
    %v1636 = vpop.f32.mrb[0].mxu0
    %v1637 = vadd.f32 %v880, %v1636
    %v1638 = vpop.f32.mrb[0].mxu0
    %v1639 = vadd.f32 %v882, %v1638
    %v1640 = vpop.f32.mrb[0].mxu0
    %v1641 = vadd.f32 %v884, %v1640
    %1642 = vmatprep.mubr.bf16.mxu0 0
    %1643 = vmatmul.mubr.bf16.gmra.mrb[0].mxu0 %v1336
    %v1644 = vpop.f32.mrb[0].mxu0
    %v1645 = vadd.f32 %v888, %v1644
    %v1646 = vpop.f32.mrb[0].mxu0
    %v1647 = vadd.f32 %v890, %v1646
    %v1648 = vpop.f32.mrb[0].mxu0
    %v1649 = vadd.f32 %v892, %v1648
    %v1650 = vpop.f32.mrb[0].mxu0
    %v1651 = vadd.f32 %v894, %v1650
    %1652 = vdwg.mxu0
    %1653 = vmatprep.subr.bf16.mxu0 0
    %1654 = vmatpush1.bf16.xpose.msra.mxu0 %v1387
    %1655 = vmatprep.subr.bf16.mxu0 0
    %1656 = vmatpush1.bf16.xpose.msra.mxu0 %v1390
    %1657 = vmatprep.subr.bf16.mxu0 0
    %1658 = vmatpush1.bf16.xpose.msra.mxu0 %v1393
    %1659 = vmatprep.subr.bf16.mxu0 0
    %1660 = vmatpush1.bf16.xpose.msra.mxu0 %v1396
    %1661 = vmatprep.subr.bf16.mxu0 0
    %1662 = vmatpush1.bf16.xpose.msra.mxu0 %v1399
    %1663 = vmatprep.subr.bf16.mxu0 0
    %1664 = vmatpush1.bf16.xpose.msra.mxu0 %v1402
    %1665 = vmatprep.subr.bf16.mxu0 0
    %1666 = vmatpush1.bf16.xpose.msra.mxu0 %v1405
    %1667 = vmatprep.subr.bf16.mxu0 0
    %1668 = vmatpush1.bf16.xpose.msra.mxu0 %v1408
    %1669 = vmatprep.subr.bf16.mxu0 0
    %1670 = vmatpush1.bf16.xpose.msra.mxu0 %v1411
    %1671 = vmatprep.subr.bf16.mxu0 0
    %1672 = vmatpush1.bf16.xpose.msra.mxu0 %v1414
    %1673 = vmatprep.subr.bf16.mxu0 0
    %1674 = vmatpush1.bf16.xpose.msra.mxu0 %v1417
    %1675 = vmatprep.subr.bf16.mxu0 0
    %1676 = vmatpush1.bf16.xpose.msra.mxu0 %v1420
    %1677 = vmatprep.subr.bf16.mxu0 0
    %1678 = vmatpush1.bf16.xpose.msra.mxu0 %v1423
    %1679 = vmatprep.subr.bf16.mxu0 0
    %1680 = vmatpush1.bf16.xpose.msra.mxu0 %v1426
    %1681 = vmatprep.subr.bf16.mxu0 0
    %1682 = vmatpush1.bf16.xpose.msra.mxu0 %v1429
    %1683 = vmatprep.subr.bf16.mxu0 0
    %1684 = vmatpush1.bf16.xpose.msra.mxu0 %v1432
    %1685 = vmatprep.mubr.bf16.mxu0 0
    %1686 = vmatmul.mubr.bf16.gmra.mrb[0].mxu0 %v1312
    %v1687 = vpop.f32.mrb[0].mxu0
    %v1688 = vadd.f32 %v931, %v1687
    %v1689 = vpop.f32.mrb[0].mxu0
    %v1690 = vadd.f32 %v933, %v1689
    %v1691 = vpop.f32.mrb[0].mxu0
    %v1692 = vadd.f32 %v935, %v1691
    %v1693 = vpop.f32.mrb[0].mxu0
    %v1694 = vadd.f32 %v937, %v1693
    %1695 = vmatprep.mubr.bf16.mxu0 0
    %1696 = vmatmul.mubr.bf16.gmra.mrb[0].mxu0 %v1315
    %v1697 = vpop.f32.mrb[0].mxu0
    %v1698 = vadd.f32 %v941, %v1697
    %v1699 = vpop.f32.mrb[0].mxu0
    %v1700 = vadd.f32 %v943, %v1699
    %v1701 = vpop.f32.mrb[0].mxu0
    %v1702 = vadd.f32 %v945, %v1701
    %v1703 = vpop.f32.mrb[0].mxu0
    %v1704 = vadd.f32 %v947, %v1703
    %1705 = vmatprep.mubr.bf16.mxu0 0
    %1706 = vmatmul.mubr.bf16.gmra.mrb[0].mxu0 %v1318
    %v1707 = vpop.f32.mrb[0].mxu0
    %v1708 = vadd.f32 %v951, %v1707
    %v1709 = vpop.f32.mrb[0].mxu0
    %v1710 = vadd.f32 %v953, %v1709
    %v1711 = vpop.f32.mrb[0].mxu0
    %v1712 = vadd.f32 %v955, %v1711
    %v1713 = vpop.f32.mrb[0].mxu0
    %v1714 = vadd.f32 %v957, %v1713
    %1715 = vmatprep.mubr.bf16.mxu0 0
    %1716 = vmatmul.mubr.bf16.gmra.mrb[0].mxu0 %v1321
    %v1717 = vpop.f32.mrb[0].mxu0
    %v1718 = vadd.f32 %v961, %v1717
    %v1719 = vpop.f32.mrb[0].mxu0
    %v1720 = vadd.f32 %v963, %v1719
    %v1721 = vpop.f32.mrb[0].mxu0
    %v1722 = vadd.f32 %v965, %v1721
    %v1723 = vpop.f32.mrb[0].mxu0
    %v1724 = vadd.f32 %v967, %v1723
    %1725 = vmatprep.mubr.bf16.mxu0 0
    %1726 = vmatmul.mubr.bf16.gmra.mrb[0].mxu0 %v1324
    %v1727 = vpop.f32.mrb[0].mxu0
    %v1728 = vadd.f32 %v971, %v1727
    %v1729 = vpop.f32.mrb[0].mxu0
    %v1730 = vadd.f32 %v973, %v1729
    %v1731 = vpop.f32.mrb[0].mxu0
    %v1732 = vadd.f32 %v975, %v1731
    %v1733 = vpop.f32.mrb[0].mxu0
    %v1734 = vadd.f32 %v977, %v1733
    %1735 = vmatprep.mubr.bf16.mxu0 0
    %1736 = vmatmul.mubr.bf16.gmra.mrb[0].mxu0 %v1327
    %v1737 = vpop.f32.mrb[0].mxu0
    %v1738 = vadd.f32 %v981, %v1737
    %v1739 = vpop.f32.mrb[0].mxu0
    %v1740 = vadd.f32 %v983, %v1739
    %v1741 = vpop.f32.mrb[0].mxu0
    %v1742 = vadd.f32 %v985, %v1741
    %v1743 = vpop.f32.mrb[0].mxu0
    %v1744 = vadd.f32 %v987, %v1743
    %1745 = vmatprep.mubr.bf16.mxu0 0
    %1746 = vmatmul.mubr.bf16.gmra.mrb[0].mxu0 %v1330
    %v1747 = vpop.f32.mrb[0].mxu0
    %v1748 = vadd.f32 %v991, %v1747
    %v1749 = vpop.f32.mrb[0].mxu0
    %v1750 = vadd.f32 %v993, %v1749
    %v1751 = vpop.f32.mrb[0].mxu0
    %v1752 = vadd.f32 %v995, %v1751
    %v1753 = vpop.f32.mrb[0].mxu0
    %v1754 = vadd.f32 %v997, %v1753
    %1755 = vmatprep.mubr.bf16.mxu0 0
    %1756 = vmatmul.mubr.bf16.gmra.mrb[0].mxu0 %v1333
    %v1757 = vpop.f32.mrb[0].mxu0
    %v1758 = vadd.f32 %v1001, %v1757
    %v1759 = vpop.f32.mrb[0].mxu0
    %v1760 = vadd.f32 %v1003, %v1759
    %v1761 = vpop.f32.mrb[0].mxu0
    %v1762 = vadd.f32 %v1005, %v1761
    %v1763 = vpop.f32.mrb[0].mxu0
    %v1764 = vadd.f32 %v1007, %v1763
    %1765 = vmatprep.mubr.bf16.mxu0 0
    %1766 = vmatmul.mubr.bf16.gmra.mrb[0].mxu0 %v1336
    %v1767 = vpop.f32.mrb[0].mxu0
    %v1768 = vadd.f32 %v1011, %v1767
    %v1769 = vpop.f32.mrb[0].mxu0
    %v1770 = vadd.f32 %v1013, %v1769
    %v1771 = vpop.f32.mrb[0].mxu0
    %v1772 = vadd.f32 %v1015, %v1771
    %v1773 = vpop.f32.mrb[0].mxu0
    %v1774 = vadd.f32 %v1017, %v1773
    %1775 = vdwg.mxu0
    %1776 = vmatprep.subr.bf16.mxu0 0
    %1777 = vmatpush1.bf16.xpose.msra.mxu0 %v1435
    %1778 = vmatprep.subr.bf16.mxu0 0
    %1779 = vmatpush1.bf16.xpose.msra.mxu0 %v1438
    %1780 = vmatprep.subr.bf16.mxu0 0
    %1781 = vmatpush1.bf16.xpose.msra.mxu0 %v1441
    %1782 = vmatprep.subr.bf16.mxu0 0
    %1783 = vmatpush1.bf16.xpose.msra.mxu0 %v1444
    %1784 = vmatprep.subr.bf16.mxu0 0
    %1785 = vmatpush1.bf16.xpose.msra.mxu0 %v1447
    %1786 = vmatprep.subr.bf16.mxu0 0
    %1787 = vmatpush1.bf16.xpose.msra.mxu0 %v1450
    %1788 = vmatprep.subr.bf16.mxu0 0
    %1789 = vmatpush1.bf16.xpose.msra.mxu0 %v1453
    %1790 = vmatprep.subr.bf16.mxu0 0
    %1791 = vmatpush1.bf16.xpose.msra.mxu0 %v1456
    %1792 = vmatprep.subr.bf16.mxu0 0
    %1793 = vmatpush1.bf16.xpose.msra.mxu0 %v1459
    %1794 = vmatprep.subr.bf16.mxu0 0
    %1795 = vmatpush1.bf16.xpose.msra.mxu0 %v1462
    %1796 = vmatprep.subr.bf16.mxu0 0
    %1797 = vmatpush1.bf16.xpose.msra.mxu0 %v1465
    %1798 = vmatprep.subr.bf16.mxu0 0
    %1799 = vmatpush1.bf16.xpose.msra.mxu0 %v1468
    %1800 = vmatprep.subr.bf16.mxu0 0
    %1801 = vmatpush1.bf16.xpose.msra.mxu0 %v1471
    %1802 = vmatprep.subr.bf16.mxu0 0
    %1803 = vmatpush1.bf16.xpose.msra.mxu0 %v1474
    %1804 = vmatprep.subr.bf16.mxu0 0
    %1805 = vmatpush1.bf16.xpose.msra.mxu0 %v1477
    %1806 = vmatprep.subr.bf16.mxu0 0
    %1807 = vmatpush1.bf16.xpose.msra.mxu0 %v1480
    %1808 = vmatprep.mubr.bf16.mxu0 0
    %1809 = vmatmul.mubr.bf16.gmra.mrb[0].mxu0 %v1312
    %v1810 = vpop.f32.mrb[0].mxu0
    %v1811 = vadd.f32 %v1054, %v1810
    %v1812 = vpop.f32.mrb[0].mxu0
    %v1813 = vadd.f32 %v1056, %v1812
    %v1814 = vpop.f32.mrb[0].mxu0
    %v1815 = vadd.f32 %v1058, %v1814
    %v1816 = vpop.f32.mrb[0].mxu0
    %v1817 = vadd.f32 %v1060, %v1816
    %1818 = vmatprep.mubr.bf16.mxu0 0
    %1819 = vmatmul.mubr.bf16.gmra.mrb[0].mxu0 %v1315
    %v1820 = vpop.f32.mrb[0].mxu0
    %v1821 = vadd.f32 %v1064, %v1820
    %v1822 = vpop.f32.mrb[0].mxu0
    %v1823 = vadd.f32 %v1066, %v1822
    %v1824 = vpop.f32.mrb[0].mxu0
    %v1825 = vadd.f32 %v1068, %v1824
    %v1826 = vpop.f32.mrb[0].mxu0
    %v1827 = vadd.f32 %v1070, %v1826
    %1828 = vmatprep.mubr.bf16.mxu0 0
    %1829 = vmatmul.mubr.bf16.gmra.mrb[0].mxu0 %v1318
    %v1830 = vpop.f32.mrb[0].mxu0
    %v1831 = vadd.f32 %v1074, %v1830
    %v1832 = vpop.f32.mrb[0].mxu0
    %v1833 = vadd.f32 %v1076, %v1832
    %v1834 = vpop.f32.mrb[0].mxu0
    %v1835 = vadd.f32 %v1078, %v1834
    %v1836 = vpop.f32.mrb[0].mxu0
    %v1837 = vadd.f32 %v1080, %v1836
    %1838 = vmatprep.mubr.bf16.mxu0 0
    %1839 = vmatmul.mubr.bf16.gmra.mrb[0].mxu0 %v1321
    %v1840 = vpop.f32.mrb[0].mxu0
    %v1841 = vadd.f32 %v1084, %v1840
    %v1842 = vpop.f32.mrb[0].mxu0
    %v1843 = vadd.f32 %v1086, %v1842
    %v1844 = vpop.f32.mrb[0].mxu0
    %v1845 = vadd.f32 %v1088, %v1844
    %v1846 = vpop.f32.mrb[0].mxu0
    %v1847 = vadd.f32 %v1090, %v1846
    %1848 = vmatprep.mubr.bf16.mxu0 0
    %1849 = vmatmul.mubr.bf16.gmra.mrb[0].mxu0 %v1324
    %v1850 = vpop.f32.mrb[0].mxu0
    %v1851 = vadd.f32 %v1094, %v1850
    %v1852 = vpop.f32.mrb[0].mxu0
    %v1853 = vadd.f32 %v1096, %v1852
    %v1854 = vpop.f32.mrb[0].mxu0
    %v1855 = vadd.f32 %v1098, %v1854
    %v1856 = vpop.f32.mrb[0].mxu0
    %v1857 = vadd.f32 %v1100, %v1856
    %1858 = vmatprep.mubr.bf16.mxu0 0
    %1859 = vmatmul.mubr.bf16.gmra.mrb[0].mxu0 %v1327
    %v1860 = vpop.f32.mrb[0].mxu0
    %v1861 = vadd.f32 %v1104, %v1860
    %v1862 = vpop.f32.mrb[0].mxu0
    %v1863 = vadd.f32 %v1106, %v1862
    %v1864 = vpop.f32.mrb[0].mxu0
    %v1865 = vadd.f32 %v1108, %v1864
    %v1866 = vpop.f32.mrb[0].mxu0
    %v1867 = vadd.f32 %v1110, %v1866
    %1868 = vmatprep.mubr.bf16.mxu0 0
    %1869 = vmatmul.mubr.bf16.gmra.mrb[0].mxu0 %v1330
    %v1870 = vpop.f32.mrb[0].mxu0
    %v1871 = vadd.f32 %v1114, %v1870
    %v1872 = vpop.f32.mrb[0].mxu0
    %v1873 = vadd.f32 %v1116, %v1872
    %v1874 = vpop.f32.mrb[0].mxu0
    %v1875 = vadd.f32 %v1118, %v1874
    %v1876 = vpop.f32.mrb[0].mxu0
    %v1877 = vadd.f32 %v1120, %v1876
    %1878 = vmatprep.mubr.bf16.mxu0 0
    %1879 = vmatmul.mubr.bf16.gmra.mrb[0].mxu0 %v1333
    %v1880 = vpop.f32.mrb[0].mxu0
    %v1881 = vadd.f32 %v1124, %v1880
    %v1882 = vpop.f32.mrb[0].mxu0
    %v1883 = vadd.f32 %v1126, %v1882
    %v1884 = vpop.f32.mrb[0].mxu0
    %v1885 = vadd.f32 %v1128, %v1884
    %v1886 = vpop.f32.mrb[0].mxu0
    %v1887 = vadd.f32 %v1130, %v1886
    %1888 = vmatprep.mubr.bf16.mxu0 0
    %1889 = vmatmul.mubr.bf16.gmra.mrb[0].mxu0 %v1336
    %v1890 = vpop.f32.mrb[0].mxu0
    %v1891 = vadd.f32 %v1134, %v1890
    %v1892 = vpop.f32.mrb[0].mxu0
    %v1893 = vadd.f32 %v1136, %v1892
    %v1894 = vpop.f32.mrb[0].mxu0
    %v1895 = vadd.f32 %v1138, %v1894
    %v1896 = vpop.f32.mrb[0].mxu0
    %v1897 = vadd.f32 %v1140, %v1896
    %1898 = vdwg.mxu0
    %1899 = vmatprep.subr.bf16.mxu0 0
    %1900 = vmatpush1.bf16.xpose.msra.mxu0 %v1483
    %1901 = vmatprep.subr.bf16.mxu0 0
    %1902 = vmatpush1.bf16.xpose.msra.mxu0 %v1486
    %1903 = vmatprep.subr.bf16.mxu0 0
    %1904 = vmatpush1.bf16.xpose.msra.mxu0 %v1489
    %1905 = vmatprep.subr.bf16.mxu0 0
    %1906 = vmatpush1.bf16.xpose.msra.mxu0 %v1492
    %1907 = vmatprep.subr.bf16.mxu0 0
    %1908 = vmatpush1.bf16.xpose.msra.mxu0 %v1495
    %1909 = vmatprep.subr.bf16.mxu0 0
    %1910 = vmatpush1.bf16.xpose.msra.mxu0 %v1498
    %1911 = vmatprep.subr.bf16.mxu0 0
    %1912 = vmatpush1.bf16.xpose.msra.mxu0 %v1501
    %1913 = vmatprep.subr.bf16.mxu0 0
    %1914 = vmatpush1.bf16.xpose.msra.mxu0 %v1504
    %1915 = vmatprep.subr.bf16.mxu0 0
    %1916 = vmatpush1.bf16.xpose.msra.mxu0 %v1507
    %1917 = vmatprep.subr.bf16.mxu0 0
    %1918 = vmatpush1.bf16.xpose.msra.mxu0 %v1510
    %1919 = vmatprep.subr.bf16.mxu0 0
    %1920 = vmatpush1.bf16.xpose.msra.mxu0 %v1513
    %1921 = vmatprep.subr.bf16.mxu0 0
    %1922 = vmatpush1.bf16.xpose.msra.mxu0 %v1516
    %1923 = vmatprep.subr.bf16.mxu0 0
    %1924 = vmatpush1.bf16.xpose.msra.mxu0 %v1519
    %1925 = vmatprep.subr.bf16.mxu0 0
    %1926 = vmatpush1.bf16.xpose.msra.mxu0 %v1522
    %1927 = vmatprep.subr.bf16.mxu0 0
    %1928 = vmatpush1.bf16.xpose.msra.mxu0 %v1525
    %1929 = vmatprep.subr.bf16.mxu0 0
    %1930 = vmatpush1.bf16.xpose.msra.mxu0 %v1528
    %1931 = vmatprep.mubr.bf16.mxu0 0
    %1932 = vmatmul.mubr.bf16.gmra.mrb[0].mxu0 %v1312
    %v1933 = vpop.f32.mrb[0].mxu0
    %v1934 = vadd.f32 %v1177, %v1933
    %v1935 = vpop.f32.mrb[0].mxu0
    %v1936 = vadd.f32 %v1179, %v1935
    %v1937 = vpop.f32.mrb[0].mxu0
    %v1938 = vadd.f32 %v1181, %v1937
    %v1939 = vpop.f32.mrb[0].mxu0
    %v1940 = vadd.f32 %v1183, %v1939
    %1941 = vmatprep.mubr.bf16.mxu0 0
    %1942 = vmatmul.mubr.bf16.gmra.mrb[0].mxu0 %v1315
    %v1943 = vpop.f32.mrb[0].mxu0
    %v1944 = vadd.f32 %v1187, %v1943
    %v1945 = vpop.f32.mrb[0].mxu0
    %v1946 = vadd.f32 %v1189, %v1945
    %v1947 = vpop.f32.mrb[0].mxu0
    %v1948 = vadd.f32 %v1191, %v1947
    %v1949 = vpop.f32.mrb[0].mxu0
    %v1950 = vadd.f32 %v1193, %v1949
    %1951 = vmatprep.mubr.bf16.mxu0 0
    %1952 = vmatmul.mubr.bf16.gmra.mrb[0].mxu0 %v1318
    %v1953 = vpop.f32.mrb[0].mxu0
    %v1954 = vadd.f32 %v1197, %v1953
    %v1955 = vpop.f32.mrb[0].mxu0
    %v1956 = vadd.f32 %v1199, %v1955
    %v1957 = vpop.f32.mrb[0].mxu0
    %v1958 = vadd.f32 %v1201, %v1957
    %v1959 = vpop.f32.mrb[0].mxu0
    %v1960 = vadd.f32 %v1203, %v1959
    %1961 = vmatprep.mubr.bf16.mxu0 0
    %1962 = vmatmul.mubr.bf16.gmra.mrb[0].mxu0 %v1321
    %v1963 = vpop.f32.mrb[0].mxu0
    %v1964 = vadd.f32 %v1207, %v1963
    %v1965 = vpop.f32.mrb[0].mxu0
    %v1966 = vadd.f32 %v1209, %v1965
    %v1967 = vpop.f32.mrb[0].mxu0
    %v1968 = vadd.f32 %v1211, %v1967
    %v1969 = vpop.f32.mrb[0].mxu0
    %v1970 = vadd.f32 %v1213, %v1969
    %1971 = vmatprep.mubr.bf16.mxu0 0
    %1972 = vmatmul.mubr.bf16.gmra.mrb[0].mxu0 %v1324
    %v1973 = vpop.f32.mrb[0].mxu0
    %v1974 = vadd.f32 %v1217, %v1973
    %v1975 = vpop.f32.mrb[0].mxu0
    %v1976 = vadd.f32 %v1219, %v1975
    %v1977 = vpop.f32.mrb[0].mxu0
    %v1978 = vadd.f32 %v1221, %v1977
    %v1979 = vpop.f32.mrb[0].mxu0
    %v1980 = vadd.f32 %v1223, %v1979
    %1981 = vmatprep.mubr.bf16.mxu0 0
    %1982 = vmatmul.mubr.bf16.gmra.mrb[0].mxu0 %v1327
    %v1983 = vpop.f32.mrb[0].mxu0
    %v1984 = vadd.f32 %v1227, %v1983
    %v1985 = vpop.f32.mrb[0].mxu0
    %v1986 = vadd.f32 %v1229, %v1985
    %v1987 = vpop.f32.mrb[0].mxu0
    %v1988 = vadd.f32 %v1231, %v1987
    %v1989 = vpop.f32.mrb[0].mxu0
    %v1990 = vadd.f32 %v1233, %v1989
    %1991 = vmatprep.mubr.bf16.mxu0 0
    %1992 = vmatmul.mubr.bf16.gmra.mrb[0].mxu0 %v1330
    %v1993 = vpop.f32.mrb[0].mxu0
    %v1994 = vadd.f32 %v1237, %v1993
    %v1995 = vpop.f32.mrb[0].mxu0
    %v1996 = vadd.f32 %v1239, %v1995
    %v1997 = vpop.f32.mrb[0].mxu0
    %v1998 = vadd.f32 %v1241, %v1997
    %v1999 = vpop.f32.mrb[0].mxu0
    %v2000 = vadd.f32 %v1243, %v1999
    %2001 = vmatprep.mubr.bf16.mxu0 0
    %2002 = vmatmul.mubr.bf16.gmra.mrb[0].mxu0 %v1333
    %v2003 = vpop.f32.mrb[0].mxu0
    %v2004 = vadd.f32 %v1247, %v2003
    %v2005 = vpop.f32.mrb[0].mxu0
    %v2006 = vadd.f32 %v1249, %v2005
    %v2007 = vpop.f32.mrb[0].mxu0
    %v2008 = vadd.f32 %v1251, %v2007
    %v2009 = vpop.f32.mrb[0].mxu0
    %v2010 = vadd.f32 %v1253, %v2009
    %2011 = vmatprep.mubr.bf16.mxu0 0
    %2012 = vmatmul.mubr.bf16.gmra.mrb[0].mxu0 %v1336
    %v2013 = vpop.f32.mrb[0].mxu0
    %v2014 = vadd.f32 %v1257, %v2013
    %v2015 = vpop.f32.mrb[0].mxu0
    %v2016 = vadd.f32 %v1259, %v2015
    %v2017 = vpop.f32.mrb[0].mxu0
    %v2018 = vadd.f32 %v1261, %v2017
    %v2019 = vpop.f32.mrb[0].mxu0
    %v2020 = vadd.f32 %v1263, %v2019
    %2021 = vdwg.mxu0
    %v2022 = vld [vmem:[#allocation8] sm:$0xff]
    %v2023 = vld [vmem:[#allocation8 + $0x8] sm:$0xff]
    %v2024 = vld [vmem:[#allocation8 + $0x10] sm:$0xff]
    %v2025 = vld [vmem:[#allocation8 + $0x18] sm:$0xff]
    %v2026 = vld [vmem:[#allocation8 + $0x20] sm:$0xff]
    %v2027 = vld [vmem:[#allocation8 + $0x28] sm:$0xff]
    %v2028 = vld [vmem:[#allocation8 + $0x30] sm:$0xff]
    %v2029 = vld [vmem:[#allocation8 + $0x38] sm:$0xff]
    %v2030 = vld [vmem:[#allocation8 + $0x40] sm:$0xff]
    %v2031 = vld [vmem:[#allocation8 + $0x48] sm:$0xff]
    %v2032 = vld [vmem:[#allocation8 + $0x50] sm:$0xff]
    %v2033 = vld [vmem:[#allocation8 + $0x58] sm:$0xff]
    %v2034 = vld [vmem:[#allocation8 + $0x60] sm:$0xff]
    %v2035 = vld [vmem:[#allocation8 + $0x68] sm:$0xff]
    %v2036 = vld [vmem:[#allocation8 + $0x70] sm:$0xff]
    %v2037 = vld [vmem:[#allocation8 + $0x78] sm:$0xff]
    %v2038 = vld [vmem:[#allocation8 + $0x80] sm:$0xff]
    %v2039 = vld [vmem:[#allocation8 + $0x88] sm:$0xff]
    %2041 = vset.pattern.permute.xlu0 0
    %2042 = vperm.xlu0 %2041, %v2022
    %v2043 = vpop.permute.xlu0 %2042
    %2046 = vset.pattern.permute.xlu0 0
    %2047 = vperm.xlu0 %2046, %v2023
    %v2048 = vpop.permute.xlu0 %2047
    %2051 = vset.pattern.permute.xlu0 0
    %2052 = vperm.xlu0 %2051, %v2024
    %v2053 = vpop.permute.xlu0 %2052
    %2056 = vset.pattern.permute.xlu0 0
    %2057 = vperm.xlu0 %2056, %v2025
    %v2058 = vpop.permute.xlu0 %2057
    %2061 = vset.pattern.permute.xlu0 0
    %2062 = vperm.xlu0 %2061, %v2026
    %v2063 = vpop.permute.xlu0 %2062
    %2066 = vset.pattern.permute.xlu0 0
    %2067 = vperm.xlu0 %2066, %v2027
    %v2068 = vpop.permute.xlu0 %2067
    %2071 = vset.pattern.permute.xlu0 0
    %2072 = vperm.xlu0 %2071, %v2028
    %v2073 = vpop.permute.xlu0 %2072
    %2076 = vset.pattern.permute.xlu0 0
    %2077 = vperm.xlu0 %2076, %v2029
    %v2078 = vpop.permute.xlu0 %2077
    %2081 = vset.pattern.permute.xlu0 0
    %2082 = vperm.xlu0 %2081, %v2030
    %v2083 = vpop.permute.xlu0 %2082
    %2086 = vset.pattern.permute.xlu0 0
    %2087 = vperm.xlu0 %2086, %v2031
    %v2088 = vpop.permute.xlu0 %2087
    %2091 = vset.pattern.permute.xlu0 0
    %2092 = vperm.xlu0 %2091, %v2032
    %v2093 = vpop.permute.xlu0 %2092
    %2096 = vset.pattern.permute.xlu0 0
    %2097 = vperm.xlu0 %2096, %v2033
    %v2098 = vpop.permute.xlu0 %2097
    %2101 = vset.pattern.permute.xlu0 0
    %2102 = vperm.xlu0 %2101, %v2034
    %v2103 = vpop.permute.xlu0 %2102
    %2106 = vset.pattern.permute.xlu0 0
    %2107 = vperm.xlu0 %2106, %v2035
    %v2108 = vpop.permute.xlu0 %2107
    %2111 = vset.pattern.permute.xlu0 0
    %2112 = vperm.xlu0 %2111, %v2036
    %v2113 = vpop.permute.xlu0 %2112
    %2116 = vset.pattern.permute.xlu0 0
    %2117 = vperm.xlu0 %2116, %v2037
    %v2118 = vpop.permute.xlu0 %2117
    %2121 = vset.pattern.permute.xlu0 0
    %2122 = vperm.xlu0 %2121, %v2038
    %v2123 = vpop.permute.xlu0 %2122
    %2126 = vset.pattern.permute.xlu0 0
    %2127 = vperm.xlu0 %2126, %v2039
    %v2128 = vpop.permute.xlu0 %2127
    %v2130 = vadd.f32 %v1565, %v2043
    %v2131 = vadd.f32 %v1567, %v2043
    %v2132 = vadd.f32 %v1688, %v2043
    %v2133 = vadd.f32 %v1690, %v2043
    %v2134 = vadd.f32 %v1811, %v2043
    %v2135 = vadd.f32 %v1813, %v2043
    %v2136 = vadd.f32 %v1934, %v2043
    %v2137 = vadd.f32 %v1936, %v2043
    %v2138 = vadd.f32 %v1569, %v2048
    %v2139 = vadd.f32 %v1571, %v2048
    %v2140 = vadd.f32 %v1692, %v2048
    %v2141 = vadd.f32 %v1694, %v2048
    %v2142 = vadd.f32 %v1815, %v2048
    %v2143 = vadd.f32 %v1817, %v2048
    %v2144 = vadd.f32 %v1938, %v2048
    %v2145 = vadd.f32 %v1940, %v2048
    %v2146 = vadd.f32 %v1575, %v2053
    %v2147 = vadd.f32 %v1577, %v2053
    %v2148 = vadd.f32 %v1698, %v2053
    %v2149 = vadd.f32 %v1700, %v2053
    %v2150 = vadd.f32 %v1821, %v2053
    %v2151 = vadd.f32 %v1823, %v2053
    %v2152 = vadd.f32 %v1944, %v2053
    %v2153 = vadd.f32 %v1946, %v2053
    %v2154 = vadd.f32 %v1579, %v2058
    %v2155 = vadd.f32 %v1581, %v2058
    %v2156 = vadd.f32 %v1702, %v2058
    %v2157 = vadd.f32 %v1704, %v2058
    %v2158 = vadd.f32 %v1825, %v2058
    %v2159 = vadd.f32 %v1827, %v2058
    %v2160 = vadd.f32 %v1948, %v2058
    %v2161 = vadd.f32 %v1950, %v2058
    %v2162 = vadd.f32 %v1585, %v2063
    %v2163 = vadd.f32 %v1587, %v2063
    %v2164 = vadd.f32 %v1708, %v2063
    %v2165 = vadd.f32 %v1710, %v2063
    %v2166 = vadd.f32 %v1831, %v2063
    %v2167 = vadd.f32 %v1833, %v2063
    %v2168 = vadd.f32 %v1954, %v2063
    %v2169 = vadd.f32 %v1956, %v2063
    %v2170 = vadd.f32 %v1589, %v2068
    %v2171 = vadd.f32 %v1591, %v2068
    %v2172 = vadd.f32 %v1712, %v2068
    %v2173 = vadd.f32 %v1714, %v2068
    %v2174 = vadd.f32 %v1835, %v2068
    %v2175 = vadd.f32 %v1837, %v2068
    %v2176 = vadd.f32 %v1958, %v2068
    %v2177 = vadd.f32 %v1960, %v2068
    %v2178 = vadd.f32 %v1595, %v2073
    %v2179 = vadd.f32 %v1597, %v2073
    %v2180 = vadd.f32 %v1718, %v2073
    %v2181 = vadd.f32 %v1720, %v2073
    %v2182 = vadd.f32 %v1841, %v2073
    %v2183 = vadd.f32 %v1843, %v2073
    %v2184 = vadd.f32 %v1964, %v2073
    %v2185 = vadd.f32 %v1966, %v2073
    %v2186 = vadd.f32 %v1599, %v2078
    %v2187 = vadd.f32 %v1601, %v2078
    %v2188 = vadd.f32 %v1722, %v2078
    %v2189 = vadd.f32 %v1724, %v2078
    %v2190 = vadd.f32 %v1845, %v2078
    %v2191 = vadd.f32 %v1847, %v2078
    %v2192 = vadd.f32 %v1968, %v2078
    %v2193 = vadd.f32 %v1970, %v2078
    %v2194 = vadd.f32 %v1605, %v2083
    %v2195 = vadd.f32 %v1607, %v2083
    %v2196 = vadd.f32 %v1728, %v2083
    %v2197 = vadd.f32 %v1730, %v2083
    %v2198 = vadd.f32 %v1851, %v2083
    %v2199 = vadd.f32 %v1853, %v2083
    %v2200 = vadd.f32 %v1974, %v2083
    %v2201 = vadd.f32 %v1976, %v2083
    %v2202 = vadd.f32 %v1609, %v2088
    %v2203 = vadd.f32 %v1611, %v2088
    %v2204 = vadd.f32 %v1732, %v2088
    %v2205 = vadd.f32 %v1734, %v2088
    %v2206 = vadd.f32 %v1855, %v2088
    %v2207 = vadd.f32 %v1857, %v2088
    %v2208 = vadd.f32 %v1978, %v2088
    %v2209 = vadd.f32 %v1980, %v2088
    %v2210 = vadd.f32 %v1615, %v2093
    %v2211 = vadd.f32 %v1617, %v2093
    %v2212 = vadd.f32 %v1738, %v2093
    %v2213 = vadd.f32 %v1740, %v2093
    %v2214 = vadd.f32 %v1861, %v2093
    %v2215 = vadd.f32 %v1863, %v2093
    %v2216 = vadd.f32 %v1984, %v2093
    %v2217 = vadd.f32 %v1986, %v2093
    %v2218 = vadd.f32 %v1619, %v2098
    %v2219 = vadd.f32 %v1621, %v2098
    %v2220 = vadd.f32 %v1742, %v2098
    %v2221 = vadd.f32 %v1744, %v2098
    %v2222 = vadd.f32 %v1865, %v2098
    %v2223 = vadd.f32 %v1867, %v2098
    %v2224 = vadd.f32 %v1988, %v2098
    %v2225 = vadd.f32 %v1990, %v2098
    %v2226 = vadd.f32 %v1625, %v2103
    %v2227 = vadd.f32 %v1627, %v2103
    %v2228 = vadd.f32 %v1748, %v2103
    %v2229 = vadd.f32 %v1750, %v2103
    %v2230 = vadd.f32 %v1871, %v2103
    %v2231 = vadd.f32 %v1873, %v2103
    %v2232 = vadd.f32 %v1994, %v2103
    %v2233 = vadd.f32 %v1996, %v2103
    %v2234 = vadd.f32 %v1629, %v2108
    %v2235 = vadd.f32 %v1631, %v2108
    %v2236 = vadd.f32 %v1752, %v2108
    %v2237 = vadd.f32 %v1754, %v2108
    %v2238 = vadd.f32 %v1875, %v2108
    %v2239 = vadd.f32 %v1877, %v2108
    %v2240 = vadd.f32 %v1998, %v2108
    %v2241 = vadd.f32 %v2000, %v2108
    %v2242 = vadd.f32 %v1635, %v2113
    %v2243 = vadd.f32 %v1637, %v2113
    %v2244 = vadd.f32 %v1758, %v2113
    %v2245 = vadd.f32 %v1760, %v2113
    %v2246 = vadd.f32 %v1881, %v2113
    %v2247 = vadd.f32 %v1883, %v2113
    %v2248 = vadd.f32 %v2004, %v2113
    %v2249 = vadd.f32 %v2006, %v2113
    %v2250 = vadd.f32 %v1639, %v2118
    %v2251 = vadd.f32 %v1641, %v2118
    %v2252 = vadd.f32 %v1762, %v2118
    %v2253 = vadd.f32 %v1764, %v2118
    %v2254 = vadd.f32 %v1885, %v2118
    %v2255 = vadd.f32 %v1887, %v2118
    %v2256 = vadd.f32 %v2008, %v2118
    %v2257 = vadd.f32 %v2010, %v2118
    %v2258 = vadd.f32 %v1645, %v2123
    %v2259 = vadd.f32 %v1647, %v2123
    %v2260 = vadd.f32 %v1768, %v2123
    %v2261 = vadd.f32 %v1770, %v2123
    %v2262 = vadd.f32 %v1891, %v2123
    %v2263 = vadd.f32 %v1893, %v2123
    %v2264 = vadd.f32 %v2014, %v2123
    %v2265 = vadd.f32 %v2016, %v2123
    %v2266 = vadd.f32 %v1649, %v2128
    %v2267 = vadd.f32 %v1651, %v2128
    %v2268 = vadd.f32 %v1772, %v2128
    %v2269 = vadd.f32 %v1774, %v2128
    %v2270 = vadd.f32 %v1895, %v2128
    %v2271 = vadd.f32 %v1897, %v2128
    %v2272 = vadd.f32 %v2018, %v2128
    %v2273 = vadd.f32 %v2020, %v2128
    %v2274 = vmax.f32 %v2130, 0.0
    %v2275 = vmax.f32 %v2131, 0.0
    %v2276 = vmax.f32 %v2132, 0.0
    %v2277 = vmax.f32 %v2133, 0.0
    %v2278 = vmax.f32 %v2134, 0.0
    %v2279 = vmax.f32 %v2135, 0.0
    %v2280 = vmax.f32 %v2136, 0.0
    %v2281 = vmax.f32 %v2137, 0.0
    %v2282 = vmax.f32 %v2138, 0.0
    %v2283 = vmax.f32 %v2139, 0.0
    %v2284 = vmax.f32 %v2140, 0.0
    %v2285 = vmax.f32 %v2141, 0.0
    %v2286 = vmax.f32 %v2142, 0.0
    %v2287 = vmax.f32 %v2143, 0.0
    %v2288 = vmax.f32 %v2144, 0.0
    %v2289 = vmax.f32 %v2145, 0.0
    %v2290 = vmax.f32 %v2146, 0.0
    %v2291 = vmax.f32 %v2147, 0.0
    %v2292 = vmax.f32 %v2148, 0.0
    %v2293 = vmax.f32 %v2149, 0.0
    %v2294 = vmax.f32 %v2150, 0.0
    %v2295 = vmax.f32 %v2151, 0.0
    %v2296 = vmax.f32 %v2152, 0.0
    %v2297 = vmax.f32 %v2153, 0.0
    %v2298 = vmax.f32 %v2154, 0.0
    %v2299 = vmax.f32 %v2155, 0.0
    %v2300 = vmax.f32 %v2156, 0.0
    %v2301 = vmax.f32 %v2157, 0.0
    %v2302 = vmax.f32 %v2158, 0.0
    %v2303 = vmax.f32 %v2159, 0.0
    %v2304 = vmax.f32 %v2160, 0.0
    %v2305 = vmax.f32 %v2161, 0.0
    %v2306 = vmax.f32 %v2162, 0.0
    %v2307 = vmax.f32 %v2163, 0.0
    %v2308 = vmax.f32 %v2164, 0.0
    %v2309 = vmax.f32 %v2165, 0.0
    %v2310 = vmax.f32 %v2166, 0.0
    %v2311 = vmax.f32 %v2167, 0.0
    %v2312 = vmax.f32 %v2168, 0.0
    %v2313 = vmax.f32 %v2169, 0.0
    %v2314 = vmax.f32 %v2170, 0.0
    %v2315 = vmax.f32 %v2171, 0.0
    %v2316 = vmax.f32 %v2172, 0.0
    %v2317 = vmax.f32 %v2173, 0.0
    %v2318 = vmax.f32 %v2174, 0.0
    %v2319 = vmax.f32 %v2175, 0.0
    %v2320 = vmax.f32 %v2176, 0.0
    %v2321 = vmax.f32 %v2177, 0.0
    %v2322 = vmax.f32 %v2178, 0.0
    %v2323 = vmax.f32 %v2179, 0.0
    %v2324 = vmax.f32 %v2180, 0.0
    %v2325 = vmax.f32 %v2181, 0.0
    %v2326 = vmax.f32 %v2182, 0.0
    %v2327 = vmax.f32 %v2183, 0.0
    %v2328 = vmax.f32 %v2184, 0.0
    %v2329 = vmax.f32 %v2185, 0.0
    %v2330 = vmax.f32 %v2186, 0.0
    %v2331 = vmax.f32 %v2187, 0.0
    %v2332 = vmax.f32 %v2188, 0.0
    %v2333 = vmax.f32 %v2189, 0.0
    %v2334 = vmax.f32 %v2190, 0.0
    %v2335 = vmax.f32 %v2191, 0.0
    %v2336 = vmax.f32 %v2192, 0.0
    %v2337 = vmax.f32 %v2193, 0.0
    %v2338 = vmax.f32 %v2194, 0.0
    %v2339 = vmax.f32 %v2195, 0.0
    %v2340 = vmax.f32 %v2196, 0.0
    %v2341 = vmax.f32 %v2197, 0.0
    %v2342 = vmax.f32 %v2198, 0.0
    %v2343 = vmax.f32 %v2199, 0.0
    %v2344 = vmax.f32 %v2200, 0.0
    %v2345 = vmax.f32 %v2201, 0.0
    %v2346 = vmax.f32 %v2202, 0.0
    %v2347 = vmax.f32 %v2203, 0.0
    %v2348 = vmax.f32 %v2204, 0.0
    %v2349 = vmax.f32 %v2205, 0.0
    %v2350 = vmax.f32 %v2206, 0.0
    %v2351 = vmax.f32 %v2207, 0.0
    %v2352 = vmax.f32 %v2208, 0.0
    %v2353 = vmax.f32 %v2209, 0.0
    %v2354 = vmax.f32 %v2210, 0.0
    %v2355 = vmax.f32 %v2211, 0.0
    %v2356 = vmax.f32 %v2212, 0.0
    %v2357 = vmax.f32 %v2213, 0.0
    %v2358 = vmax.f32 %v2214, 0.0
    %v2359 = vmax.f32 %v2215, 0.0
    %v2360 = vmax.f32 %v2216, 0.0
    %v2361 = vmax.f32 %v2217, 0.0
    %v2362 = vmax.f32 %v2218, 0.0
    %v2363 = vmax.f32 %v2219, 0.0
    %v2364 = vmax.f32 %v2220, 0.0
    %v2365 = vmax.f32 %v2221, 0.0
    %v2366 = vmax.f32 %v2222, 0.0
    %v2367 = vmax.f32 %v2223, 0.0
    %v2368 = vmax.f32 %v2224, 0.0
    %v2369 = vmax.f32 %v2225, 0.0
    %v2370 = vmax.f32 %v2226, 0.0
    %v2371 = vmax.f32 %v2227, 0.0
    %v2372 = vmax.f32 %v2228, 0.0
    %v2373 = vmax.f32 %v2229, 0.0
    %v2374 = vmax.f32 %v2230, 0.0
    %v2375 = vmax.f32 %v2231, 0.0
    %v2376 = vmax.f32 %v2232, 0.0
    %v2377 = vmax.f32 %v2233, 0.0
    %v2378 = vmax.f32 %v2234, 0.0
    %v2379 = vmax.f32 %v2235, 0.0
    %v2380 = vmax.f32 %v2236, 0.0
    %v2381 = vmax.f32 %v2237, 0.0
    %v2382 = vmax.f32 %v2238, 0.0
    %v2383 = vmax.f32 %v2239, 0.0
    %v2384 = vmax.f32 %v2240, 0.0
    %v2385 = vmax.f32 %v2241, 0.0
    %v2386 = vmax.f32 %v2242, 0.0
    %v2387 = vmax.f32 %v2243, 0.0
    %v2388 = vmax.f32 %v2244, 0.0
    %v2389 = vmax.f32 %v2245, 0.0
    %v2390 = vmax.f32 %v2246, 0.0
    %v2391 = vmax.f32 %v2247, 0.0
    %v2392 = vmax.f32 %v2248, 0.0
    %v2393 = vmax.f32 %v2249, 0.0
    %v2394 = vmax.f32 %v2250, 0.0
    %v2395 = vmax.f32 %v2251, 0.0
    %v2396 = vmax.f32 %v2252, 0.0
    %v2397 = vmax.f32 %v2253, 0.0
    %v2398 = vmax.f32 %v2254, 0.0
    %v2399 = vmax.f32 %v2255, 0.0
    %v2400 = vmax.f32 %v2256, 0.0
    %v2401 = vmax.f32 %v2257, 0.0
    %v2402 = vmax.f32 %v2258, 0.0
    %v2403 = vmax.f32 %v2259, 0.0
    %v2404 = vmax.f32 %v2260, 0.0
    %v2405 = vmax.f32 %v2261, 0.0
    %v2406 = vmax.f32 %v2262, 0.0
    %v2407 = vmax.f32 %v2263, 0.0
    %v2408 = vmax.f32 %v2264, 0.0
    %v2409 = vmax.f32 %v2265, 0.0
    %v2410 = vmax.f32 %v2266, 0.0
    %v2411 = vmax.f32 %v2267, 0.0
    %v2412 = vmax.f32 %v2268, 0.0
    %v2413 = vmax.f32 %v2269, 0.0
    %v2414 = vmax.f32 %v2270, 0.0
    %v2415 = vmax.f32 %v2271, 0.0
    %v2416 = vmax.f32 %v2272, 0.0
    %v2417 = vmax.f32 %v2273, 0.0
    %v2418 = vpack.c.bf16 %v2282, %v2274
    %v2419 = vpack.c.bf16 %v2283, %v2275
    %v2420 = vpack.c.bf16 %v2284, %v2276
    %v2421 = vpack.c.bf16 %v2285, %v2277
    %v2422 = vpack.c.bf16 %v2286, %v2278
    %v2423 = vpack.c.bf16 %v2287, %v2279
    %v2424 = vpack.c.bf16 %v2288, %v2280
    %v2425 = vpack.c.bf16 %v2289, %v2281
    %v2426 = vpack.c.bf16 %v2298, %v2290
    %v2427 = vpack.c.bf16 %v2299, %v2291
    %v2428 = vpack.c.bf16 %v2300, %v2292
    %v2429 = vpack.c.bf16 %v2301, %v2293
    %v2430 = vpack.c.bf16 %v2302, %v2294
    %v2431 = vpack.c.bf16 %v2303, %v2295
    %v2432 = vpack.c.bf16 %v2304, %v2296
    %v2433 = vpack.c.bf16 %v2305, %v2297
    %v2434 = vpack.c.bf16 %v2314, %v2306
    %v2435 = vpack.c.bf16 %v2315, %v2307
    %v2436 = vpack.c.bf16 %v2316, %v2308
    %v2437 = vpack.c.bf16 %v2317, %v2309
    %v2438 = vpack.c.bf16 %v2318, %v2310
    %v2439 = vpack.c.bf16 %v2319, %v2311
    %v2440 = vpack.c.bf16 %v2320, %v2312
    %v2441 = vpack.c.bf16 %v2321, %v2313
    %v2442 = vpack.c.bf16 %v2330, %v2322
    %v2443 = vpack.c.bf16 %v2331, %v2323
    %v2444 = vpack.c.bf16 %v2332, %v2324
    %v2445 = vpack.c.bf16 %v2333, %v2325
    %v2446 = vpack.c.bf16 %v2334, %v2326
    %v2447 = vpack.c.bf16 %v2335, %v2327
    %v2448 = vpack.c.bf16 %v2336, %v2328
    %v2449 = vpack.c.bf16 %v2337, %v2329
    %v2450 = vpack.c.bf16 %v2346, %v2338
    %v2451 = vpack.c.bf16 %v2347, %v2339
    %v2452 = vpack.c.bf16 %v2348, %v2340
    %v2453 = vpack.c.bf16 %v2349, %v2341
    %v2454 = vpack.c.bf16 %v2350, %v2342
    %v2455 = vpack.c.bf16 %v2351, %v2343
    %v2456 = vpack.c.bf16 %v2352, %v2344
    %v2457 = vpack.c.bf16 %v2353, %v2345
    %v2458 = vpack.c.bf16 %v2362, %v2354
    %v2459 = vpack.c.bf16 %v2363, %v2355
    %v2460 = vpack.c.bf16 %v2364, %v2356
    %v2461 = vpack.c.bf16 %v2365, %v2357
    %v2462 = vpack.c.bf16 %v2366, %v2358
    %v2463 = vpack.c.bf16 %v2367, %v2359
    %v2464 = vpack.c.bf16 %v2368, %v2360
    %v2465 = vpack.c.bf16 %v2369, %v2361
    %v2466 = vpack.c.bf16 %v2378, %v2370
    %v2467 = vpack.c.bf16 %v2379, %v2371
    %v2468 = vpack.c.bf16 %v2380, %v2372
    %v2469 = vpack.c.bf16 %v2381, %v2373
    %v2470 = vpack.c.bf16 %v2382, %v2374
    %v2471 = vpack.c.bf16 %v2383, %v2375
    %v2472 = vpack.c.bf16 %v2384, %v2376
    %v2473 = vpack.c.bf16 %v2385, %v2377
    %v2474 = vpack.c.bf16 %v2394, %v2386
    %v2475 = vpack.c.bf16 %v2395, %v2387
    %v2476 = vpack.c.bf16 %v2396, %v2388
    %v2477 = vpack.c.bf16 %v2397, %v2389
    %v2478 = vpack.c.bf16 %v2398, %v2390
    %v2479 = vpack.c.bf16 %v2399, %v2391
    %v2480 = vpack.c.bf16 %v2400, %v2392
    %v2481 = vpack.c.bf16 %v2401, %v2393
    %v2482 = vpack.c.bf16 %v2410, %v2402
    %v2483 = vpack.c.bf16 %v2411, %v2403
    %v2484 = vpack.c.bf16 %v2412, %v2404
    %v2485 = vpack.c.bf16 %v2413, %v2405
    %v2486 = vpack.c.bf16 %v2414, %v2406
    %v2487 = vpack.c.bf16 %v2415, %v2407
    %v2488 = vpack.c.bf16 %v2416, %v2408
    %v2489 = vpack.c.bf16 %v2417, %v2409
    %v2490 = vld [vmem:[#allocation7 + $0x90] sm:$0xf]
    %v2491 = vld [vmem:[#allocation7 + $0x94] sm:$0xf]
    %v2492 = vld [vmem:[#allocation7 + $0x98] sm:$0xf]
    %v2493 = vld [vmem:[#allocation7 + $0x9c] sm:$0xf]
    %v2494 = vld [vmem:[#allocation8 + $0x90] sm:$0xff]
    %v2495 = vld [vmem:[#allocation8 + $0x98] sm:$0xff]
    %v2496 = vld [vmem:[#allocation8 + $0xa0] sm:$0xff]
    %v2497 = vld [vmem:[#allocation8 + $0xa8] sm:$0xff]
    %2499 = vset.pattern.permute.xlu0 0
    %2500 = vperm.xlu0 %2499, %v2494
    %v2501 = vpop.permute.xlu0 %2500
    %2504 = vset.pattern.permute.xlu0 0
    %2505 = vperm.xlu0 %2504, %v2495
    %v2506 = vpop.permute.xlu0 %2505
    %2509 = vset.pattern.permute.xlu0 0
    %2510 = vperm.xlu0 %2509, %v2496
    %v2511 = vpop.permute.xlu0 %2510
    %2514 = vset.pattern.permute.xlu0 0
    %2515 = vperm.xlu0 %2514, %v2497
    %v2516 = vpop.permute.xlu0 %2515
    %v2522 = vunpack.c.l.b16 %v2490
    %v2523 = vunpack.c.l.b16 %v2491
    %v2524 = vunpack.c.l.b16 %v2492
    %v2525 = vunpack.c.l.b16 %v2493
    %v2526 = vpack.c.b16 %v2523, %v2522
    %v2527 = vpack.c.b16 %v2525, %v2524
    %vm2528 = vcmask 523264
    %v2530 = vsel %vm2528, %v2526, 0
    %v2533 = vsel %vm2528, %v2527, 0
    %2535 = vmatprep.subr.bf16.mxu0 %v2419
    %2536 = vmatpush1.bf16.msra.mxu0 %v2418
    %2537 = vmatprep.subr.bf16.mxu0 %v2427
    %2538 = vmatpush1.bf16.msra.mxu0 %v2426
    %2539 = vmatprep.subr.bf16.mxu0 %v2435
    %2540 = vmatpush1.bf16.msra.mxu0 %v2434
    %2541 = vmatprep.subr.bf16.mxu0 %v2443
    %2542 = vmatpush1.bf16.msra.mxu0 %v2442
    %2543 = vmatprep.subr.bf16.mxu0 0
    %2544 = vmatpush1.bf16.msra.mxu0 0
    %2545 = vmatprep.subr.bf16.mxu0 0
    %2546 = vmatpush1.bf16.msra.mxu0 0
    %2547 = vmatprep.subr.bf16.mxu0 0
    %2548 = vmatpush1.bf16.msra.mxu0 0
    %2549 = vmatprep.subr.bf16.mxu0 0
    %2550 = vmatpush1.bf16.msra.mxu0 0
    %2551 = vmatprep.subr.bf16.mxu0 0
    %2552 = vmatpush1.bf16.msra.mxu0 0
    %2553 = vmatprep.subr.bf16.mxu0 0
    %2554 = vmatpush1.bf16.msra.mxu0 0
    %2555 = vmatprep.subr.bf16.mxu0 0
    %2556 = vmatpush1.bf16.msra.mxu0 0
    %2557 = vmatprep.subr.bf16.mxu0 0
    %2558 = vmatpush1.bf16.msra.mxu0 0
    %2559 = vmatprep.subr.bf16.mxu0 0
    %2560 = vmatpush1.bf16.msra.mxu0 0
    %2561 = vmatprep.subr.bf16.mxu0 0
    %2562 = vmatpush1.bf16.msra.mxu0 0
    %2563 = vmatprep.subr.bf16.mxu0 0
    %2564 = vmatpush1.bf16.msra.mxu0 0
    %2565 = vmatprep.subr.bf16.mxu0 0
    %2566 = vmatpush1.bf16.msra.mxu0 0
    %2567 = vmatprep.mubr.bf16.mxu0 0
    %2568 = vmatmul.mubr.bf16.gmra.mrb[0].mxu0 %v2530
    %v2569 = vpop.f32.mrb[0].mxu0
    %v2570 = vadd.f32 %v2501, %v2569
    %v2571 = vpop.f32.mrb[0].mxu0
    %v2572 = vadd.f32 %v2501, %v2571
    %v2573 = vpop.f32.mrb[0].mxu0
    %v2574 = vadd.f32 %v2506, %v2573
    %v2575 = vpop.f32.mrb[0].mxu0
    %v2576 = vadd.f32 %v2506, %v2575
    %2577 = vmatprep.mubr.bf16.mxu0 0
    %2578 = vmatmul.mubr.bf16.gmra.mrb[0].mxu0 %v2533
    %v2579 = vpop.f32.mrb[0].mxu0
    %v2580 = vadd.f32 %v2511, %v2579
    %v2581 = vpop.f32.mrb[0].mxu0
    %v2582 = vadd.f32 %v2511, %v2581
    %v2583 = vpop.f32.mrb[0].mxu0
    %v2584 = vadd.f32 %v2516, %v2583
    %v2585 = vpop.f32.mrb[0].mxu0
    %v2586 = vadd.f32 %v2516, %v2585
    %2587 = vdwg.mxu0
    %2588 = vmatprep.subr.bf16.mxu0 %v2421
    %2589 = vmatpush1.bf16.msra.mxu0 %v2420
    %2590 = vmatprep.subr.bf16.mxu0 %v2429
    %2591 = vmatpush1.bf16.msra.mxu0 %v2428
    %2592 = vmatprep.subr.bf16.mxu0 %v2437
    %2593 = vmatpush1.bf16.msra.mxu0 %v2436
    %2594 = vmatprep.subr.bf16.mxu0 %v2445
    %2595 = vmatpush1.bf16.msra.mxu0 %v2444
    %2596 = vmatprep.subr.bf16.mxu0 0
    %2597 = vmatpush1.bf16.msra.mxu0 0
    %2598 = vmatprep.subr.bf16.mxu0 0
    %2599 = vmatpush1.bf16.msra.mxu0 0
    %2600 = vmatprep.subr.bf16.mxu0 0
    %2601 = vmatpush1.bf16.msra.mxu0 0
    %2602 = vmatprep.subr.bf16.mxu0 0
    %2603 = vmatpush1.bf16.msra.mxu0 0
    %2604 = vmatprep.subr.bf16.mxu0 0
    %2605 = vmatpush1.bf16.msra.mxu0 0
    %2606 = vmatprep.subr.bf16.mxu0 0
    %2607 = vmatpush1.bf16.msra.mxu0 0
    %2608 = vmatprep.subr.bf16.mxu0 0
    %2609 = vmatpush1.bf16.msra.mxu0 0
    %2610 = vmatprep.subr.bf16.mxu0 0
    %2611 = vmatpush1.bf16.msra.mxu0 0
    %2612 = vmatprep.subr.bf16.mxu0 0
    %2613 = vmatpush1.bf16.msra.mxu0 0
    %2614 = vmatprep.subr.bf16.mxu0 0
    %2615 = vmatpush1.bf16.msra.mxu0 0
    %2616 = vmatprep.subr.bf16.mxu0 0
    %2617 = vmatpush1.bf16.msra.mxu0 0
    %2618 = vmatprep.subr.bf16.mxu0 0
    %2619 = vmatpush1.bf16.msra.mxu0 0
    %2620 = vmatprep.mubr.bf16.mxu0 0
    %2621 = vmatmul.mubr.bf16.gmra.mrb[0].mxu0 %v2530
    %v2622 = vpop.f32.mrb[0].mxu0
    %v2623 = vadd.f32 %v2501, %v2622
    %v2624 = vpop.f32.mrb[0].mxu0
    %v2625 = vadd.f32 %v2501, %v2624
    %v2626 = vpop.f32.mrb[0].mxu0
    %v2627 = vadd.f32 %v2506, %v2626
    %v2628 = vpop.f32.mrb[0].mxu0
    %v2629 = vadd.f32 %v2506, %v2628
    %2630 = vmatprep.mubr.bf16.mxu0 0
    %2631 = vmatmul.mubr.bf16.gmra.mrb[0].mxu0 %v2533
    %v2632 = vpop.f32.mrb[0].mxu0
    %v2633 = vadd.f32 %v2511, %v2632
    %v2634 = vpop.f32.mrb[0].mxu0
    %v2635 = vadd.f32 %v2511, %v2634
    %v2636 = vpop.f32.mrb[0].mxu0
    %v2637 = vadd.f32 %v2516, %v2636
    %v2638 = vpop.f32.mrb[0].mxu0
    %v2639 = vadd.f32 %v2516, %v2638
    %2640 = vdwg.mxu0
    %2641 = vmatprep.subr.bf16.mxu0 %v2423
    %2642 = vmatpush1.bf16.msra.mxu0 %v2422
    %2643 = vmatprep.subr.bf16.mxu0 %v2431
    %2644 = vmatpush1.bf16.msra.mxu0 %v2430
    %2645 = vmatprep.subr.bf16.mxu0 %v2439
    %2646 = vmatpush1.bf16.msra.mxu0 %v2438
    %2647 = vmatprep.subr.bf16.mxu0 %v2447
    %2648 = vmatpush1.bf16.msra.mxu0 %v2446
    %2649 = vmatprep.subr.bf16.mxu0 0
    %2650 = vmatpush1.bf16.msra.mxu0 0
    %2651 = vmatprep.subr.bf16.mxu0 0
    %2652 = vmatpush1.bf16.msra.mxu0 0
    %2653 = vmatprep.subr.bf16.mxu0 0
    %2654 = vmatpush1.bf16.msra.mxu0 0
    %2655 = vmatprep.subr.bf16.mxu0 0
    %2656 = vmatpush1.bf16.msra.mxu0 0
    %2657 = vmatprep.subr.bf16.mxu0 0
    %2658 = vmatpush1.bf16.msra.mxu0 0
    %2659 = vmatprep.subr.bf16.mxu0 0
    %2660 = vmatpush1.bf16.msra.mxu0 0
    %2661 = vmatprep.subr.bf16.mxu0 0
    %2662 = vmatpush1.bf16.msra.mxu0 0
    %2663 = vmatprep.subr.bf16.mxu0 0
    %2664 = vmatpush1.bf16.msra.mxu0 0
    %2665 = vmatprep.subr.bf16.mxu0 0
    %2666 = vmatpush1.bf16.msra.mxu0 0
    %2667 = vmatprep.subr.bf16.mxu0 0
    %2668 = vmatpush1.bf16.msra.mxu0 0
    %2669 = vmatprep.subr.bf16.mxu0 0
    %2670 = vmatpush1.bf16.msra.mxu0 0
    %2671 = vmatprep.subr.bf16.mxu0 0
    %2672 = vmatpush1.bf16.msra.mxu0 0
    %2673 = vmatprep.mubr.bf16.mxu0 0
    %2674 = vmatmul.mubr.bf16.gmra.mrb[0].mxu0 %v2530
    %v2675 = vpop.f32.mrb[0].mxu0
    %v2676 = vadd.f32 %v2501, %v2675
    %v2677 = vpop.f32.mrb[0].mxu0
    %v2678 = vadd.f32 %v2501, %v2677
    %v2679 = vpop.f32.mrb[0].mxu0
    %v2680 = vadd.f32 %v2506, %v2679
    %v2681 = vpop.f32.mrb[0].mxu0
    %v2682 = vadd.f32 %v2506, %v2681
    %2683 = vmatprep.mubr.bf16.mxu0 0
    %2684 = vmatmul.mubr.bf16.gmra.mrb[0].mxu0 %v2533
    %v2685 = vpop.f32.mrb[0].mxu0
    %v2686 = vadd.f32 %v2511, %v2685
    %v2687 = vpop.f32.mrb[0].mxu0
    %v2688 = vadd.f32 %v2511, %v2687
    %v2689 = vpop.f32.mrb[0].mxu0
    %v2690 = vadd.f32 %v2516, %v2689
    %v2691 = vpop.f32.mrb[0].mxu0
    %v2692 = vadd.f32 %v2516, %v2691
    %2693 = vdwg.mxu0
    %2694 = vmatprep.subr.bf16.mxu0 %v2425
    %2695 = vmatpush1.bf16.msra.mxu0 %v2424
    %2696 = vmatprep.subr.bf16.mxu0 %v2433
    %2697 = vmatpush1.bf16.msra.mxu0 %v2432
    %2698 = vmatprep.subr.bf16.mxu0 %v2441
    %2699 = vmatpush1.bf16.msra.mxu0 %v2440
    %2700 = vmatprep.subr.bf16.mxu0 %v2449
    %2701 = vmatpush1.bf16.msra.mxu0 %v2448
    %2702 = vmatprep.subr.bf16.mxu0 0
    %2703 = vmatpush1.bf16.msra.mxu0 0
    %2704 = vmatprep.subr.bf16.mxu0 0
    %2705 = vmatpush1.bf16.msra.mxu0 0
    %2706 = vmatprep.subr.bf16.mxu0 0
    %2707 = vmatpush1.bf16.msra.mxu0 0
    %2708 = vmatprep.subr.bf16.mxu0 0
    %2709 = vmatpush1.bf16.msra.mxu0 0
    %2710 = vmatprep.subr.bf16.mxu0 0
    %2711 = vmatpush1.bf16.msra.mxu0 0
    %2712 = vmatprep.subr.bf16.mxu0 0
    %2713 = vmatpush1.bf16.msra.mxu0 0
    %2714 = vmatprep.subr.bf16.mxu0 0
    %2715 = vmatpush1.bf16.msra.mxu0 0
    %2716 = vmatprep.subr.bf16.mxu0 0
    %2717 = vmatpush1.bf16.msra.mxu0 0
    %2718 = vmatprep.subr.bf16.mxu0 0
    %2719 = vmatpush1.bf16.msra.mxu0 0
    %2720 = vmatprep.subr.bf16.mxu0 0
    %2721 = vmatpush1.bf16.msra.mxu0 0
    %2722 = vmatprep.subr.bf16.mxu0 0
    %2723 = vmatpush1.bf16.msra.mxu0 0
    %2724 = vmatprep.subr.bf16.mxu0 0
    %2725 = vmatpush1.bf16.msra.mxu0 0
    %2726 = vmatprep.mubr.bf16.mxu0 0
    %2727 = vmatmul.mubr.bf16.gmra.mrb[0].mxu0 %v2530
    %v2728 = vpop.f32.mrb[0].mxu0
    %v2729 = vadd.f32 %v2501, %v2728
    %v2730 = vpop.f32.mrb[0].mxu0
    %v2731 = vadd.f32 %v2501, %v2730
    %v2732 = vpop.f32.mrb[0].mxu0
    %v2733 = vadd.f32 %v2506, %v2732
    %v2734 = vpop.f32.mrb[0].mxu0
    %v2735 = vadd.f32 %v2506, %v2734
    %2736 = vmatprep.mubr.bf16.mxu0 0
    %2737 = vmatmul.mubr.bf16.gmra.mrb[0].mxu0 %v2533
    %v2738 = vpop.f32.mrb[0].mxu0
    %v2739 = vadd.f32 %v2511, %v2738
    %v2740 = vpop.f32.mrb[0].mxu0
    %v2741 = vadd.f32 %v2511, %v2740
    %v2742 = vpop.f32.mrb[0].mxu0
    %v2743 = vadd.f32 %v2516, %v2742
    %v2744 = vpop.f32.mrb[0].mxu0
    %v2745 = vadd.f32 %v2516, %v2744
    %2746 = vdwg.mxu0
    %v2747 = vmax.f32 %v2570, 0.0
    %v2748 = vmax.f32 %v2572, 0.0
    %v2749 = vmax.f32 %v2623, 0.0
    %v2750 = vmax.f32 %v2625, 0.0
    %v2751 = vmax.f32 %v2676, 0.0
    %v2752 = vmax.f32 %v2678, 0.0
    %v2753 = vmax.f32 %v2729, 0.0
    %v2754 = vmax.f32 %v2731, 0.0
    %v2755 = vmax.f32 %v2574, 0.0
    %v2756 = vmax.f32 %v2576, 0.0
    %v2757 = vmax.f32 %v2627, 0.0
    %v2758 = vmax.f32 %v2629, 0.0
    %v2759 = vmax.f32 %v2680, 0.0
    %v2760 = vmax.f32 %v2682, 0.0
    %v2761 = vmax.f32 %v2733, 0.0
    %v2762 = vmax.f32 %v2735, 0.0
    %v2763 = vmax.f32 %v2580, 0.0
    %v2764 = vmax.f32 %v2582, 0.0
    %v2765 = vmax.f32 %v2633, 0.0
    %v2766 = vmax.f32 %v2635, 0.0
    %v2767 = vmax.f32 %v2686, 0.0
    %v2768 = vmax.f32 %v2688, 0.0
    %v2769 = vmax.f32 %v2739, 0.0
    %v2770 = vmax.f32 %v2741, 0.0
    %v2771 = vmax.f32 %v2584, 0.0
    %v2772 = vmax.f32 %v2586, 0.0
    %v2773 = vmax.f32 %v2637, 0.0
    %v2774 = vmax.f32 %v2639, 0.0
    %v2775 = vmax.f32 %v2690, 0.0
    %v2776 = vmax.f32 %v2692, 0.0
    %v2777 = vmax.f32 %v2743, 0.0
    %v2778 = vmax.f32 %v2745, 0.0
    %v2779 = vpack.c.bf16 %v2755, %v2747
    %v2780 = vpack.c.bf16 %v2756, %v2748
    %v2781 = vpack.c.bf16 %v2757, %v2749
    %v2782 = vpack.c.bf16 %v2758, %v2750
    %v2783 = vpack.c.bf16 %v2759, %v2751
    %v2784 = vpack.c.bf16 %v2760, %v2752
    %v2785 = vpack.c.bf16 %v2761, %v2753
    %v2786 = vpack.c.bf16 %v2762, %v2754
    %v2787 = vpack.c.bf16 %v2771, %v2763
    %v2788 = vpack.c.bf16 %v2772, %v2764
    %v2789 = vpack.c.bf16 %v2773, %v2765
    %v2790 = vpack.c.bf16 %v2774, %v2766
    %v2791 = vpack.c.bf16 %v2775, %v2767
    %v2792 = vpack.c.bf16 %v2776, %v2768
    %v2793 = vpack.c.bf16 %v2777, %v2769
    %v2794 = vpack.c.bf16 %v2778, %v2770
    %v2795 = vld [vmem:[#allocation7 + $0xa0] sm:$0xf]
    %v2796 = vld [vmem:[#allocation7 + $0xa4] sm:$0xf]
    %v2797 = vld [vmem:[#allocation7 + $0xa8] sm:$0xf]
    %v2798 = vld [vmem:[#allocation7 + $0xac] sm:$0xf]
    %v2799 = vld [vmem:[#allocation7 + $0xb0] sm:$0xf]
    %v2800 = vld [vmem:[#allocation7 + $0xb4] sm:$0xf]
    %v2801 = vld [vmem:[#allocation7 + $0xb8] sm:$0xf]
    %v2802 = vld [vmem:[#allocation7 + $0xbc] sm:$0xf]
    %v2803 = vld [vmem:[#allocation7 + $0xc0] sm:$0xf]
    %v2804 = vld [vmem:[#allocation7 + $0xc4] sm:$0xf]
    %v2805 = vld [vmem:[#allocation7 + $0xc8] sm:$0xf]
    %v2806 = vld [vmem:[#allocation7 + $0xcc] sm:$0xf]
    %v2807 = vld [vmem:[#allocation7 + $0xd0] sm:$0xf]
    %v2808 = vld [vmem:[#allocation7 + $0xd4] sm:$0xf]
    %v2809 = vld [vmem:[#allocation7 + $0xd8] sm:$0xf]
    %v2810 = vld [vmem:[#allocation7 + $0xdc] sm:$0xf]
    %v2819 = vunpack.c.l.b16 %v2803
    %v2820 = vunpack.c.l.b16 %v2804
    %v2821 = vunpack.c.l.b16 %v2805
    %v2822 = vunpack.c.l.b16 %v2806
    %v2823 = vunpack.c.l.b16 %v2807
    %v2824 = vunpack.c.l.b16 %v2808
    %v2825 = vunpack.c.l.b16 %v2809
    %v2826 = vunpack.c.l.b16 %v2810
    %v2827 = vpack.c.b16 %v2820, %v2819
    %v2828 = vpack.c.b16 %v2822, %v2821
    %v2829 = vpack.c.b16 %v2824, %v2823
    %v2830 = vpack.c.b16 %v2826, %v2825
    %vm2831 = vcmask 654336
    %v2833 = vsel %vm2831, %v2827, 0
    %v2836 = vsel %vm2831, %v2828, 0
    %v2839 = vsel %vm2831, %v2829, 0
    %v2842 = vsel %vm2831, %v2830, 0
    %2844 = vmatprep.subr.bf16.mxu0 %v2451
    %2845 = vmatpush1.bf16.msra.mxu0 %v2450
    %2846 = vmatprep.subr.bf16.mxu0 %v2459
    %2847 = vmatpush1.bf16.msra.mxu0 %v2458
    %2848 = vmatprep.subr.bf16.mxu0 %v2467
    %2849 = vmatpush1.bf16.msra.mxu0 %v2466
    %2850 = vmatprep.subr.bf16.mxu0 %v2475
    %2851 = vmatpush1.bf16.msra.mxu0 %v2474
    %2852 = vmatprep.subr.bf16.mxu0 %v2483
    %2853 = vmatpush1.bf16.msra.mxu0 %v2482
    %2854 = vmatprep.subr.bf16.mxu0 0
    %2855 = vmatpush1.bf16.msra.mxu0 0
    %2856 = vmatprep.subr.bf16.mxu0 0
    %2857 = vmatpush1.bf16.msra.mxu0 0
    %2858 = vmatprep.subr.bf16.mxu0 0
    %2859 = vmatpush1.bf16.msra.mxu0 0
    %2860 = vmatprep.subr.bf16.mxu0 0
    %2861 = vmatpush1.bf16.msra.mxu0 0
    %2862 = vmatprep.subr.bf16.mxu0 0
    %2863 = vmatpush1.bf16.msra.mxu0 0
    %2864 = vmatprep.subr.bf16.mxu0 0
    %2865 = vmatpush1.bf16.msra.mxu0 0
    %2866 = vmatprep.subr.bf16.mxu0 0
    %2867 = vmatpush1.bf16.msra.mxu0 0
    %2868 = vmatprep.subr.bf16.mxu0 0
    %2869 = vmatpush1.bf16.msra.mxu0 0
    %2870 = vmatprep.subr.bf16.mxu0 0
    %2871 = vmatpush1.bf16.msra.mxu0 0
    %2872 = vmatprep.subr.bf16.mxu0 0
    %2873 = vmatpush1.bf16.msra.mxu0 0
    %2874 = vmatprep.subr.bf16.mxu0 0
    %2875 = vmatpush1.bf16.msra.mxu0 0
    %2876 = vmatprep.mubr.bf16.mxu0 0
    %2877 = vmatmul.mubr.bf16.gmra.mrb[0].mxu0 %v2833
    %v2878 = vpop.f32.mrb[0].mxu0
    %v2879 = vadd.f32 0.0, %v2878
    %v2880 = vpop.f32.mrb[0].mxu0
    %v2881 = vadd.f32 0.0, %v2880
    %v2882 = vpop.f32.mrb[0].mxu0
    %v2883 = vadd.f32 0.0, %v2882
    %v2884 = vpop.f32.mrb[0].mxu0
    %v2885 = vadd.f32 0.0, %v2884
    %2886 = vmatprep.mubr.bf16.mxu0 0
    %2887 = vmatmul.mubr.bf16.gmra.mrb[0].mxu0 %v2836
    %v2888 = vpop.f32.mrb[0].mxu0
    %v2889 = vadd.f32 0.0, %v2888
    %v2890 = vpop.f32.mrb[0].mxu0
    %v2891 = vadd.f32 0.0, %v2890
    %v2892 = vpop.f32.mrb[0].mxu0
    %v2893 = vadd.f32 0.0, %v2892
    %v2894 = vpop.f32.mrb[0].mxu0
    %v2895 = vadd.f32 0.0, %v2894
    %2896 = vmatprep.mubr.bf16.mxu0 0
    %2897 = vmatmul.mubr.bf16.gmra.mrb[0].mxu0 %v2839
    %v2898 = vpop.f32.mrb[0].mxu0
    %v2899 = vadd.f32 0.0, %v2898
    %v2900 = vpop.f32.mrb[0].mxu0
    %v2901 = vadd.f32 0.0, %v2900
    %v2902 = vpop.f32.mrb[0].mxu0
    %v2903 = vadd.f32 0.0, %v2902
    %v2904 = vpop.f32.mrb[0].mxu0
    %v2905 = vadd.f32 0.0, %v2904
    %2906 = vmatprep.mubr.bf16.mxu0 0
    %2907 = vmatmul.mubr.bf16.gmra.mrb[0].mxu0 %v2842
    %v2908 = vpop.f32.mrb[0].mxu0
    %v2909 = vadd.f32 0.0, %v2908
    %v2910 = vpop.f32.mrb[0].mxu0
    %v2911 = vadd.f32 0.0, %v2910
    %v2912 = vpop.f32.mrb[0].mxu0
    %v2913 = vadd.f32 0.0, %v2912
    %v2914 = vpop.f32.mrb[0].mxu0
    %v2915 = vadd.f32 0.0, %v2914
    %2916 = vdwg.mxu0
    %2917 = vmatprep.subr.bf16.mxu0 %v2453
    %2918 = vmatpush1.bf16.msra.mxu0 %v2452
    %2919 = vmatprep.subr.bf16.mxu0 %v2461
    %2920 = vmatpush1.bf16.msra.mxu0 %v2460
    %2921 = vmatprep.subr.bf16.mxu0 %v2469
    %2922 = vmatpush1.bf16.msra.mxu0 %v2468
    %2923 = vmatprep.subr.bf16.mxu0 %v2477
    %2924 = vmatpush1.bf16.msra.mxu0 %v2476
    %2925 = vmatprep.subr.bf16.mxu0 %v2485
    %2926 = vmatpush1.bf16.msra.mxu0 %v2484
    %2927 = vmatprep.subr.bf16.mxu0 0
    %2928 = vmatpush1.bf16.msra.mxu0 0
    %2929 = vmatprep.subr.bf16.mxu0 0
    %2930 = vmatpush1.bf16.msra.mxu0 0
    %2931 = vmatprep.subr.bf16.mxu0 0
    %2932 = vmatpush1.bf16.msra.mxu0 0
    %2933 = vmatprep.subr.bf16.mxu0 0
    %2934 = vmatpush1.bf16.msra.mxu0 0
    %2935 = vmatprep.subr.bf16.mxu0 0
    %2936 = vmatpush1.bf16.msra.mxu0 0
    %2937 = vmatprep.subr.bf16.mxu0 0
    %2938 = vmatpush1.bf16.msra.mxu0 0
    %2939 = vmatprep.subr.bf16.mxu0 0
    %2940 = vmatpush1.bf16.msra.mxu0 0
    %2941 = vmatprep.subr.bf16.mxu0 0
    %2942 = vmatpush1.bf16.msra.mxu0 0
    %2943 = vmatprep.subr.bf16.mxu0 0
    %2944 = vmatpush1.bf16.msra.mxu0 0
    %2945 = vmatprep.subr.bf16.mxu0 0
    %2946 = vmatpush1.bf16.msra.mxu0 0
    %2947 = vmatprep.subr.bf16.mxu0 0
    %2948 = vmatpush1.bf16.msra.mxu0 0
    %2949 = vmatprep.mubr.bf16.mxu0 0
    %2950 = vmatmul.mubr.bf16.gmra.mrb[0].mxu0 %v2833
    %v2951 = vpop.f32.mrb[0].mxu0
    %v2952 = vadd.f32 0.0, %v2951
    %v2953 = vpop.f32.mrb[0].mxu0
    %v2954 = vadd.f32 0.0, %v2953
    %v2955 = vpop.f32.mrb[0].mxu0
    %v2956 = vadd.f32 0.0, %v2955
    %v2957 = vpop.f32.mrb[0].mxu0
    %v2958 = vadd.f32 0.0, %v2957
    %2959 = vmatprep.mubr.bf16.mxu0 0
    %2960 = vmatmul.mubr.bf16.gmra.mrb[0].mxu0 %v2836
    %v2961 = vpop.f32.mrb[0].mxu0
    %v2962 = vadd.f32 0.0, %v2961
    %v2963 = vpop.f32.mrb[0].mxu0
    %v2964 = vadd.f32 0.0, %v2963
    %v2965 = vpop.f32.mrb[0].mxu0
    %v2966 = vadd.f32 0.0, %v2965
    %v2967 = vpop.f32.mrb[0].mxu0
    %v2968 = vadd.f32 0.0, %v2967
    %2969 = vmatprep.mubr.bf16.mxu0 0
    %2970 = vmatmul.mubr.bf16.gmra.mrb[0].mxu0 %v2839
    %v2971 = vpop.f32.mrb[0].mxu0
    %v2972 = vadd.f32 0.0, %v2971
    %v2973 = vpop.f32.mrb[0].mxu0
    %v2974 = vadd.f32 0.0, %v2973
    %v2975 = vpop.f32.mrb[0].mxu0
    %v2976 = vadd.f32 0.0, %v2975
    %v2977 = vpop.f32.mrb[0].mxu0
    %v2978 = vadd.f32 0.0, %v2977
    %2979 = vmatprep.mubr.bf16.mxu0 0
    %2980 = vmatmul.mubr.bf16.gmra.mrb[0].mxu0 %v2842
    %v2981 = vpop.f32.mrb[0].mxu0
    %v2982 = vadd.f32 0.0, %v2981
    %v2983 = vpop.f32.mrb[0].mxu0
    %v2984 = vadd.f32 0.0, %v2983
    %v2985 = vpop.f32.mrb[0].mxu0
    %v2986 = vadd.f32 0.0, %v2985
    %v2987 = vpop.f32.mrb[0].mxu0
    %v2988 = vadd.f32 0.0, %v2987
    %2989 = vdwg.mxu0
    %2990 = vmatprep.subr.bf16.mxu0 %v2455
    %2991 = vmatpush1.bf16.msra.mxu0 %v2454
    %2992 = vmatprep.subr.bf16.mxu0 %v2463
    %2993 = vmatpush1.bf16.msra.mxu0 %v2462
    %2994 = vmatprep.subr.bf16.mxu0 %v2471
    %2995 = vmatpush1.bf16.msra.mxu0 %v2470
    %2996 = vmatprep.subr.bf16.mxu0 %v2479
    %2997 = vmatpush1.bf16.msra.mxu0 %v2478
    %2998 = vmatprep.subr.bf16.mxu0 %v2487
    %2999 = vmatpush1.bf16.msra.mxu0 %v2486
    %3000 = vmatprep.subr.bf16.mxu0 0
    %3001 = vmatpush1.bf16.msra.mxu0 0
    %3002 = vmatprep.subr.bf16.mxu0 0
    %3003 = vmatpush1.bf16.msra.mxu0 0
    %3004 = vmatprep.subr.bf16.mxu0 0
    %3005 = vmatpush1.bf16.msra.mxu0 0
    %3006 = vmatprep.subr.bf16.mxu0 0
    %3007 = vmatpush1.bf16.msra.mxu0 0
    %3008 = vmatprep.subr.bf16.mxu0 0
    %3009 = vmatpush1.bf16.msra.mxu0 0
    %3010 = vmatprep.subr.bf16.mxu0 0
    %3011 = vmatpush1.bf16.msra.mxu0 0
    %3012 = vmatprep.subr.bf16.mxu0 0
    %3013 = vmatpush1.bf16.msra.mxu0 0
    %3014 = vmatprep.subr.bf16.mxu0 0
    %3015 = vmatpush1.bf16.msra.mxu0 0
    %3016 = vmatprep.subr.bf16.mxu0 0
    %3017 = vmatpush1.bf16.msra.mxu0 0
    %3018 = vmatprep.subr.bf16.mxu0 0
    %3019 = vmatpush1.bf16.msra.mxu0 0
    %3020 = vmatprep.subr.bf16.mxu0 0
    %3021 = vmatpush1.bf16.msra.mxu0 0
    %3022 = vmatprep.mubr.bf16.mxu0 0
    %3023 = vmatmul.mubr.bf16.gmra.mrb[0].mxu0 %v2833
    %v3024 = vpop.f32.mrb[0].mxu0
    %v3025 = vadd.f32 0.0, %v3024
    %v3026 = vpop.f32.mrb[0].mxu0
    %v3027 = vadd.f32 0.0, %v3026
    %v3028 = vpop.f32.mrb[0].mxu0
    %v3029 = vadd.f32 0.0, %v3028
    %v3030 = vpop.f32.mrb[0].mxu0
    %v3031 = vadd.f32 0.0, %v3030
    %3032 = vmatprep.mubr.bf16.mxu0 0
    %3033 = vmatmul.mubr.bf16.gmra.mrb[0].mxu0 %v2836
    %v3034 = vpop.f32.mrb[0].mxu0
    %v3035 = vadd.f32 0.0, %v3034
    %v3036 = vpop.f32.mrb[0].mxu0
    %v3037 = vadd.f32 0.0, %v3036
    %v3038 = vpop.f32.mrb[0].mxu0
    %v3039 = vadd.f32 0.0, %v3038
    %v3040 = vpop.f32.mrb[0].mxu0
    %v3041 = vadd.f32 0.0, %v3040
    %3042 = vmatprep.mubr.bf16.mxu0 0
    %3043 = vmatmul.mubr.bf16.gmra.mrb[0].mxu0 %v2839
    %v3044 = vpop.f32.mrb[0].mxu0
    %v3045 = vadd.f32 0.0, %v3044
    %v3046 = vpop.f32.mrb[0].mxu0
    %v3047 = vadd.f32 0.0, %v3046
    %v3048 = vpop.f32.mrb[0].mxu0
    %v3049 = vadd.f32 0.0, %v3048
    %v3050 = vpop.f32.mrb[0].mxu0
    %v3051 = vadd.f32 0.0, %v3050
    %3052 = vmatprep.mubr.bf16.mxu0 0
    %3053 = vmatmul.mubr.bf16.gmra.mrb[0].mxu0 %v2842
    %v3054 = vpop.f32.mrb[0].mxu0
    %v3055 = vadd.f32 0.0, %v3054
    %v3056 = vpop.f32.mrb[0].mxu0
    %v3057 = vadd.f32 0.0, %v3056
    %v3058 = vpop.f32.mrb[0].mxu0
    %v3059 = vadd.f32 0.0, %v3058
    %v3060 = vpop.f32.mrb[0].mxu0
    %v3061 = vadd.f32 0.0, %v3060
    %3062 = vdwg.mxu0
    %3063 = vmatprep.subr.bf16.mxu0 %v2457
    %3064 = vmatpush1.bf16.msra.mxu0 %v2456
    %3065 = vmatprep.subr.bf16.mxu0 %v2465
    %3066 = vmatpush1.bf16.msra.mxu0 %v2464
    %3067 = vmatprep.subr.bf16.mxu0 %v2473
    %3068 = vmatpush1.bf16.msra.mxu0 %v2472
    %3069 = vmatprep.subr.bf16.mxu0 %v2481
    %3070 = vmatpush1.bf16.msra.mxu0 %v2480
    %3071 = vmatprep.subr.bf16.mxu0 %v2489
    %3072 = vmatpush1.bf16.msra.mxu0 %v2488
    %3073 = vmatprep.subr.bf16.mxu0 0
    %3074 = vmatpush1.bf16.msra.mxu0 0
    %3075 = vmatprep.subr.bf16.mxu0 0
    %3076 = vmatpush1.bf16.msra.mxu0 0
    %3077 = vmatprep.subr.bf16.mxu0 0
    %3078 = vmatpush1.bf16.msra.mxu0 0
    %3079 = vmatprep.subr.bf16.mxu0 0
    %3080 = vmatpush1.bf16.msra.mxu0 0
    %3081 = vmatprep.subr.bf16.mxu0 0
    %3082 = vmatpush1.bf16.msra.mxu0 0
    %3083 = vmatprep.subr.bf16.mxu0 0
    %3084 = vmatpush1.bf16.msra.mxu0 0
    %3085 = vmatprep.subr.bf16.mxu0 0
    %3086 = vmatpush1.bf16.msra.mxu0 0
    %3087 = vmatprep.subr.bf16.mxu0 0
    %3088 = vmatpush1.bf16.msra.mxu0 0
    %3089 = vmatprep.subr.bf16.mxu0 0
    %3090 = vmatpush1.bf16.msra.mxu0 0
    %3091 = vmatprep.subr.bf16.mxu0 0
    %3092 = vmatpush1.bf16.msra.mxu0 0
    %3093 = vmatprep.subr.bf16.mxu0 0
    %3094 = vmatpush1.bf16.msra.mxu0 0
    %3095 = vmatprep.mubr.bf16.mxu0 0
    %3096 = vmatmul.mubr.bf16.gmra.mrb[0].mxu0 %v2833
    %v3097 = vpop.f32.mrb[0].mxu0
    %v3098 = vadd.f32 0.0, %v3097
    %v3099 = vpop.f32.mrb[0].mxu0
    %v3100 = vadd.f32 0.0, %v3099
    %v3101 = vpop.f32.mrb[0].mxu0
    %v3102 = vadd.f32 0.0, %v3101
    %v3103 = vpop.f32.mrb[0].mxu0
    %v3104 = vadd.f32 0.0, %v3103
    %3105 = vmatprep.mubr.bf16.mxu0 0
    %3106 = vmatmul.mubr.bf16.gmra.mrb[0].mxu0 %v2836
    %v3107 = vpop.f32.mrb[0].mxu0
    %v3108 = vadd.f32 0.0, %v3107
    %v3109 = vpop.f32.mrb[0].mxu0
    %v3110 = vadd.f32 0.0, %v3109
    %v3111 = vpop.f32.mrb[0].mxu0
    %v3112 = vadd.f32 0.0, %v3111
    %v3113 = vpop.f32.mrb[0].mxu0
    %v3114 = vadd.f32 0.0, %v3113
    %3115 = vmatprep.mubr.bf16.mxu0 0
    %3116 = vmatmul.mubr.bf16.gmra.mrb[0].mxu0 %v2839
    %v3117 = vpop.f32.mrb[0].mxu0
    %v3118 = vadd.f32 0.0, %v3117
    %v3119 = vpop.f32.mrb[0].mxu0
    %v3120 = vadd.f32 0.0, %v3119
    %v3121 = vpop.f32.mrb[0].mxu0
    %v3122 = vadd.f32 0.0, %v3121
    %v3123 = vpop.f32.mrb[0].mxu0
    %v3124 = vadd.f32 0.0, %v3123
    %3125 = vmatprep.mubr.bf16.mxu0 0
    %3126 = vmatmul.mubr.bf16.gmra.mrb[0].mxu0 %v2842
    %v3127 = vpop.f32.mrb[0].mxu0
    %v3128 = vadd.f32 0.0, %v3127
    %v3129 = vpop.f32.mrb[0].mxu0
    %v3130 = vadd.f32 0.0, %v3129
    %v3131 = vpop.f32.mrb[0].mxu0
    %v3132 = vadd.f32 0.0, %v3131
    %v3133 = vpop.f32.mrb[0].mxu0
    %v3134 = vadd.f32 0.0, %v3133
    %3135 = vdwg.mxu0
    %v3144 = vunpack.c.l.b16 %v2795
    %v3145 = vunpack.c.l.b16 %v2796
    %v3146 = vunpack.c.l.b16 %v2797
    %v3147 = vunpack.c.l.b16 %v2798
    %v3148 = vunpack.c.l.b16 %v2799
    %v3149 = vunpack.c.l.b16 %v2800
    %v3150 = vunpack.c.l.b16 %v2801
    %v3151 = vunpack.c.l.b16 %v2802
    %v3152 = vpack.c.b16 %v3145, %v3144
    %v3153 = vpack.c.b16 %v3147, %v3146
    %v3154 = vpack.c.b16 %v3149, %v3148
    %v3155 = vpack.c.b16 %v3151, %v3150
    %vm3156 = vcmask 261120
    %v3158 = vsel %vm3156, %v3152, 0
    %v3161 = vsel %vm3156, %v3153, 0
    %v3164 = vsel %vm3156, %v3154, 0
    %v3167 = vsel %vm3156, %v3155, 0
    %3169 = vmatprep.subr.bf16.mxu0 %v2780
    %3170 = vmatpush1.bf16.msra.mxu0 %v2779
    %3171 = vmatprep.subr.bf16.mxu0 %v2788
    %3172 = vmatpush1.bf16.msra.mxu0 %v2787
    %3173 = vmatprep.subr.bf16.mxu0 0
    %3174 = vmatpush1.bf16.msra.mxu0 0
    %3175 = vmatprep.subr.bf16.mxu0 0
    %3176 = vmatpush1.bf16.msra.mxu0 0
    %3177 = vmatprep.subr.bf16.mxu0 0
    %3178 = vmatpush1.bf16.msra.mxu0 0
    %3179 = vmatprep.subr.bf16.mxu0 0
    %3180 = vmatpush1.bf16.msra.mxu0 0
    %3181 = vmatprep.subr.bf16.mxu0 0
    %3182 = vmatpush1.bf16.msra.mxu0 0
    %3183 = vmatprep.subr.bf16.mxu0 0
    %3184 = vmatpush1.bf16.msra.mxu0 0
    %3185 = vmatprep.subr.bf16.mxu0 0
    %3186 = vmatpush1.bf16.msra.mxu0 0
    %3187 = vmatprep.subr.bf16.mxu0 0
    %3188 = vmatpush1.bf16.msra.mxu0 0
    %3189 = vmatprep.subr.bf16.mxu0 0
    %3190 = vmatpush1.bf16.msra.mxu0 0
    %3191 = vmatprep.subr.bf16.mxu0 0
    %3192 = vmatpush1.bf16.msra.mxu0 0
    %3193 = vmatprep.subr.bf16.mxu0 0
    %3194 = vmatpush1.bf16.msra.mxu0 0
    %3195 = vmatprep.subr.bf16.mxu0 0
    %3196 = vmatpush1.bf16.msra.mxu0 0
    %3197 = vmatprep.subr.bf16.mxu0 0
    %3198 = vmatpush1.bf16.msra.mxu0 0
    %3199 = vmatprep.subr.bf16.mxu0 0
    %3200 = vmatpush1.bf16.msra.mxu0 0
    %3201 = vmatprep.mubr.bf16.mxu0 0
    %3202 = vmatmul.mubr.bf16.gmra.mrb[0].mxu0 %v3158
    %v3203 = vpop.f32.mrb[0].mxu0
    %v3204 = vadd.f32 %v2879, %v3203
    %v3205 = vpop.f32.mrb[0].mxu0
    %v3206 = vadd.f32 %v2881, %v3205
    %v3207 = vpop.f32.mrb[0].mxu0
    %v3208 = vadd.f32 %v2883, %v3207
    %v3209 = vpop.f32.mrb[0].mxu0
    %v3210 = vadd.f32 %v2885, %v3209
    %3211 = vmatprep.mubr.bf16.mxu0 0
    %3212 = vmatmul.mubr.bf16.gmra.mrb[0].mxu0 %v3161
    %v3213 = vpop.f32.mrb[0].mxu0
    %v3214 = vadd.f32 %v2889, %v3213
    %v3215 = vpop.f32.mrb[0].mxu0
    %v3216 = vadd.f32 %v2891, %v3215
    %v3217 = vpop.f32.mrb[0].mxu0
    %v3218 = vadd.f32 %v2893, %v3217
    %v3219 = vpop.f32.mrb[0].mxu0
    %v3220 = vadd.f32 %v2895, %v3219
    %3221 = vmatprep.mubr.bf16.mxu0 0
    %3222 = vmatmul.mubr.bf16.gmra.mrb[0].mxu0 %v3164
    %v3223 = vpop.f32.mrb[0].mxu0
    %v3224 = vadd.f32 %v2899, %v3223
    %v3225 = vpop.f32.mrb[0].mxu0
    %v3226 = vadd.f32 %v2901, %v3225
    %v3227 = vpop.f32.mrb[0].mxu0
    %v3228 = vadd.f32 %v2903, %v3227
    %v3229 = vpop.f32.mrb[0].mxu0
    %v3230 = vadd.f32 %v2905, %v3229
    %3231 = vmatprep.mubr.bf16.mxu0 0
    %3232 = vmatmul.mubr.bf16.gmra.mrb[0].mxu0 %v3167
    %v3233 = vpop.f32.mrb[0].mxu0
    %v3234 = vadd.f32 %v2909, %v3233
    %v3235 = vpop.f32.mrb[0].mxu0
    %v3236 = vadd.f32 %v2911, %v3235
    %v3237 = vpop.f32.mrb[0].mxu0
    %v3238 = vadd.f32 %v2913, %v3237
    %v3239 = vpop.f32.mrb[0].mxu0
    %v3240 = vadd.f32 %v2915, %v3239
    %3241 = vdwg.mxu0
    %3242 = vmatprep.subr.bf16.mxu0 %v2782
    %3243 = vmatpush1.bf16.msra.mxu0 %v2781
    %3244 = vmatprep.subr.bf16.mxu0 %v2790
    %3245 = vmatpush1.bf16.msra.mxu0 %v2789
    %3246 = vmatprep.subr.bf16.mxu0 0
    %3247 = vmatpush1.bf16.msra.mxu0 0
    %3248 = vmatprep.subr.bf16.mxu0 0
    %3249 = vmatpush1.bf16.msra.mxu0 0
    %3250 = vmatprep.subr.bf16.mxu0 0
    %3251 = vmatpush1.bf16.msra.mxu0 0
    %3252 = vmatprep.subr.bf16.mxu0 0
    %3253 = vmatpush1.bf16.msra.mxu0 0
    %3254 = vmatprep.subr.bf16.mxu0 0
    %3255 = vmatpush1.bf16.msra.mxu0 0
    %3256 = vmatprep.subr.bf16.mxu0 0
    %3257 = vmatpush1.bf16.msra.mxu0 0
    %3258 = vmatprep.subr.bf16.mxu0 0
    %3259 = vmatpush1.bf16.msra.mxu0 0
    %3260 = vmatprep.subr.bf16.mxu0 0
    %3261 = vmatpush1.bf16.msra.mxu0 0
    %3262 = vmatprep.subr.bf16.mxu0 0
    %3263 = vmatpush1.bf16.msra.mxu0 0
    %3264 = vmatprep.subr.bf16.mxu0 0
    %3265 = vmatpush1.bf16.msra.mxu0 0
    %3266 = vmatprep.subr.bf16.mxu0 0
    %3267 = vmatpush1.bf16.msra.mxu0 0
    %3268 = vmatprep.subr.bf16.mxu0 0
    %3269 = vmatpush1.bf16.msra.mxu0 0
    %3270 = vmatprep.subr.bf16.mxu0 0
    %3271 = vmatpush1.bf16.msra.mxu0 0
    %3272 = vmatprep.subr.bf16.mxu0 0
    %3273 = vmatpush1.bf16.msra.mxu0 0
    %3274 = vmatprep.mubr.bf16.mxu0 0
    %3275 = vmatmul.mubr.bf16.gmra.mrb[0].mxu0 %v3158
    %v3276 = vpop.f32.mrb[0].mxu0
    %v3277 = vadd.f32 %v2952, %v3276
    %v3278 = vpop.f32.mrb[0].mxu0
    %v3279 = vadd.f32 %v2954, %v3278
    %v3280 = vpop.f32.mrb[0].mxu0
    %v3281 = vadd.f32 %v2956, %v3280
    %v3282 = vpop.f32.mrb[0].mxu0
    %v3283 = vadd.f32 %v2958, %v3282
    %3284 = vmatprep.mubr.bf16.mxu0 0
    %3285 = vmatmul.mubr.bf16.gmra.mrb[0].mxu0 %v3161
    %v3286 = vpop.f32.mrb[0].mxu0
    %v3287 = vadd.f32 %v2962, %v3286
    %v3288 = vpop.f32.mrb[0].mxu0
    %v3289 = vadd.f32 %v2964, %v3288
    %v3290 = vpop.f32.mrb[0].mxu0
    %v3291 = vadd.f32 %v2966, %v3290
    %v3292 = vpop.f32.mrb[0].mxu0
    %v3293 = vadd.f32 %v2968, %v3292
    %3294 = vmatprep.mubr.bf16.mxu0 0
    %3295 = vmatmul.mubr.bf16.gmra.mrb[0].mxu0 %v3164
    %v3296 = vpop.f32.mrb[0].mxu0
    %v3297 = vadd.f32 %v2972, %v3296
    %v3298 = vpop.f32.mrb[0].mxu0
    %v3299 = vadd.f32 %v2974, %v3298
    %v3300 = vpop.f32.mrb[0].mxu0
    %v3301 = vadd.f32 %v2976, %v3300
    %v3302 = vpop.f32.mrb[0].mxu0
    %v3303 = vadd.f32 %v2978, %v3302
    %3304 = vmatprep.mubr.bf16.mxu0 0
    %3305 = vmatmul.mubr.bf16.gmra.mrb[0].mxu0 %v3167
    %v3306 = vpop.f32.mrb[0].mxu0
    %v3307 = vadd.f32 %v2982, %v3306
    %v3308 = vpop.f32.mrb[0].mxu0
    %v3309 = vadd.f32 %v2984, %v3308
    %v3310 = vpop.f32.mrb[0].mxu0
    %v3311 = vadd.f32 %v2986, %v3310
    %v3312 = vpop.f32.mrb[0].mxu0
    %v3313 = vadd.f32 %v2988, %v3312
    %3314 = vdwg.mxu0
    %3315 = vmatprep.subr.bf16.mxu0 %v2784
    %3316 = vmatpush1.bf16.msra.mxu0 %v2783
    %3317 = vmatprep.subr.bf16.mxu0 %v2792
    %3318 = vmatpush1.bf16.msra.mxu0 %v2791
    %3319 = vmatprep.subr.bf16.mxu0 0
    %3320 = vmatpush1.bf16.msra.mxu0 0
    %3321 = vmatprep.subr.bf16.mxu0 0
    %3322 = vmatpush1.bf16.msra.mxu0 0
    %3323 = vmatprep.subr.bf16.mxu0 0
    %3324 = vmatpush1.bf16.msra.mxu0 0
    %3325 = vmatprep.subr.bf16.mxu0 0
    %3326 = vmatpush1.bf16.msra.mxu0 0
    %3327 = vmatprep.subr.bf16.mxu0 0
    %3328 = vmatpush1.bf16.msra.mxu0 0
    %3329 = vmatprep.subr.bf16.mxu0 0
    %3330 = vmatpush1.bf16.msra.mxu0 0
    %3331 = vmatprep.subr.bf16.mxu0 0
    %3332 = vmatpush1.bf16.msra.mxu0 0
    %3333 = vmatprep.subr.bf16.mxu0 0
    %3334 = vmatpush1.bf16.msra.mxu0 0
    %3335 = vmatprep.subr.bf16.mxu0 0
    %3336 = vmatpush1.bf16.msra.mxu0 0
    %3337 = vmatprep.subr.bf16.mxu0 0
    %3338 = vmatpush1.bf16.msra.mxu0 0
    %3339 = vmatprep.subr.bf16.mxu0 0
    %3340 = vmatpush1.bf16.msra.mxu0 0
    %3341 = vmatprep.subr.bf16.mxu0 0
    %3342 = vmatpush1.bf16.msra.mxu0 0
    %3343 = vmatprep.subr.bf16.mxu0 0
    %3344 = vmatpush1.bf16.msra.mxu0 0
    %3345 = vmatprep.subr.bf16.mxu0 0
    %3346 = vmatpush1.bf16.msra.mxu0 0
    %3347 = vmatprep.mubr.bf16.mxu0 0
    %3348 = vmatmul.mubr.bf16.gmra.mrb[0].mxu0 %v3158
    %v3349 = vpop.f32.mrb[0].mxu0
    %v3350 = vadd.f32 %v3025, %v3349
    %v3351 = vpop.f32.mrb[0].mxu0
    %v3352 = vadd.f32 %v3027, %v3351
    %v3353 = vpop.f32.mrb[0].mxu0
    %v3354 = vadd.f32 %v3029, %v3353
    %v3355 = vpop.f32.mrb[0].mxu0
    %v3356 = vadd.f32 %v3031, %v3355
    %3357 = vmatprep.mubr.bf16.mxu0 0
    %3358 = vmatmul.mubr.bf16.gmra.mrb[0].mxu0 %v3161
    %v3359 = vpop.f32.mrb[0].mxu0
    %v3360 = vadd.f32 %v3035, %v3359
    %v3361 = vpop.f32.mrb[0].mxu0
    %v3362 = vadd.f32 %v3037, %v3361
    %v3363 = vpop.f32.mrb[0].mxu0
    %v3364 = vadd.f32 %v3039, %v3363
    %v3365 = vpop.f32.mrb[0].mxu0
    %v3366 = vadd.f32 %v3041, %v3365
    %3367 = vmatprep.mubr.bf16.mxu0 0
    %3368 = vmatmul.mubr.bf16.gmra.mrb[0].mxu0 %v3164
    %v3369 = vpop.f32.mrb[0].mxu0
    %v3370 = vadd.f32 %v3045, %v3369
    %v3371 = vpop.f32.mrb[0].mxu0
    %v3372 = vadd.f32 %v3047, %v3371
    %v3373 = vpop.f32.mrb[0].mxu0
    %v3374 = vadd.f32 %v3049, %v3373
    %v3375 = vpop.f32.mrb[0].mxu0
    %v3376 = vadd.f32 %v3051, %v3375
    %3377 = vmatprep.mubr.bf16.mxu0 0
    %3378 = vmatmul.mubr.bf16.gmra.mrb[0].mxu0 %v3167
    %v3379 = vpop.f32.mrb[0].mxu0
    %v3380 = vadd.f32 %v3055, %v3379
    %v3381 = vpop.f32.mrb[0].mxu0
    %v3382 = vadd.f32 %v3057, %v3381
    %v3383 = vpop.f32.mrb[0].mxu0
    %v3384 = vadd.f32 %v3059, %v3383
    %v3385 = vpop.f32.mrb[0].mxu0
    %v3386 = vadd.f32 %v3061, %v3385
    %3387 = vdwg.mxu0
    %3388 = vmatprep.subr.bf16.mxu0 %v2786
    %3389 = vmatpush1.bf16.msra.mxu0 %v2785
    %3390 = vmatprep.subr.bf16.mxu0 %v2794
    %3391 = vmatpush1.bf16.msra.mxu0 %v2793
    %3392 = vmatprep.subr.bf16.mxu0 0
    %3393 = vmatpush1.bf16.msra.mxu0 0
    %3394 = vmatprep.subr.bf16.mxu0 0
    %3395 = vmatpush1.bf16.msra.mxu0 0
    %3396 = vmatprep.subr.bf16.mxu0 0
    %3397 = vmatpush1.bf16.msra.mxu0 0
    %3398 = vmatprep.subr.bf16.mxu0 0
    %3399 = vmatpush1.bf16.msra.mxu0 0
    %3400 = vmatprep.subr.bf16.mxu0 0
    %3401 = vmatpush1.bf16.msra.mxu0 0
    %3402 = vmatprep.subr.bf16.mxu0 0
    %3403 = vmatpush1.bf16.msra.mxu0 0
    %3404 = vmatprep.subr.bf16.mxu0 0
    %3405 = vmatpush1.bf16.msra.mxu0 0
    %3406 = vmatprep.subr.bf16.mxu0 0
    %3407 = vmatpush1.bf16.msra.mxu0 0
    %3408 = vmatprep.subr.bf16.mxu0 0
    %3409 = vmatpush1.bf16.msra.mxu0 0
    %3410 = vmatprep.subr.bf16.mxu0 0
    %3411 = vmatpush1.bf16.msra.mxu0 0
    %3412 = vmatprep.subr.bf16.mxu0 0
    %3413 = vmatpush1.bf16.msra.mxu0 0
    %3414 = vmatprep.subr.bf16.mxu0 0
    %3415 = vmatpush1.bf16.msra.mxu0 0
    %3416 = vmatprep.subr.bf16.mxu0 0
    %3417 = vmatpush1.bf16.msra.mxu0 0
    %3418 = vmatprep.subr.bf16.mxu0 0
    %3419 = vmatpush1.bf16.msra.mxu0 0
    %3420 = vmatprep.mubr.bf16.mxu0 0
    %3421 = vmatmul.mubr.bf16.gmra.mrb[0].mxu0 %v3158
    %v3422 = vpop.f32.mrb[0].mxu0
    %v3423 = vadd.f32 %v3098, %v3422
    %v3424 = vpop.f32.mrb[0].mxu0
    %v3425 = vadd.f32 %v3100, %v3424
    %v3426 = vpop.f32.mrb[0].mxu0
    %v3427 = vadd.f32 %v3102, %v3426
    %v3428 = vpop.f32.mrb[0].mxu0
    %v3429 = vadd.f32 %v3104, %v3428
    %3430 = vmatprep.mubr.bf16.mxu0 0
    %3431 = vmatmul.mubr.bf16.gmra.mrb[0].mxu0 %v3161
    %v3432 = vpop.f32.mrb[0].mxu0
    %v3433 = vadd.f32 %v3108, %v3432
    %v3434 = vpop.f32.mrb[0].mxu0
    %v3435 = vadd.f32 %v3110, %v3434
    %v3436 = vpop.f32.mrb[0].mxu0
    %v3437 = vadd.f32 %v3112, %v3436
    %v3438 = vpop.f32.mrb[0].mxu0
    %v3439 = vadd.f32 %v3114, %v3438
    %3440 = vmatprep.mubr.bf16.mxu0 0
    %3441 = vmatmul.mubr.bf16.gmra.mrb[0].mxu0 %v3164
    %v3442 = vpop.f32.mrb[0].mxu0
    %v3443 = vadd.f32 %v3118, %v3442
    %v3444 = vpop.f32.mrb[0].mxu0
    %v3445 = vadd.f32 %v3120, %v3444
    %v3446 = vpop.f32.mrb[0].mxu0
    %v3447 = vadd.f32 %v3122, %v3446
    %v3448 = vpop.f32.mrb[0].mxu0
    %v3449 = vadd.f32 %v3124, %v3448
    %3450 = vmatprep.mubr.bf16.mxu0 0
    %3451 = vmatmul.mubr.bf16.gmra.mrb[0].mxu0 %v3167
    %v3452 = vpop.f32.mrb[0].mxu0
    %v3453 = vadd.f32 %v3128, %v3452
    %v3454 = vpop.f32.mrb[0].mxu0
    %v3455 = vadd.f32 %v3130, %v3454
    %v3456 = vpop.f32.mrb[0].mxu0
    %v3457 = vadd.f32 %v3132, %v3456
    %v3458 = vpop.f32.mrb[0].mxu0
    %v3459 = vadd.f32 %v3134, %v3458
    %3460 = vdwg.mxu0
    %v3461 = vld [vmem:[#allocation8 + $0xb0] sm:$0xff]
    %v3462 = vld [vmem:[#allocation8 + $0xb8] sm:$0xff]
    %v3463 = vld [vmem:[#allocation8 + $0xc0] sm:$0xff]
    %v3464 = vld [vmem:[#allocation8 + $0xc8] sm:$0xff]
    %v3465 = vld [vmem:[#allocation8 + $0xd0] sm:$0xff]
    %v3466 = vld [vmem:[#allocation8 + $0xd8] sm:$0xff]
    %v3467 = vld [vmem:[#allocation8 + $0xe0] sm:$0xff]
    %v3468 = vld [vmem:[#allocation8 + $0xe8] sm:$0xff]
    %3470 = vset.pattern.permute.xlu0 0
    %3471 = vperm.xlu0 %3470, %v3461
    %v3472 = vpop.permute.xlu0 %3471
    %3475 = vset.pattern.permute.xlu0 0
    %3476 = vperm.xlu0 %3475, %v3462
    %v3477 = vpop.permute.xlu0 %3476
    %3480 = vset.pattern.permute.xlu0 0
    %3481 = vperm.xlu0 %3480, %v3463
    %v3482 = vpop.permute.xlu0 %3481
    %3485 = vset.pattern.permute.xlu0 0
    %3486 = vperm.xlu0 %3485, %v3464
    %v3487 = vpop.permute.xlu0 %3486
    %3490 = vset.pattern.permute.xlu0 0
    %3491 = vperm.xlu0 %3490, %v3465
    %v3492 = vpop.permute.xlu0 %3491
    %3495 = vset.pattern.permute.xlu0 0
    %3496 = vperm.xlu0 %3495, %v3466
    %v3497 = vpop.permute.xlu0 %3496
    %3500 = vset.pattern.permute.xlu0 0
    %3501 = vperm.xlu0 %3500, %v3467
    %v3502 = vpop.permute.xlu0 %3501
    %3505 = vset.pattern.permute.xlu0 0
    %3506 = vperm.xlu0 %3505, %v3468
    %v3507 = vpop.permute.xlu0 %3506
    %v3509 = vadd.f32 %v3204, %v3472
    %v3510 = vadd.f32 %v3206, %v3472
    %v3511 = vadd.f32 %v3277, %v3472
    %v3512 = vadd.f32 %v3279, %v3472
    %v3513 = vadd.f32 %v3350, %v3472
    %v3514 = vadd.f32 %v3352, %v3472
    %v3515 = vadd.f32 %v3423, %v3472
    %v3516 = vadd.f32 %v3425, %v3472
    %v3517 = vadd.f32 %v3208, %v3477
    %v3518 = vadd.f32 %v3210, %v3477
    %v3519 = vadd.f32 %v3281, %v3477
    %v3520 = vadd.f32 %v3283, %v3477
    %v3521 = vadd.f32 %v3354, %v3477
    %v3522 = vadd.f32 %v3356, %v3477
    %v3523 = vadd.f32 %v3427, %v3477
    %v3524 = vadd.f32 %v3429, %v3477
    %v3525 = vadd.f32 %v3214, %v3482
    %v3526 = vadd.f32 %v3216, %v3482
    %v3527 = vadd.f32 %v3287, %v3482
    %v3528 = vadd.f32 %v3289, %v3482
    %v3529 = vadd.f32 %v3360, %v3482
    %v3530 = vadd.f32 %v3362, %v3482
    %v3531 = vadd.f32 %v3433, %v3482
    %v3532 = vadd.f32 %v3435, %v3482
    %v3533 = vadd.f32 %v3218, %v3487
    %v3534 = vadd.f32 %v3220, %v3487
    %v3535 = vadd.f32 %v3291, %v3487
    %v3536 = vadd.f32 %v3293, %v3487
    %v3537 = vadd.f32 %v3364, %v3487
    %v3538 = vadd.f32 %v3366, %v3487
    %v3539 = vadd.f32 %v3437, %v3487
    %v3540 = vadd.f32 %v3439, %v3487
    %v3541 = vadd.f32 %v3224, %v3492
    %v3542 = vadd.f32 %v3226, %v3492
    %v3543 = vadd.f32 %v3297, %v3492
    %v3544 = vadd.f32 %v3299, %v3492
    %v3545 = vadd.f32 %v3370, %v3492
    %v3546 = vadd.f32 %v3372, %v3492
    %v3547 = vadd.f32 %v3443, %v3492
    %v3548 = vadd.f32 %v3445, %v3492
    %v3549 = vadd.f32 %v3228, %v3497
    %v3550 = vadd.f32 %v3230, %v3497
    %v3551 = vadd.f32 %v3301, %v3497
    %v3552 = vadd.f32 %v3303, %v3497
    %v3553 = vadd.f32 %v3374, %v3497
    %v3554 = vadd.f32 %v3376, %v3497
    %v3555 = vadd.f32 %v3447, %v3497
    %v3556 = vadd.f32 %v3449, %v3497
    %v3557 = vadd.f32 %v3234, %v3502
    %v3558 = vadd.f32 %v3236, %v3502
    %v3559 = vadd.f32 %v3307, %v3502
    %v3560 = vadd.f32 %v3309, %v3502
    %v3561 = vadd.f32 %v3380, %v3502
    %v3562 = vadd.f32 %v3382, %v3502
    %v3563 = vadd.f32 %v3453, %v3502
    %v3564 = vadd.f32 %v3455, %v3502
    %v3565 = vadd.f32 %v3238, %v3507
    %v3566 = vadd.f32 %v3240, %v3507
    %v3567 = vadd.f32 %v3311, %v3507
    %v3568 = vadd.f32 %v3313, %v3507
    %v3569 = vadd.f32 %v3384, %v3507
    %v3570 = vadd.f32 %v3386, %v3507
    %v3571 = vadd.f32 %v3457, %v3507
    %v3572 = vadd.f32 %v3459, %v3507
    %v3573 = vmax.f32 %v3509, 0.0
    %v3574 = vmax.f32 %v3510, 0.0
    %v3575 = vmax.f32 %v3511, 0.0
    %v3576 = vmax.f32 %v3512, 0.0
    %v3577 = vmax.f32 %v3513, 0.0
    %v3578 = vmax.f32 %v3514, 0.0
    %v3579 = vmax.f32 %v3515, 0.0
    %v3580 = vmax.f32 %v3516, 0.0
    %v3581 = vmax.f32 %v3517, 0.0
    %v3582 = vmax.f32 %v3518, 0.0
    %v3583 = vmax.f32 %v3519, 0.0
    %v3584 = vmax.f32 %v3520, 0.0
    %v3585 = vmax.f32 %v3521, 0.0
    %v3586 = vmax.f32 %v3522, 0.0
    %v3587 = vmax.f32 %v3523, 0.0
    %v3588 = vmax.f32 %v3524, 0.0
    %v3589 = vmax.f32 %v3525, 0.0
    %v3590 = vmax.f32 %v3526, 0.0
    %v3591 = vmax.f32 %v3527, 0.0
    %v3592 = vmax.f32 %v3528, 0.0
    %v3593 = vmax.f32 %v3529, 0.0
    %v3594 = vmax.f32 %v3530, 0.0
    %v3595 = vmax.f32 %v3531, 0.0
    %v3596 = vmax.f32 %v3532, 0.0
    %v3597 = vmax.f32 %v3533, 0.0
    %v3598 = vmax.f32 %v3534, 0.0
    %v3599 = vmax.f32 %v3535, 0.0
    %v3600 = vmax.f32 %v3536, 0.0
    %v3601 = vmax.f32 %v3537, 0.0
    %v3602 = vmax.f32 %v3538, 0.0
    %v3603 = vmax.f32 %v3539, 0.0
    %v3604 = vmax.f32 %v3540, 0.0
    %v3605 = vmax.f32 %v3541, 0.0
    %v3606 = vmax.f32 %v3542, 0.0
    %v3607 = vmax.f32 %v3543, 0.0
    %v3608 = vmax.f32 %v3544, 0.0
    %v3609 = vmax.f32 %v3545, 0.0
    %v3610 = vmax.f32 %v3546, 0.0
    %v3611 = vmax.f32 %v3547, 0.0
    %v3612 = vmax.f32 %v3548, 0.0
    %v3613 = vmax.f32 %v3549, 0.0
    %v3614 = vmax.f32 %v3550, 0.0
    %v3615 = vmax.f32 %v3551, 0.0
    %v3616 = vmax.f32 %v3552, 0.0
    %v3617 = vmax.f32 %v3553, 0.0
    %v3618 = vmax.f32 %v3554, 0.0
    %v3619 = vmax.f32 %v3555, 0.0
    %v3620 = vmax.f32 %v3556, 0.0
    %v3621 = vmax.f32 %v3557, 0.0
    %v3622 = vmax.f32 %v3558, 0.0
    %v3623 = vmax.f32 %v3559, 0.0
    %v3624 = vmax.f32 %v3560, 0.0
    %v3625 = vmax.f32 %v3561, 0.0
    %v3626 = vmax.f32 %v3562, 0.0
    %v3627 = vmax.f32 %v3563, 0.0
    %v3628 = vmax.f32 %v3564, 0.0
    %v3629 = vmax.f32 %v3565, 0.0
    %v3630 = vmax.f32 %v3566, 0.0
    %v3631 = vmax.f32 %v3567, 0.0
    %v3632 = vmax.f32 %v3568, 0.0
    %v3633 = vmax.f32 %v3569, 0.0
    %v3634 = vmax.f32 %v3570, 0.0
    %v3635 = vmax.f32 %v3571, 0.0
    %v3636 = vmax.f32 %v3572, 0.0
    %v3637 = vpack.c.bf16 %v3581, %v3573
    %v3638 = vpack.c.bf16 %v3582, %v3574
    %v3639 = vpack.c.bf16 %v3583, %v3575
    %v3640 = vpack.c.bf16 %v3584, %v3576
    %v3641 = vpack.c.bf16 %v3585, %v3577
    %v3642 = vpack.c.bf16 %v3586, %v3578
    %v3643 = vpack.c.bf16 %v3587, %v3579
    %v3644 = vpack.c.bf16 %v3588, %v3580
    %v3645 = vpack.c.bf16 %v3597, %v3589
    %v3646 = vpack.c.bf16 %v3598, %v3590
    %v3647 = vpack.c.bf16 %v3599, %v3591
    %v3648 = vpack.c.bf16 %v3600, %v3592
    %v3649 = vpack.c.bf16 %v3601, %v3593
    %v3650 = vpack.c.bf16 %v3602, %v3594
    %v3651 = vpack.c.bf16 %v3603, %v3595
    %v3652 = vpack.c.bf16 %v3604, %v3596
    %v3653 = vpack.c.bf16 %v3613, %v3605
    %v3654 = vpack.c.bf16 %v3614, %v3606
    %v3655 = vpack.c.bf16 %v3615, %v3607
    %v3656 = vpack.c.bf16 %v3616, %v3608
    %v3657 = vpack.c.bf16 %v3617, %v3609
    %v3658 = vpack.c.bf16 %v3618, %v3610
    %v3659 = vpack.c.bf16 %v3619, %v3611
    %v3660 = vpack.c.bf16 %v3620, %v3612
    %v3661 = vpack.c.bf16 %v3629, %v3621
    %v3662 = vpack.c.bf16 %v3630, %v3622
    %v3663 = vpack.c.bf16 %v3631, %v3623
    %v3664 = vpack.c.bf16 %v3632, %v3624
    %v3665 = vpack.c.bf16 %v3633, %v3625
    %v3666 = vpack.c.bf16 %v3634, %v3626
    %v3667 = vpack.c.bf16 %v3635, %v3627
    %v3668 = vpack.c.bf16 %v3636, %v3628
    %v3669 = vld [vmem:[#allocation7 + $0xe0] sm:$0xf]
    %v3670 = vld [vmem:[#allocation7 + $0xe4] sm:$0xf]
    %v3671 = vld [vmem:[#allocation7 + $0xe8] sm:$0xf]
    %v3672 = vld [vmem:[#allocation7 + $0xec] sm:$0xf]
    %v3673 = vld [vmem:[#allocation8 + $0xf0] sm:$0xff]
    %v3674 = vld [vmem:[#allocation8 + $0xf8] sm:$0xff]
    %v3675 = vld [vmem:[#allocation8 + $0x100] sm:$0xff]
    %v3676 = vld [vmem:[#allocation8 + $0x108] sm:$0xff]
    %3678 = vset.pattern.permute.xlu0 0
    %3679 = vperm.xlu0 %3678, %v3673
    %v3680 = vpop.permute.xlu0 %3679
    %3683 = vset.pattern.permute.xlu0 0
    %3684 = vperm.xlu0 %3683, %v3674
    %v3685 = vpop.permute.xlu0 %3684
    %3688 = vset.pattern.permute.xlu0 0
    %3689 = vperm.xlu0 %3688, %v3675
    %v3690 = vpop.permute.xlu0 %3689
    %3693 = vset.pattern.permute.xlu0 0
    %3694 = vperm.xlu0 %3693, %v3676
    %v3695 = vpop.permute.xlu0 %3694
    %v3701 = vunpack.c.l.b16 %v3669
    %v3702 = vunpack.c.l.b16 %v3670
    %v3703 = vunpack.c.l.b16 %v3671
    %v3704 = vunpack.c.l.b16 %v3672
    %v3705 = vpack.c.b16 %v3702, %v3701
    %v3706 = vpack.c.b16 %v3704, %v3703
    %v3708 = vsel %vm2528, %v3705, 0
    %v3711 = vsel %vm2528, %v3706, 0
    %3713 = vmatprep.subr.bf16.mxu0 %v3638
    %3714 = vmatpush1.bf16.msra.mxu0 %v3637
    %3715 = vmatprep.subr.bf16.mxu0 %v3646
    %3716 = vmatpush1.bf16.msra.mxu0 %v3645
    %3717 = vmatprep.subr.bf16.mxu0 %v3654
    %3718 = vmatpush1.bf16.msra.mxu0 %v3653
    %3719 = vmatprep.subr.bf16.mxu0 %v3662
    %3720 = vmatpush1.bf16.msra.mxu0 %v3661
    %3721 = vmatprep.subr.bf16.mxu0 0
    %3722 = vmatpush1.bf16.msra.mxu0 0
    %3723 = vmatprep.subr.bf16.mxu0 0
    %3724 = vmatpush1.bf16.msra.mxu0 0
    %3725 = vmatprep.subr.bf16.mxu0 0
    %3726 = vmatpush1.bf16.msra.mxu0 0
    %3727 = vmatprep.subr.bf16.mxu0 0
    %3728 = vmatpush1.bf16.msra.mxu0 0
    %3729 = vmatprep.subr.bf16.mxu0 0
    %3730 = vmatpush1.bf16.msra.mxu0 0
    %3731 = vmatprep.subr.bf16.mxu0 0
    %3732 = vmatpush1.bf16.msra.mxu0 0
    %3733 = vmatprep.subr.bf16.mxu0 0
    %3734 = vmatpush1.bf16.msra.mxu0 0
    %3735 = vmatprep.subr.bf16.mxu0 0
    %3736 = vmatpush1.bf16.msra.mxu0 0
    %3737 = vmatprep.subr.bf16.mxu0 0
    %3738 = vmatpush1.bf16.msra.mxu0 0
    %3739 = vmatprep.subr.bf16.mxu0 0
    %3740 = vmatpush1.bf16.msra.mxu0 0
    %3741 = vmatprep.subr.bf16.mxu0 0
    %3742 = vmatpush1.bf16.msra.mxu0 0
    %3743 = vmatprep.subr.bf16.mxu0 0
    %3744 = vmatpush1.bf16.msra.mxu0 0
    %3745 = vmatprep.mubr.bf16.mxu0 0
    %3746 = vmatmul.mubr.bf16.gmra.mrb[0].mxu0 %v3708
    %v3747 = vpop.f32.mrb[0].mxu0
    %v3748 = vadd.f32 %v3680, %v3747
    %v3749 = vpop.f32.mrb[0].mxu0
    %v3750 = vadd.f32 %v3680, %v3749
    %v3751 = vpop.f32.mrb[0].mxu0
    %v3752 = vadd.f32 %v3685, %v3751
    %v3753 = vpop.f32.mrb[0].mxu0
    %v3754 = vadd.f32 %v3685, %v3753
    %3755 = vmatprep.mubr.bf16.mxu0 0
    %3756 = vmatmul.mubr.bf16.gmra.mrb[0].mxu0 %v3711
    %v3757 = vpop.f32.mrb[0].mxu0
    %v3758 = vadd.f32 %v3690, %v3757
    %v3759 = vpop.f32.mrb[0].mxu0
    %v3760 = vadd.f32 %v3690, %v3759
    %v3761 = vpop.f32.mrb[0].mxu0
    %v3762 = vadd.f32 %v3695, %v3761
    %v3763 = vpop.f32.mrb[0].mxu0
    %v3764 = vadd.f32 %v3695, %v3763
    %3765 = vdwg.mxu0
    %3766 = vmatprep.subr.bf16.mxu0 %v3640
    %3767 = vmatpush1.bf16.msra.mxu0 %v3639
    %3768 = vmatprep.subr.bf16.mxu0 %v3648
    %3769 = vmatpush1.bf16.msra.mxu0 %v3647
    %3770 = vmatprep.subr.bf16.mxu0 %v3656
    %3771 = vmatpush1.bf16.msra.mxu0 %v3655
    %3772 = vmatprep.subr.bf16.mxu0 %v3664
    %3773 = vmatpush1.bf16.msra.mxu0 %v3663
    %3774 = vmatprep.subr.bf16.mxu0 0
    %3775 = vmatpush1.bf16.msra.mxu0 0
    %3776 = vmatprep.subr.bf16.mxu0 0
    %3777 = vmatpush1.bf16.msra.mxu0 0
    %3778 = vmatprep.subr.bf16.mxu0 0
    %3779 = vmatpush1.bf16.msra.mxu0 0
    %3780 = vmatprep.subr.bf16.mxu0 0
    %3781 = vmatpush1.bf16.msra.mxu0 0
    %3782 = vmatprep.subr.bf16.mxu0 0
    %3783 = vmatpush1.bf16.msra.mxu0 0
    %3784 = vmatprep.subr.bf16.mxu0 0
    %3785 = vmatpush1.bf16.msra.mxu0 0
    %3786 = vmatprep.subr.bf16.mxu0 0
    %3787 = vmatpush1.bf16.msra.mxu0 0
    %3788 = vmatprep.subr.bf16.mxu0 0
    %3789 = vmatpush1.bf16.msra.mxu0 0
    %3790 = vmatprep.subr.bf16.mxu0 0
    %3791 = vmatpush1.bf16.msra.mxu0 0
    %3792 = vmatprep.subr.bf16.mxu0 0
    %3793 = vmatpush1.bf16.msra.mxu0 0
    %3794 = vmatprep.subr.bf16.mxu0 0
    %3795 = vmatpush1.bf16.msra.mxu0 0
    %3796 = vmatprep.subr.bf16.mxu0 0
    %3797 = vmatpush1.bf16.msra.mxu0 0
    %3798 = vmatprep.mubr.bf16.mxu0 0
    %3799 = vmatmul.mubr.bf16.gmra.mrb[0].mxu0 %v3708
    %v3800 = vpop.f32.mrb[0].mxu0
    %v3801 = vadd.f32 %v3680, %v3800
    %v3802 = vpop.f32.mrb[0].mxu0
    %v3803 = vadd.f32 %v3680, %v3802
    %v3804 = vpop.f32.mrb[0].mxu0
    %v3805 = vadd.f32 %v3685, %v3804
    %v3806 = vpop.f32.mrb[0].mxu0
    %v3807 = vadd.f32 %v3685, %v3806
    %3808 = vmatprep.mubr.bf16.mxu0 0
    %3809 = vmatmul.mubr.bf16.gmra.mrb[0].mxu0 %v3711
    %v3810 = vpop.f32.mrb[0].mxu0
    %v3811 = vadd.f32 %v3690, %v3810
    %v3812 = vpop.f32.mrb[0].mxu0
    %v3813 = vadd.f32 %v3690, %v3812
    %v3814 = vpop.f32.mrb[0].mxu0
    %v3815 = vadd.f32 %v3695, %v3814
    %v3816 = vpop.f32.mrb[0].mxu0
    %v3817 = vadd.f32 %v3695, %v3816
    %3818 = vdwg.mxu0
    %3819 = vmatprep.subr.bf16.mxu0 %v3642
    %3820 = vmatpush1.bf16.msra.mxu0 %v3641
    %3821 = vmatprep.subr.bf16.mxu0 %v3650
    %3822 = vmatpush1.bf16.msra.mxu0 %v3649
    %3823 = vmatprep.subr.bf16.mxu0 %v3658
    %3824 = vmatpush1.bf16.msra.mxu0 %v3657
    %3825 = vmatprep.subr.bf16.mxu0 %v3666
    %3826 = vmatpush1.bf16.msra.mxu0 %v3665
    %3827 = vmatprep.subr.bf16.mxu0 0
    %3828 = vmatpush1.bf16.msra.mxu0 0
    %3829 = vmatprep.subr.bf16.mxu0 0
    %3830 = vmatpush1.bf16.msra.mxu0 0
    %3831 = vmatprep.subr.bf16.mxu0 0
    %3832 = vmatpush1.bf16.msra.mxu0 0
    %3833 = vmatprep.subr.bf16.mxu0 0
    %3834 = vmatpush1.bf16.msra.mxu0 0
    %3835 = vmatprep.subr.bf16.mxu0 0
    %3836 = vmatpush1.bf16.msra.mxu0 0
    %3837 = vmatprep.subr.bf16.mxu0 0
    %3838 = vmatpush1.bf16.msra.mxu0 0
    %3839 = vmatprep.subr.bf16.mxu0 0
    %3840 = vmatpush1.bf16.msra.mxu0 0
    %3841 = vmatprep.subr.bf16.mxu0 0
    %3842 = vmatpush1.bf16.msra.mxu0 0
    %3843 = vmatprep.subr.bf16.mxu0 0
    %3844 = vmatpush1.bf16.msra.mxu0 0
    %3845 = vmatprep.subr.bf16.mxu0 0
    %3846 = vmatpush1.bf16.msra.mxu0 0
    %3847 = vmatprep.subr.bf16.mxu0 0
    %3848 = vmatpush1.bf16.msra.mxu0 0
    %3849 = vmatprep.subr.bf16.mxu0 0
    %3850 = vmatpush1.bf16.msra.mxu0 0
    %3851 = vmatprep.mubr.bf16.mxu0 0
    %3852 = vmatmul.mubr.bf16.gmra.mrb[0].mxu0 %v3708
    %v3853 = vpop.f32.mrb[0].mxu0
    %v3854 = vadd.f32 %v3680, %v3853
    %v3855 = vpop.f32.mrb[0].mxu0
    %v3856 = vadd.f32 %v3680, %v3855
    %v3857 = vpop.f32.mrb[0].mxu0
    %v3858 = vadd.f32 %v3685, %v3857
    %v3859 = vpop.f32.mrb[0].mxu0
    %v3860 = vadd.f32 %v3685, %v3859
    %3861 = vmatprep.mubr.bf16.mxu0 0
    %3862 = vmatmul.mubr.bf16.gmra.mrb[0].mxu0 %v3711
    %v3863 = vpop.f32.mrb[0].mxu0
    %v3864 = vadd.f32 %v3690, %v3863
    %v3865 = vpop.f32.mrb[0].mxu0
    %v3866 = vadd.f32 %v3690, %v3865
    %v3867 = vpop.f32.mrb[0].mxu0
    %v3868 = vadd.f32 %v3695, %v3867
    %v3869 = vpop.f32.mrb[0].mxu0
    %v3870 = vadd.f32 %v3695, %v3869
    %3871 = vdwg.mxu0
    %3872 = vmatprep.subr.bf16.mxu0 %v3644
    %3873 = vmatpush1.bf16.msra.mxu0 %v3643
    %3874 = vmatprep.subr.bf16.mxu0 %v3652
    %3875 = vmatpush1.bf16.msra.mxu0 %v3651
    %3876 = vmatprep.subr.bf16.mxu0 %v3660
    %3877 = vmatpush1.bf16.msra.mxu0 %v3659
    %3878 = vmatprep.subr.bf16.mxu0 %v3668
    %3879 = vmatpush1.bf16.msra.mxu0 %v3667
    %3880 = vmatprep.subr.bf16.mxu0 0
    %3881 = vmatpush1.bf16.msra.mxu0 0
    %3882 = vmatprep.subr.bf16.mxu0 0
    %3883 = vmatpush1.bf16.msra.mxu0 0
    %3884 = vmatprep.subr.bf16.mxu0 0
    %3885 = vmatpush1.bf16.msra.mxu0 0
    %3886 = vmatprep.subr.bf16.mxu0 0
    %3887 = vmatpush1.bf16.msra.mxu0 0
    %3888 = vmatprep.subr.bf16.mxu0 0
    %3889 = vmatpush1.bf16.msra.mxu0 0
    %3890 = vmatprep.subr.bf16.mxu0 0
    %3891 = vmatpush1.bf16.msra.mxu0 0
    %3892 = vmatprep.subr.bf16.mxu0 0
    %3893 = vmatpush1.bf16.msra.mxu0 0
    %3894 = vmatprep.subr.bf16.mxu0 0
    %3895 = vmatpush1.bf16.msra.mxu0 0
    %3896 = vmatprep.subr.bf16.mxu0 0
    %3897 = vmatpush1.bf16.msra.mxu0 0
    %3898 = vmatprep.subr.bf16.mxu0 0
    %3899 = vmatpush1.bf16.msra.mxu0 0
    %3900 = vmatprep.subr.bf16.mxu0 0
    %3901 = vmatpush1.bf16.msra.mxu0 0
    %3902 = vmatprep.subr.bf16.mxu0 0
    %3903 = vmatpush1.bf16.msra.mxu0 0
    %3904 = vmatprep.mubr.bf16.mxu0 0
    %3905 = vmatmul.mubr.bf16.gmra.mrb[0].mxu0 %v3708
    %v3906 = vpop.f32.mrb[0].mxu0
    %v3907 = vadd.f32 %v3680, %v3906
    %v3908 = vpop.f32.mrb[0].mxu0
    %v3909 = vadd.f32 %v3680, %v3908
    %v3910 = vpop.f32.mrb[0].mxu0
    %v3911 = vadd.f32 %v3685, %v3910
    %v3912 = vpop.f32.mrb[0].mxu0
    %v3913 = vadd.f32 %v3685, %v3912
    %3914 = vmatprep.mubr.bf16.mxu0 0
    %3915 = vmatmul.mubr.bf16.gmra.mrb[0].mxu0 %v3711
    %v3916 = vpop.f32.mrb[0].mxu0
    %v3917 = vadd.f32 %v3690, %v3916
    %v3918 = vpop.f32.mrb[0].mxu0
    %v3919 = vadd.f32 %v3690, %v3918
    %v3920 = vpop.f32.mrb[0].mxu0
    %v3921 = vadd.f32 %v3695, %v3920
    %v3922 = vpop.f32.mrb[0].mxu0
    %v3923 = vadd.f32 %v3695, %v3922
    %3924 = vdwg.mxu0
    %v3925 = vmax.f32 %v3748, 0.0
    %v3926 = vmax.f32 %v3750, 0.0
    %v3927 = vmax.f32 %v3801, 0.0
    %v3928 = vmax.f32 %v3803, 0.0
    %v3929 = vmax.f32 %v3854, 0.0
    %v3930 = vmax.f32 %v3856, 0.0
    %v3931 = vmax.f32 %v3907, 0.0
    %v3932 = vmax.f32 %v3909, 0.0
    %v3933 = vmax.f32 %v3752, 0.0
    %v3934 = vmax.f32 %v3754, 0.0
    %v3935 = vmax.f32 %v3805, 0.0
    %v3936 = vmax.f32 %v3807, 0.0
    %v3937 = vmax.f32 %v3858, 0.0
    %v3938 = vmax.f32 %v3860, 0.0
    %v3939 = vmax.f32 %v3911, 0.0
    %v3940 = vmax.f32 %v3913, 0.0
    %v3941 = vmax.f32 %v3758, 0.0
    %v3942 = vmax.f32 %v3760, 0.0
    %v3943 = vmax.f32 %v3811, 0.0
    %v3944 = vmax.f32 %v3813, 0.0
    %v3945 = vmax.f32 %v3864, 0.0
    %v3946 = vmax.f32 %v3866, 0.0
    %v3947 = vmax.f32 %v3917, 0.0
    %v3948 = vmax.f32 %v3919, 0.0
    %v3949 = vmax.f32 %v3762, 0.0
    %v3950 = vmax.f32 %v3764, 0.0
    %v3951 = vmax.f32 %v3815, 0.0
    %v3952 = vmax.f32 %v3817, 0.0
    %v3953 = vmax.f32 %v3868, 0.0
    %v3954 = vmax.f32 %v3870, 0.0
    %v3955 = vmax.f32 %v3921, 0.0
    %v3956 = vmax.f32 %v3923, 0.0
    %v3957 = vpack.c.bf16 %v3933, %v3925
    %v3958 = vpack.c.bf16 %v3934, %v3926
    %v3959 = vpack.c.bf16 %v3935, %v3927
    %v3960 = vpack.c.bf16 %v3936, %v3928
    %v3961 = vpack.c.bf16 %v3937, %v3929
    %v3962 = vpack.c.bf16 %v3938, %v3930
    %v3963 = vpack.c.bf16 %v3939, %v3931
    %v3964 = vpack.c.bf16 %v3940, %v3932
    %v3965 = vpack.c.bf16 %v3949, %v3941
    %v3966 = vpack.c.bf16 %v3950, %v3942
    %v3967 = vpack.c.bf16 %v3951, %v3943
    %v3968 = vpack.c.bf16 %v3952, %v3944
    %v3969 = vpack.c.bf16 %v3953, %v3945
    %v3970 = vpack.c.bf16 %v3954, %v3946
    %v3971 = vpack.c.bf16 %v3955, %v3947
    %v3972 = vpack.c.bf16 %v3956, %v3948
    %v3973 = vld [vmem:[#allocation7 + $0xf0] sm:$0xf]
    %v3974 = vld [vmem:[#allocation7 + $0xf4] sm:$0xf]
    %v3975 = vld [vmem:[#allocation8 + $0x110] sm:$0xff]
    %v3976 = vld [vmem:[#allocation8 + $0x118] sm:$0xff]
    %3978 = vset.pattern.permute.xlu0 0
    %3979 = vperm.xlu0 %3978, %v3975
    %v3980 = vpop.permute.xlu0 %3979
    %3983 = vset.pattern.permute.xlu0 0
    %3984 = vperm.xlu0 %3983, %v3976
    %v3985 = vpop.permute.xlu0 %3984
    %v3989 = vunpack.c.l.b16 %v3973
    %v3990 = vunpack.c.l.b16 %v3974
    %v3991 = vpack.c.b16 %v3990, %v3989
    %v3993 = vsel %vm3156, %v3991, 0
    %3995 = vmatprep.subr.bf16.mxu0 %v3958
    %3996 = vmatpush1.bf16.msra.mxu0 %v3957
    %3997 = vmatprep.subr.bf16.mxu0 %v3966
    %3998 = vmatpush1.bf16.msra.mxu0 %v3965
    %3999 = vmatprep.subr.bf16.mxu0 0
    %4000 = vmatpush1.bf16.msra.mxu0 0
    %4001 = vmatprep.subr.bf16.mxu0 0
    %4002 = vmatpush1.bf16.msra.mxu0 0
    %4003 = vmatprep.subr.bf16.mxu0 0
    %4004 = vmatpush1.bf16.msra.mxu0 0
    %4005 = vmatprep.subr.bf16.mxu0 0
    %4006 = vmatpush1.bf16.msra.mxu0 0
    %4007 = vmatprep.subr.bf16.mxu0 0
    %4008 = vmatpush1.bf16.msra.mxu0 0
    %4009 = vmatprep.subr.bf16.mxu0 0
    %4010 = vmatpush1.bf16.msra.mxu0 0
    %4011 = vmatprep.subr.bf16.mxu0 0
    %4012 = vmatpush1.bf16.msra.mxu0 0
    %4013 = vmatprep.subr.bf16.mxu0 0
    %4014 = vmatpush1.bf16.msra.mxu0 0
    %4015 = vmatprep.subr.bf16.mxu0 0
    %4016 = vmatpush1.bf16.msra.mxu0 0
    %4017 = vmatprep.subr.bf16.mxu0 0
    %4018 = vmatpush1.bf16.msra.mxu0 0
    %4019 = vmatprep.subr.bf16.mxu0 0
    %4020 = vmatpush1.bf16.msra.mxu0 0
    %4021 = vmatprep.subr.bf16.mxu0 0
    %4022 = vmatpush1.bf16.msra.mxu0 0
    %4023 = vmatprep.subr.bf16.mxu0 0
    %4024 = vmatpush1.bf16.msra.mxu0 0
    %4025 = vmatprep.subr.bf16.mxu0 0
    %4026 = vmatpush1.bf16.msra.mxu0 0
    %4027 = vmatprep.mubr.bf16.mxu0 0
    %4028 = vmatmul.mubr.bf16.gmra.mrb[0].mxu0 %v3993
    %v4029 = vpop.f32.mrb[0].mxu0
    %v4030 = vadd.f32 %v3980, %v4029
    %v4031 = vpop.f32.mrb[0].mxu0
    %v4032 = vadd.f32 %v3980, %v4031
    %v4033 = vpop.f32.mrb[0].mxu0
    %v4034 = vadd.f32 %v3985, %v4033
    %v4035 = vpop.f32.mrb[0].mxu0
    %v4036 = vadd.f32 %v3985, %v4035
    %4037 = vdwg.mxu0
    %4038 = vmatprep.subr.bf16.mxu0 %v3960
    %4039 = vmatpush1.bf16.msra.mxu0 %v3959
    %4040 = vmatprep.subr.bf16.mxu0 %v3968
    %4041 = vmatpush1.bf16.msra.mxu0 %v3967
    %4042 = vmatprep.subr.bf16.mxu0 0
    %4043 = vmatpush1.bf16.msra.mxu0 0
    %4044 = vmatprep.subr.bf16.mxu0 0
    %4045 = vmatpush1.bf16.msra.mxu0 0
    %4046 = vmatprep.subr.bf16.mxu0 0
    %4047 = vmatpush1.bf16.msra.mxu0 0
    %4048 = vmatprep.subr.bf16.mxu0 0
    %4049 = vmatpush1.bf16.msra.mxu0 0
    %4050 = vmatprep.subr.bf16.mxu0 0
    %4051 = vmatpush1.bf16.msra.mxu0 0
    %4052 = vmatprep.subr.bf16.mxu0 0
    %4053 = vmatpush1.bf16.msra.mxu0 0
    %4054 = vmatprep.subr.bf16.mxu0 0
    %4055 = vmatpush1.bf16.msra.mxu0 0
    %4056 = vmatprep.subr.bf16.mxu0 0
    %4057 = vmatpush1.bf16.msra.mxu0 0
    %4058 = vmatprep.subr.bf16.mxu0 0
    %4059 = vmatpush1.bf16.msra.mxu0 0
    %4060 = vmatprep.subr.bf16.mxu0 0
    %4061 = vmatpush1.bf16.msra.mxu0 0
    %4062 = vmatprep.subr.bf16.mxu0 0
    %4063 = vmatpush1.bf16.msra.mxu0 0
    %4064 = vmatprep.subr.bf16.mxu0 0
    %4065 = vmatpush1.bf16.msra.mxu0 0
    %4066 = vmatprep.subr.bf16.mxu0 0
    %4067 = vmatpush1.bf16.msra.mxu0 0
    %4068 = vmatprep.subr.bf16.mxu0 0
    %4069 = vmatpush1.bf16.msra.mxu0 0
    %4070 = vmatprep.mubr.bf16.mxu0 0
    %4071 = vmatmul.mubr.bf16.gmra.mrb[0].mxu0 %v3993
    %v4072 = vpop.f32.mrb[0].mxu0
    %v4073 = vadd.f32 %v3980, %v4072
    %v4074 = vpop.f32.mrb[0].mxu0
    %v4075 = vadd.f32 %v3980, %v4074
    %v4076 = vpop.f32.mrb[0].mxu0
    %v4077 = vadd.f32 %v3985, %v4076
    %v4078 = vpop.f32.mrb[0].mxu0
    %v4079 = vadd.f32 %v3985, %v4078
    %4080 = vdwg.mxu0
    %4081 = vmatprep.subr.bf16.mxu0 %v3962
    %4082 = vmatpush1.bf16.msra.mxu0 %v3961
    %4083 = vmatprep.subr.bf16.mxu0 %v3970
    %4084 = vmatpush1.bf16.msra.mxu0 %v3969
    %4085 = vmatprep.subr.bf16.mxu0 0
    %4086 = vmatpush1.bf16.msra.mxu0 0
    %4087 = vmatprep.subr.bf16.mxu0 0
    %4088 = vmatpush1.bf16.msra.mxu0 0
    %4089 = vmatprep.subr.bf16.mxu0 0
    %4090 = vmatpush1.bf16.msra.mxu0 0
    %4091 = vmatprep.subr.bf16.mxu0 0
    %4092 = vmatpush1.bf16.msra.mxu0 0
    %4093 = vmatprep.subr.bf16.mxu0 0
    %4094 = vmatpush1.bf16.msra.mxu0 0
    %4095 = vmatprep.subr.bf16.mxu0 0
    %4096 = vmatpush1.bf16.msra.mxu0 0
    %4097 = vmatprep.subr.bf16.mxu0 0
    %4098 = vmatpush1.bf16.msra.mxu0 0
    %4099 = vmatprep.subr.bf16.mxu0 0
    %4100 = vmatpush1.bf16.msra.mxu0 0
    %4101 = vmatprep.subr.bf16.mxu0 0
    %4102 = vmatpush1.bf16.msra.mxu0 0
    %4103 = vmatprep.subr.bf16.mxu0 0
    %4104 = vmatpush1.bf16.msra.mxu0 0
    %4105 = vmatprep.subr.bf16.mxu0 0
    %4106 = vmatpush1.bf16.msra.mxu0 0
    %4107 = vmatprep.subr.bf16.mxu0 0
    %4108 = vmatpush1.bf16.msra.mxu0 0
    %4109 = vmatprep.subr.bf16.mxu0 0
    %4110 = vmatpush1.bf16.msra.mxu0 0
    %4111 = vmatprep.subr.bf16.mxu0 0
    %4112 = vmatpush1.bf16.msra.mxu0 0
    %4113 = vmatprep.mubr.bf16.mxu0 0
    %4114 = vmatmul.mubr.bf16.gmra.mrb[0].mxu0 %v3993
    %v4115 = vpop.f32.mrb[0].mxu0
    %v4116 = vadd.f32 %v3980, %v4115
    %v4117 = vpop.f32.mrb[0].mxu0
    %v4118 = vadd.f32 %v3980, %v4117
    %v4119 = vpop.f32.mrb[0].mxu0
    %v4120 = vadd.f32 %v3985, %v4119
    %v4121 = vpop.f32.mrb[0].mxu0
    %v4122 = vadd.f32 %v3985, %v4121
    %4123 = vdwg.mxu0
    %4124 = vmatprep.subr.bf16.mxu0 %v3964
    %4125 = vmatpush1.bf16.msra.mxu0 %v3963
    %4126 = vmatprep.subr.bf16.mxu0 %v3972
    %4127 = vmatpush1.bf16.msra.mxu0 %v3971
    %4128 = vmatprep.subr.bf16.mxu0 0
    %4129 = vmatpush1.bf16.msra.mxu0 0
    %4130 = vmatprep.subr.bf16.mxu0 0
    %4131 = vmatpush1.bf16.msra.mxu0 0
    %4132 = vmatprep.subr.bf16.mxu0 0
    %4133 = vmatpush1.bf16.msra.mxu0 0
    %4134 = vmatprep.subr.bf16.mxu0 0
    %4135 = vmatpush1.bf16.msra.mxu0 0
    %4136 = vmatprep.subr.bf16.mxu0 0
    %4137 = vmatpush1.bf16.msra.mxu0 0
    %4138 = vmatprep.subr.bf16.mxu0 0
    %4139 = vmatpush1.bf16.msra.mxu0 0
    %4140 = vmatprep.subr.bf16.mxu0 0
    %4141 = vmatpush1.bf16.msra.mxu0 0
    %4142 = vmatprep.subr.bf16.mxu0 0
    %4143 = vmatpush1.bf16.msra.mxu0 0
    %4144 = vmatprep.subr.bf16.mxu0 0
    %4145 = vmatpush1.bf16.msra.mxu0 0
    %4146 = vmatprep.subr.bf16.mxu0 0
    %4147 = vmatpush1.bf16.msra.mxu0 0
    %4148 = vmatprep.subr.bf16.mxu0 0
    %4149 = vmatpush1.bf16.msra.mxu0 0
    %4150 = vmatprep.subr.bf16.mxu0 0
    %4151 = vmatpush1.bf16.msra.mxu0 0
    %4152 = vmatprep.subr.bf16.mxu0 0
    %4153 = vmatpush1.bf16.msra.mxu0 0
    %4154 = vmatprep.subr.bf16.mxu0 0
    %4155 = vmatpush1.bf16.msra.mxu0 0
    %4156 = vmatprep.mubr.bf16.mxu0 0
    %4157 = vmatmul.mubr.bf16.gmra.mrb[0].mxu0 %v3993
    %v4158 = vpop.f32.mrb[0].mxu0
    %v4159 = vadd.f32 %v3980, %v4158
    %v4160 = vpop.f32.mrb[0].mxu0
    %v4161 = vadd.f32 %v3980, %v4160
    %v4162 = vpop.f32.mrb[0].mxu0
    %v4163 = vadd.f32 %v3985, %v4162
    %v4164 = vpop.f32.mrb[0].mxu0
    %v4165 = vadd.f32 %v3985, %v4164
    %4166 = vdwg.mxu0
    %v4167 = vmax.f32 %v4030, 0.0
    %v4168 = vmax.f32 %v4032, 0.0
    %v4169 = vmax.f32 %v4073, 0.0
    %v4170 = vmax.f32 %v4075, 0.0
    %v4171 = vmax.f32 %v4116, 0.0
    %v4172 = vmax.f32 %v4118, 0.0
    %v4173 = vmax.f32 %v4159, 0.0
    %v4174 = vmax.f32 %v4161, 0.0
    %v4175 = vmax.f32 %v4034, 0.0
    %v4176 = vmax.f32 %v4036, 0.0
    %v4177 = vmax.f32 %v4077, 0.0
    %v4178 = vmax.f32 %v4079, 0.0
    %v4179 = vmax.f32 %v4120, 0.0
    %v4180 = vmax.f32 %v4122, 0.0
    %v4181 = vmax.f32 %v4163, 0.0
    %v4182 = vmax.f32 %v4165, 0.0
    %v4183 = vpack.c.bf16 %v4175, %v4167
    %v4184 = vpack.c.bf16 %v4176, %v4168
    %v4185 = vpack.c.bf16 %v4177, %v4169
    %v4186 = vpack.c.bf16 %v4178, %v4170
    %v4187 = vpack.c.bf16 %v4179, %v4171
    %v4188 = vpack.c.bf16 %v4180, %v4172
    %v4189 = vpack.c.bf16 %v4181, %v4173
    %v4190 = vpack.c.bf16 %v4182, %v4174
    %v4191 = vld [vmem:[#allocation7 + $0xf8] sm:$0xf]
    %v4192 = vld [vmem:[#allocation7 + $0xfc] sm:$0xf]
    %v4193 = vld [vmem:[#allocation10] sm:$0x1]
    %v4195 = vlaneseq
    %v4196 = vshrl.u32 %v4195, 7
    %v4197 = vsub.s32 0, %v4196
    %v4198 = vrot.slane %v4193, %v4197
    %4200 = vxpose.xlu0.c.b16.start [1/8] %v4183, 128
    %4201 = vxpose.xlu0.c.b16.cont [2/8] 0, 128
    %4202 = vxpose.xlu0.c.b16.cont [3/8] 0, 128
    %4203 = vxpose.xlu0.c.b16.cont [4/8] 0, 128
    %4204 = vxpose.xlu0.c.b16.cont [5/8] 0, 128
    %4205 = vxpose.xlu0.c.b16.cont [6/8] 0, 128
    %4206 = vxpose.xlu0.c.b16.cont [7/8] 0, 128
    %4207 = vxpose.xlu0.c.b16.end [8/8] 0, 128
    %v4208 = vpop.trf.xlu0
    %v4209 = vpop.trf.xlu0
    %v4210 = vpop.trf.xlu0
    %v4211 = vpop.trf.xlu0
    %v4212 = vpop.trf.xlu0
    %v4213 = vpop.trf.xlu0
    %v4214 = vpop.trf.xlu0
    %v4215 = vpop.trf.xlu0
    %4216 = vxpose.xlu0.c.b16.start [1/8] %v4184, 128
    %4217 = vxpose.xlu0.c.b16.cont [2/8] 0, 128
    %4218 = vxpose.xlu0.c.b16.cont [3/8] 0, 128
    %4219 = vxpose.xlu0.c.b16.cont [4/8] 0, 128
    %4220 = vxpose.xlu0.c.b16.cont [5/8] 0, 128
    %4221 = vxpose.xlu0.c.b16.cont [6/8] 0, 128
    %4222 = vxpose.xlu0.c.b16.cont [7/8] 0, 128
    %4223 = vxpose.xlu0.c.b16.end [8/8] 0, 128
    %v4224 = vpop.trf.xlu0
    %v4225 = vpop.trf.xlu0
    %v4226 = vpop.trf.xlu0
    %v4227 = vpop.trf.xlu0
    %v4228 = vpop.trf.xlu0
    %v4229 = vpop.trf.xlu0
    %v4230 = vpop.trf.xlu0
    %v4231 = vpop.trf.xlu0
    %4232 = vxpose.xlu0.c.b16.start [1/8] %v4185, 128
    %4233 = vxpose.xlu0.c.b16.cont [2/8] 0, 128
    %4234 = vxpose.xlu0.c.b16.cont [3/8] 0, 128
    %4235 = vxpose.xlu0.c.b16.cont [4/8] 0, 128
    %4236 = vxpose.xlu0.c.b16.cont [5/8] 0, 128
    %4237 = vxpose.xlu0.c.b16.cont [6/8] 0, 128
    %4238 = vxpose.xlu0.c.b16.cont [7/8] 0, 128
    %4239 = vxpose.xlu0.c.b16.end [8/8] 0, 128
    %v4240 = vpop.trf.xlu0
    %v4241 = vpop.trf.xlu0
    %v4242 = vpop.trf.xlu0
    %v4243 = vpop.trf.xlu0
    %v4244 = vpop.trf.xlu0
    %v4245 = vpop.trf.xlu0
    %v4246 = vpop.trf.xlu0
    %v4247 = vpop.trf.xlu0
    %4248 = vxpose.xlu0.c.b16.start [1/8] %v4186, 128
    %4249 = vxpose.xlu0.c.b16.cont [2/8] 0, 128
    %4250 = vxpose.xlu0.c.b16.cont [3/8] 0, 128
    %4251 = vxpose.xlu0.c.b16.cont [4/8] 0, 128
    %4252 = vxpose.xlu0.c.b16.cont [5/8] 0, 128
    %4253 = vxpose.xlu0.c.b16.cont [6/8] 0, 128
    %4254 = vxpose.xlu0.c.b16.cont [7/8] 0, 128
    %4255 = vxpose.xlu0.c.b16.end [8/8] 0, 128
    %v4256 = vpop.trf.xlu0
    %v4257 = vpop.trf.xlu0
    %v4258 = vpop.trf.xlu0
    %v4259 = vpop.trf.xlu0
    %v4260 = vpop.trf.xlu0
    %v4261 = vpop.trf.xlu0
    %v4262 = vpop.trf.xlu0
    %v4263 = vpop.trf.xlu0
    %4264 = vxpose.xlu0.c.b16.start [1/8] %v4187, 128
    %4265 = vxpose.xlu0.c.b16.cont [2/8] 0, 128
    %4266 = vxpose.xlu0.c.b16.cont [3/8] 0, 128
    %4267 = vxpose.xlu0.c.b16.cont [4/8] 0, 128
    %4268 = vxpose.xlu0.c.b16.cont [5/8] 0, 128
    %4269 = vxpose.xlu0.c.b16.cont [6/8] 0, 128
    %4270 = vxpose.xlu0.c.b16.cont [7/8] 0, 128
    %4271 = vxpose.xlu0.c.b16.end [8/8] 0, 128
    %v4272 = vpop.trf.xlu0
    %v4273 = vpop.trf.xlu0
    %v4274 = vpop.trf.xlu0
    %v4275 = vpop.trf.xlu0
    %v4276 = vpop.trf.xlu0
    %v4277 = vpop.trf.xlu0
    %v4278 = vpop.trf.xlu0
    %v4279 = vpop.trf.xlu0
    %4280 = vxpose.xlu0.c.b16.start [1/8] %v4188, 128
    %4281 = vxpose.xlu0.c.b16.cont [2/8] 0, 128
    %4282 = vxpose.xlu0.c.b16.cont [3/8] 0, 128
    %4283 = vxpose.xlu0.c.b16.cont [4/8] 0, 128
    %4284 = vxpose.xlu0.c.b16.cont [5/8] 0, 128
    %4285 = vxpose.xlu0.c.b16.cont [6/8] 0, 128
    %4286 = vxpose.xlu0.c.b16.cont [7/8] 0, 128
    %4287 = vxpose.xlu0.c.b16.end [8/8] 0, 128
    %v4288 = vpop.trf.xlu0
    %v4289 = vpop.trf.xlu0
    %v4290 = vpop.trf.xlu0
    %v4291 = vpop.trf.xlu0
    %v4292 = vpop.trf.xlu0
    %v4293 = vpop.trf.xlu0
    %v4294 = vpop.trf.xlu0
    %v4295 = vpop.trf.xlu0
    %4296 = vxpose.xlu0.c.b16.start [1/8] %v4189, 128
    %4297 = vxpose.xlu0.c.b16.cont [2/8] 0, 128
    %4298 = vxpose.xlu0.c.b16.cont [3/8] 0, 128
    %4299 = vxpose.xlu0.c.b16.cont [4/8] 0, 128
    %4300 = vxpose.xlu0.c.b16.cont [5/8] 0, 128
    %4301 = vxpose.xlu0.c.b16.cont [6/8] 0, 128
    %4302 = vxpose.xlu0.c.b16.cont [7/8] 0, 128
    %4303 = vxpose.xlu0.c.b16.end [8/8] 0, 128
    %v4304 = vpop.trf.xlu0
    %v4305 = vpop.trf.xlu0
    %v4306 = vpop.trf.xlu0
    %v4307 = vpop.trf.xlu0
    %v4308 = vpop.trf.xlu0
    %v4309 = vpop.trf.xlu0
    %v4310 = vpop.trf.xlu0
    %v4311 = vpop.trf.xlu0
    %4312 = vxpose.xlu0.c.b16.start [1/8] %v4190, 128
    %4313 = vxpose.xlu0.c.b16.cont [2/8] 0, 128
    %4314 = vxpose.xlu0.c.b16.cont [3/8] 0, 128
    %4315 = vxpose.xlu0.c.b16.cont [4/8] 0, 128
    %4316 = vxpose.xlu0.c.b16.cont [5/8] 0, 128
    %4317 = vxpose.xlu0.c.b16.cont [6/8] 0, 128
    %4318 = vxpose.xlu0.c.b16.cont [7/8] 0, 128
    %4319 = vxpose.xlu0.c.b16.end [8/8] 0, 128
    %v4320 = vpop.trf.xlu0
    %v4321 = vpop.trf.xlu0
    %v4322 = vpop.trf.xlu0
    %v4323 = vpop.trf.xlu0
    %v4324 = vpop.trf.xlu0
    %v4325 = vpop.trf.xlu0
    %v4326 = vpop.trf.xlu0
    %v4327 = vpop.trf.xlu0
    %v4330 = vunpack.c.l.b16 %v4191
    %v4331 = vunpack.c.l.b16 %v4192
    %v4332 = vpack.c.b16 %v4331, %v4330
    %vm4334 = vcmask 130048
    %v4336 = vsel %vm4334, %v4208, 0
    %v4339 = vsel %vm4334, %v4209, 0
    %v4342 = vsel %vm4334, %v4210, 0
    %v4345 = vsel %vm4334, %v4211, 0
    %v4348 = vsel %vm4334, %v4212, 0
    %v4351 = vsel %vm4334, %v4213, 0
    %v4354 = vsel %vm4334, %v4214, 0
    %v4357 = vsel %vm4334, %v4215, 0
    %v4360 = vsel %vm4334, %v4224, 0
    %v4363 = vsel %vm4334, %v4225, 0
    %v4366 = vsel %vm4334, %v4226, 0
    %v4369 = vsel %vm4334, %v4227, 0
    %v4372 = vsel %vm4334, %v4228, 0
    %v4375 = vsel %vm4334, %v4229, 0
    %v4378 = vsel %vm4334, %v4230, 0
    %v4381 = vsel %vm4334, %v4231, 0
    %v4384 = vsel %vm4334, %v4240, 0
    %v4387 = vsel %vm4334, %v4241, 0
    %v4390 = vsel %vm4334, %v4242, 0
    %v4393 = vsel %vm4334, %v4243, 0
    %v4396 = vsel %vm4334, %v4244, 0
    %v4399 = vsel %vm4334, %v4245, 0
    %v4402 = vsel %vm4334, %v4246, 0
    %v4405 = vsel %vm4334, %v4247, 0
    %v4408 = vsel %vm4334, %v4256, 0
    %v4411 = vsel %vm4334, %v4257, 0
    %v4414 = vsel %vm4334, %v4258, 0
    %v4417 = vsel %vm4334, %v4259, 0
    %v4420 = vsel %vm4334, %v4260, 0
    %v4423 = vsel %vm4334, %v4261, 0
    %v4426 = vsel %vm4334, %v4262, 0
    %v4429 = vsel %vm4334, %v4263, 0
    %v4432 = vsel %vm4334, %v4272, 0
    %v4435 = vsel %vm4334, %v4273, 0
    %v4438 = vsel %vm4334, %v4274, 0
    %v4441 = vsel %vm4334, %v4275, 0
    %v4444 = vsel %vm4334, %v4276, 0
    %v4447 = vsel %vm4334, %v4277, 0
    %v4450 = vsel %vm4334, %v4278, 0
    %v4453 = vsel %vm4334, %v4279, 0
    %v4456 = vsel %vm4334, %v4288, 0
    %v4459 = vsel %vm4334, %v4289, 0
    %v4462 = vsel %vm4334, %v4290, 0
    %v4465 = vsel %vm4334, %v4291, 0
    %v4468 = vsel %vm4334, %v4292, 0
    %v4471 = vsel %vm4334, %v4293, 0
    %v4474 = vsel %vm4334, %v4294, 0
    %v4477 = vsel %vm4334, %v4295, 0
    %v4480 = vsel %vm4334, %v4304, 0
    %v4483 = vsel %vm4334, %v4305, 0
    %v4486 = vsel %vm4334, %v4306, 0
    %v4489 = vsel %vm4334, %v4307, 0
    %v4492 = vsel %vm4334, %v4308, 0
    %v4495 = vsel %vm4334, %v4309, 0
    %v4498 = vsel %vm4334, %v4310, 0
    %v4501 = vsel %vm4334, %v4311, 0
    %v4504 = vsel %vm4334, %v4320, 0
    %v4507 = vsel %vm4334, %v4321, 0
    %v4510 = vsel %vm4334, %v4322, 0
    %v4513 = vsel %vm4334, %v4323, 0
    %v4516 = vsel %vm4334, %v4324, 0
    %v4519 = vsel %vm4334, %v4325, 0
    %v4522 = vsel %vm4334, %v4326, 0
    %v4525 = vsel %vm4334, %v4327, 0
    %4527 = vmatprep.subr.bf16.mxu0 0
    %4528 = vmatpush1.bf16.msra.mxu0 %v4332
    %4529 = vmatprep.subr.bf16.mxu0 0
    %4530 = vmatpush1.bf16.msra.mxu0 0
    %4531 = vmatprep.subr.bf16.mxu0 0
    %4532 = vmatpush1.bf16.msra.mxu0 0
    %4533 = vmatprep.subr.bf16.mxu0 0
    %4534 = vmatpush1.bf16.msra.mxu0 0
    %4535 = vmatprep.subr.bf16.mxu0 0
    %4536 = vmatpush1.bf16.msra.mxu0 0
    %4537 = vmatprep.subr.bf16.mxu0 0
    %4538 = vmatpush1.bf16.msra.mxu0 0
    %4539 = vmatprep.subr.bf16.mxu0 0
    %4540 = vmatpush1.bf16.msra.mxu0 0
    %4541 = vmatprep.subr.bf16.mxu0 0
    %4542 = vmatpush1.bf16.msra.mxu0 0
    %4543 = vmatprep.subr.bf16.mxu0 0
    %4544 = vmatpush1.bf16.msra.mxu0 0
    %4545 = vmatprep.subr.bf16.mxu0 0
    %4546 = vmatpush1.bf16.msra.mxu0 0
    %4547 = vmatprep.subr.bf16.mxu0 0
    %4548 = vmatpush1.bf16.msra.mxu0 0
    %4549 = vmatprep.subr.bf16.mxu0 0
    %4550 = vmatpush1.bf16.msra.mxu0 0
    %4551 = vmatprep.subr.bf16.mxu0 0
    %4552 = vmatpush1.bf16.msra.mxu0 0
    %4553 = vmatprep.subr.bf16.mxu0 0
    %4554 = vmatpush1.bf16.msra.mxu0 0
    %4555 = vmatprep.subr.bf16.mxu0 0
    %4556 = vmatpush1.bf16.msra.mxu0 0
    %4557 = vmatprep.subr.bf16.mxu0 0
    %4558 = vmatpush1.bf16.msra.mxu0 0
    %4559 = vmatprep.mubr.bf16.mxu0 0
    %4560 = vmatmul.mubr.bf16.gmra.mrb[0].mxu0 %v4336
    %v4561 = vpop.f32.mrb[0].mxu0
    %v4562 = vadd.f32 %v4198, %v4561
    %v4563 = vpop.f32.mrb[0].mxu0
    %v4564 = vpop.f32.mrb[0].mxu0
    %v4565 = vadd.f32 %v4198, %v4564
    %v4566 = vpop.f32.mrb[0].mxu0
    %4567 = vmatprep.mubr.bf16.mxu0 0
    %4568 = vmatmul.mubr.bf16.gmra.mrb[0].mxu0 %v4339
    %v4569 = vpop.f32.mrb[0].mxu0
    %v4570 = vadd.f32 %v4198, %v4569
    %v4571 = vpop.f32.mrb[0].mxu0
    %v4572 = vpop.f32.mrb[0].mxu0
    %v4573 = vadd.f32 %v4198, %v4572
    %v4574 = vpop.f32.mrb[0].mxu0
    %4575 = vmatprep.mubr.bf16.mxu0 0
    %4576 = vmatmul.mubr.bf16.gmra.mrb[0].mxu0 %v4342
    %v4577 = vpop.f32.mrb[0].mxu0
    %v4578 = vadd.f32 %v4198, %v4577
    %v4579 = vpop.f32.mrb[0].mxu0
    %v4580 = vpop.f32.mrb[0].mxu0
    %v4581 = vadd.f32 %v4198, %v4580
    %v4582 = vpop.f32.mrb[0].mxu0
    %4583 = vmatprep.mubr.bf16.mxu0 0
    %4584 = vmatmul.mubr.bf16.gmra.mrb[0].mxu0 %v4345
    %v4585 = vpop.f32.mrb[0].mxu0
    %v4586 = vadd.f32 %v4198, %v4585
    %v4587 = vpop.f32.mrb[0].mxu0
    %v4588 = vpop.f32.mrb[0].mxu0
    %v4589 = vadd.f32 %v4198, %v4588
    %v4590 = vpop.f32.mrb[0].mxu0
    %4591 = vmatprep.mubr.bf16.mxu0 0
    %4592 = vmatmul.mubr.bf16.gmra.mrb[0].mxu0 %v4348
    %v4593 = vpop.f32.mrb[0].mxu0
    %v4594 = vadd.f32 %v4198, %v4593
    %v4595 = vpop.f32.mrb[0].mxu0
    %v4596 = vpop.f32.mrb[0].mxu0
    %v4597 = vadd.f32 %v4198, %v4596
    %v4598 = vpop.f32.mrb[0].mxu0
    %4599 = vmatprep.mubr.bf16.mxu0 0
    %4600 = vmatmul.mubr.bf16.gmra.mrb[0].mxu0 %v4351
    %v4601 = vpop.f32.mrb[0].mxu0
    %v4602 = vadd.f32 %v4198, %v4601
    %v4603 = vpop.f32.mrb[0].mxu0
    %v4604 = vpop.f32.mrb[0].mxu0
    %v4605 = vadd.f32 %v4198, %v4604
    %v4606 = vpop.f32.mrb[0].mxu0
    %4607 = vmatprep.mubr.bf16.mxu0 0
    %4608 = vmatmul.mubr.bf16.gmra.mrb[0].mxu0 %v4354
    %v4609 = vpop.f32.mrb[0].mxu0
    %v4610 = vadd.f32 %v4198, %v4609
    %v4611 = vpop.f32.mrb[0].mxu0
    %v4612 = vpop.f32.mrb[0].mxu0
    %v4613 = vadd.f32 %v4198, %v4612
    %v4614 = vpop.f32.mrb[0].mxu0
    %4615 = vmatprep.mubr.bf16.mxu0 0
    %4616 = vmatmul.mubr.bf16.gmra.mrb[0].mxu0 %v4357
    %v4617 = vpop.f32.mrb[0].mxu0
    %v4618 = vadd.f32 %v4198, %v4617
    %v4619 = vpop.f32.mrb[0].mxu0
    %v4620 = vpop.f32.mrb[0].mxu0
    %v4621 = vadd.f32 %v4198, %v4620
    %v4622 = vpop.f32.mrb[0].mxu0
    %4623 = vmatprep.mubr.bf16.mxu0 0
    %4624 = vmatmul.mubr.bf16.gmra.mrb[0].mxu0 %v4360
    %v4625 = vpop.f32.mrb[0].mxu0
    %v4626 = vadd.f32 %v4198, %v4625
    %v4627 = vpop.f32.mrb[0].mxu0
    %v4628 = vpop.f32.mrb[0].mxu0
    %v4629 = vadd.f32 %v4198, %v4628
    %v4630 = vpop.f32.mrb[0].mxu0
    %4631 = vmatprep.mubr.bf16.mxu0 0
    %4632 = vmatmul.mubr.bf16.gmra.mrb[0].mxu0 %v4363
    %v4633 = vpop.f32.mrb[0].mxu0
    %v4634 = vadd.f32 %v4198, %v4633
    %v4635 = vpop.f32.mrb[0].mxu0
    %v4636 = vpop.f32.mrb[0].mxu0
    %v4637 = vadd.f32 %v4198, %v4636
    %v4638 = vpop.f32.mrb[0].mxu0
    %4639 = vmatprep.mubr.bf16.mxu0 0
    %4640 = vmatmul.mubr.bf16.gmra.mrb[0].mxu0 %v4366
    %v4641 = vpop.f32.mrb[0].mxu0
    %v4642 = vadd.f32 %v4198, %v4641
    %v4643 = vpop.f32.mrb[0].mxu0
    %v4644 = vpop.f32.mrb[0].mxu0
    %v4645 = vadd.f32 %v4198, %v4644
    %v4646 = vpop.f32.mrb[0].mxu0
    %4647 = vmatprep.mubr.bf16.mxu0 0
    %4648 = vmatmul.mubr.bf16.gmra.mrb[0].mxu0 %v4369
    %v4649 = vpop.f32.mrb[0].mxu0
    %v4650 = vadd.f32 %v4198, %v4649
    %v4651 = vpop.f32.mrb[0].mxu0
    %v4652 = vpop.f32.mrb[0].mxu0
    %v4653 = vadd.f32 %v4198, %v4652
    %v4654 = vpop.f32.mrb[0].mxu0
    %4655 = vmatprep.mubr.bf16.mxu0 0
    %4656 = vmatmul.mubr.bf16.gmra.mrb[0].mxu0 %v4372
    %v4657 = vpop.f32.mrb[0].mxu0
    %v4658 = vadd.f32 %v4198, %v4657
    %v4659 = vpop.f32.mrb[0].mxu0
    %v4660 = vpop.f32.mrb[0].mxu0
    %v4661 = vadd.f32 %v4198, %v4660
    %v4662 = vpop.f32.mrb[0].mxu0
    %4663 = vmatprep.mubr.bf16.mxu0 0
    %4664 = vmatmul.mubr.bf16.gmra.mrb[0].mxu0 %v4375
    %v4665 = vpop.f32.mrb[0].mxu0
    %v4666 = vadd.f32 %v4198, %v4665
    %v4667 = vpop.f32.mrb[0].mxu0
    %v4668 = vpop.f32.mrb[0].mxu0
    %v4669 = vadd.f32 %v4198, %v4668
    %v4670 = vpop.f32.mrb[0].mxu0
    %4671 = vmatprep.mubr.bf16.mxu0 0
    %4672 = vmatmul.mubr.bf16.gmra.mrb[0].mxu0 %v4378
    %v4673 = vpop.f32.mrb[0].mxu0
    %v4674 = vadd.f32 %v4198, %v4673
    %v4675 = vpop.f32.mrb[0].mxu0
    %v4676 = vpop.f32.mrb[0].mxu0
    %v4677 = vadd.f32 %v4198, %v4676
    %v4678 = vpop.f32.mrb[0].mxu0
    %4679 = vmatprep.mubr.bf16.mxu0 0
    %4680 = vmatmul.mubr.bf16.gmra.mrb[0].mxu0 %v4381
    %v4681 = vpop.f32.mrb[0].mxu0
    %v4682 = vadd.f32 %v4198, %v4681
    %v4683 = vpop.f32.mrb[0].mxu0
    %v4684 = vpop.f32.mrb[0].mxu0
    %v4685 = vadd.f32 %v4198, %v4684
    %v4686 = vpop.f32.mrb[0].mxu0
    %4687 = vmatprep.mubr.bf16.mxu0 0
    %4688 = vmatmul.mubr.bf16.gmra.mrb[0].mxu0 %v4384
    %v4689 = vpop.f32.mrb[0].mxu0
    %v4690 = vadd.f32 %v4198, %v4689
    %v4691 = vpop.f32.mrb[0].mxu0
    %v4692 = vpop.f32.mrb[0].mxu0
    %v4693 = vadd.f32 %v4198, %v4692
    %v4694 = vpop.f32.mrb[0].mxu0
    %4695 = vmatprep.mubr.bf16.mxu0 0
    %4696 = vmatmul.mubr.bf16.gmra.mrb[0].mxu0 %v4387
    %v4697 = vpop.f32.mrb[0].mxu0
    %v4698 = vadd.f32 %v4198, %v4697
    %v4699 = vpop.f32.mrb[0].mxu0
    %v4700 = vpop.f32.mrb[0].mxu0
    %v4701 = vadd.f32 %v4198, %v4700
    %v4702 = vpop.f32.mrb[0].mxu0
    %4703 = vmatprep.mubr.bf16.mxu0 0
    %4704 = vmatmul.mubr.bf16.gmra.mrb[0].mxu0 %v4390
    %v4705 = vpop.f32.mrb[0].mxu0
    %v4706 = vadd.f32 %v4198, %v4705
    %v4707 = vpop.f32.mrb[0].mxu0
    %v4708 = vpop.f32.mrb[0].mxu0
    %v4709 = vadd.f32 %v4198, %v4708
    %v4710 = vpop.f32.mrb[0].mxu0
    %4711 = vmatprep.mubr.bf16.mxu0 0
    %4712 = vmatmul.mubr.bf16.gmra.mrb[0].mxu0 %v4393
    %v4713 = vpop.f32.mrb[0].mxu0
    %v4714 = vadd.f32 %v4198, %v4713
    %v4715 = vpop.f32.mrb[0].mxu0
    %v4716 = vpop.f32.mrb[0].mxu0
    %v4717 = vadd.f32 %v4198, %v4716
    %v4718 = vpop.f32.mrb[0].mxu0
    %4719 = vmatprep.mubr.bf16.mxu0 0
    %4720 = vmatmul.mubr.bf16.gmra.mrb[0].mxu0 %v4396
    %v4721 = vpop.f32.mrb[0].mxu0
    %v4722 = vadd.f32 %v4198, %v4721
    %v4723 = vpop.f32.mrb[0].mxu0
    %v4724 = vpop.f32.mrb[0].mxu0
    %v4725 = vadd.f32 %v4198, %v4724
    %v4726 = vpop.f32.mrb[0].mxu0
    %4727 = vmatprep.mubr.bf16.mxu0 0
    %4728 = vmatmul.mubr.bf16.gmra.mrb[0].mxu0 %v4399
    %v4729 = vpop.f32.mrb[0].mxu0
    %v4730 = vadd.f32 %v4198, %v4729
    %v4731 = vpop.f32.mrb[0].mxu0
    %v4732 = vpop.f32.mrb[0].mxu0
    %v4733 = vadd.f32 %v4198, %v4732
    %v4734 = vpop.f32.mrb[0].mxu0
    %4735 = vmatprep.mubr.bf16.mxu0 0
    %4736 = vmatmul.mubr.bf16.gmra.mrb[0].mxu0 %v4402
    %v4737 = vpop.f32.mrb[0].mxu0
    %v4738 = vadd.f32 %v4198, %v4737
    %v4739 = vpop.f32.mrb[0].mxu0
    %v4740 = vpop.f32.mrb[0].mxu0
    %v4741 = vadd.f32 %v4198, %v4740
    %v4742 = vpop.f32.mrb[0].mxu0
    %4743 = vmatprep.mubr.bf16.mxu0 0
    %4744 = vmatmul.mubr.bf16.gmra.mrb[0].mxu0 %v4405
    %v4745 = vpop.f32.mrb[0].mxu0
    %v4746 = vadd.f32 %v4198, %v4745
    %v4747 = vpop.f32.mrb[0].mxu0
    %v4748 = vpop.f32.mrb[0].mxu0
    %v4749 = vadd.f32 %v4198, %v4748
    %v4750 = vpop.f32.mrb[0].mxu0
    %4751 = vmatprep.mubr.bf16.mxu0 0
    %4752 = vmatmul.mubr.bf16.gmra.mrb[0].mxu0 %v4408
    %v4753 = vpop.f32.mrb[0].mxu0
    %v4754 = vadd.f32 %v4198, %v4753
    %v4755 = vpop.f32.mrb[0].mxu0
    %v4756 = vpop.f32.mrb[0].mxu0
    %v4757 = vadd.f32 %v4198, %v4756
    %v4758 = vpop.f32.mrb[0].mxu0
    %4759 = vmatprep.mubr.bf16.mxu0 0
    %4760 = vmatmul.mubr.bf16.gmra.mrb[0].mxu0 %v4411
    %v4761 = vpop.f32.mrb[0].mxu0
    %v4762 = vadd.f32 %v4198, %v4761
    %v4763 = vpop.f32.mrb[0].mxu0
    %v4764 = vpop.f32.mrb[0].mxu0
    %v4765 = vadd.f32 %v4198, %v4764
    %v4766 = vpop.f32.mrb[0].mxu0
    %4767 = vmatprep.mubr.bf16.mxu0 0
    %4768 = vmatmul.mubr.bf16.gmra.mrb[0].mxu0 %v4414
    %v4769 = vpop.f32.mrb[0].mxu0
    %v4770 = vadd.f32 %v4198, %v4769
    %v4771 = vpop.f32.mrb[0].mxu0
    %v4772 = vpop.f32.mrb[0].mxu0
    %v4773 = vadd.f32 %v4198, %v4772
    %v4774 = vpop.f32.mrb[0].mxu0
    %4775 = vmatprep.mubr.bf16.mxu0 0
    %4776 = vmatmul.mubr.bf16.gmra.mrb[0].mxu0 %v4417
    %v4777 = vpop.f32.mrb[0].mxu0
    %v4778 = vadd.f32 %v4198, %v4777
    %v4779 = vpop.f32.mrb[0].mxu0
    %v4780 = vpop.f32.mrb[0].mxu0
    %v4781 = vadd.f32 %v4198, %v4780
    %v4782 = vpop.f32.mrb[0].mxu0
    %4783 = vmatprep.mubr.bf16.mxu0 0
    %4784 = vmatmul.mubr.bf16.gmra.mrb[0].mxu0 %v4420
    %v4785 = vpop.f32.mrb[0].mxu0
    %v4786 = vadd.f32 %v4198, %v4785
    %v4787 = vpop.f32.mrb[0].mxu0
    %v4788 = vpop.f32.mrb[0].mxu0
    %v4789 = vadd.f32 %v4198, %v4788
    %v4790 = vpop.f32.mrb[0].mxu0
    %4791 = vmatprep.mubr.bf16.mxu0 0
    %4792 = vmatmul.mubr.bf16.gmra.mrb[0].mxu0 %v4423
    %v4793 = vpop.f32.mrb[0].mxu0
    %v4794 = vadd.f32 %v4198, %v4793
    %v4795 = vpop.f32.mrb[0].mxu0
    %v4796 = vpop.f32.mrb[0].mxu0
    %v4797 = vadd.f32 %v4198, %v4796
    %v4798 = vpop.f32.mrb[0].mxu0
    %4799 = vmatprep.mubr.bf16.mxu0 0
    %4800 = vmatmul.mubr.bf16.gmra.mrb[0].mxu0 %v4426
    %v4801 = vpop.f32.mrb[0].mxu0
    %v4802 = vadd.f32 %v4198, %v4801
    %v4803 = vpop.f32.mrb[0].mxu0
    %v4804 = vpop.f32.mrb[0].mxu0
    %v4805 = vadd.f32 %v4198, %v4804
    %v4806 = vpop.f32.mrb[0].mxu0
    %4807 = vmatprep.mubr.bf16.mxu0 0
    %4808 = vmatmul.mubr.bf16.gmra.mrb[0].mxu0 %v4429
    %v4809 = vpop.f32.mrb[0].mxu0
    %v4810 = vadd.f32 %v4198, %v4809
    %v4811 = vpop.f32.mrb[0].mxu0
    %v4812 = vpop.f32.mrb[0].mxu0
    %v4813 = vadd.f32 %v4198, %v4812
    %v4814 = vpop.f32.mrb[0].mxu0
    %4815 = vmatprep.mubr.bf16.mxu0 0
    %4816 = vmatmul.mubr.bf16.gmra.mrb[0].mxu0 %v4432
    %v4817 = vpop.f32.mrb[0].mxu0
    %v4818 = vadd.f32 %v4198, %v4817
    %v4819 = vpop.f32.mrb[0].mxu0
    %v4820 = vpop.f32.mrb[0].mxu0
    %v4821 = vadd.f32 %v4198, %v4820
    %v4822 = vpop.f32.mrb[0].mxu0
    %4823 = vmatprep.mubr.bf16.mxu0 0
    %4824 = vmatmul.mubr.bf16.gmra.mrb[0].mxu0 %v4435
    %v4825 = vpop.f32.mrb[0].mxu0
    %v4826 = vadd.f32 %v4198, %v4825
    %v4827 = vpop.f32.mrb[0].mxu0
    %v4828 = vpop.f32.mrb[0].mxu0
    %v4829 = vadd.f32 %v4198, %v4828
    %v4830 = vpop.f32.mrb[0].mxu0
    %4831 = vmatprep.mubr.bf16.mxu0 0
    %4832 = vmatmul.mubr.bf16.gmra.mrb[0].mxu0 %v4438
    %v4833 = vpop.f32.mrb[0].mxu0
    %v4834 = vadd.f32 %v4198, %v4833
    %v4835 = vpop.f32.mrb[0].mxu0
    %v4836 = vpop.f32.mrb[0].mxu0
    %v4837 = vadd.f32 %v4198, %v4836
    %v4838 = vpop.f32.mrb[0].mxu0
    %4839 = vmatprep.mubr.bf16.mxu0 0
    %4840 = vmatmul.mubr.bf16.gmra.mrb[0].mxu0 %v4441
    %v4841 = vpop.f32.mrb[0].mxu0
    %v4842 = vadd.f32 %v4198, %v4841
    %v4843 = vpop.f32.mrb[0].mxu0
    %v4844 = vpop.f32.mrb[0].mxu0
    %v4845 = vadd.f32 %v4198, %v4844
    %v4846 = vpop.f32.mrb[0].mxu0
    %4847 = vmatprep.mubr.bf16.mxu0 0
    %4848 = vmatmul.mubr.bf16.gmra.mrb[0].mxu0 %v4444
    %v4849 = vpop.f32.mrb[0].mxu0
    %v4850 = vadd.f32 %v4198, %v4849
    %v4851 = vpop.f32.mrb[0].mxu0
    %v4852 = vpop.f32.mrb[0].mxu0
    %v4853 = vadd.f32 %v4198, %v4852
    %v4854 = vpop.f32.mrb[0].mxu0
    %4855 = vmatprep.mubr.bf16.mxu0 0
    %4856 = vmatmul.mubr.bf16.gmra.mrb[0].mxu0 %v4447
    %v4857 = vpop.f32.mrb[0].mxu0
    %v4858 = vadd.f32 %v4198, %v4857
    %v4859 = vpop.f32.mrb[0].mxu0
    %v4860 = vpop.f32.mrb[0].mxu0
    %v4861 = vadd.f32 %v4198, %v4860
    %v4862 = vpop.f32.mrb[0].mxu0
    %4863 = vmatprep.mubr.bf16.mxu0 0
    %4864 = vmatmul.mubr.bf16.gmra.mrb[0].mxu0 %v4450
    %v4865 = vpop.f32.mrb[0].mxu0
    %v4866 = vadd.f32 %v4198, %v4865
    %v4867 = vpop.f32.mrb[0].mxu0
    %v4868 = vpop.f32.mrb[0].mxu0
    %v4869 = vadd.f32 %v4198, %v4868
    %v4870 = vpop.f32.mrb[0].mxu0
    %4871 = vmatprep.mubr.bf16.mxu0 0
    %4872 = vmatmul.mubr.bf16.gmra.mrb[0].mxu0 %v4453
    %v4873 = vpop.f32.mrb[0].mxu0
    %v4874 = vadd.f32 %v4198, %v4873
    %v4875 = vpop.f32.mrb[0].mxu0
    %v4876 = vpop.f32.mrb[0].mxu0
    %v4877 = vadd.f32 %v4198, %v4876
    %v4878 = vpop.f32.mrb[0].mxu0
    %4879 = vmatprep.mubr.bf16.mxu0 0
    %4880 = vmatmul.mubr.bf16.gmra.mrb[0].mxu0 %v4456
    %v4881 = vpop.f32.mrb[0].mxu0
    %v4882 = vadd.f32 %v4198, %v4881
    %v4883 = vpop.f32.mrb[0].mxu0
    %v4884 = vpop.f32.mrb[0].mxu0
    %v4885 = vadd.f32 %v4198, %v4884
    %v4886 = vpop.f32.mrb[0].mxu0
    %4887 = vmatprep.mubr.bf16.mxu0 0
    %4888 = vmatmul.mubr.bf16.gmra.mrb[0].mxu0 %v4459
    %v4889 = vpop.f32.mrb[0].mxu0
    %v4890 = vadd.f32 %v4198, %v4889
    %v4891 = vpop.f32.mrb[0].mxu0
    %v4892 = vpop.f32.mrb[0].mxu0
    %v4893 = vadd.f32 %v4198, %v4892
    %v4894 = vpop.f32.mrb[0].mxu0
    %4895 = vmatprep.mubr.bf16.mxu0 0
    %4896 = vmatmul.mubr.bf16.gmra.mrb[0].mxu0 %v4462
    %v4897 = vpop.f32.mrb[0].mxu0
    %v4898 = vadd.f32 %v4198, %v4897
    %v4899 = vpop.f32.mrb[0].mxu0
    %v4900 = vpop.f32.mrb[0].mxu0
    %v4901 = vadd.f32 %v4198, %v4900
    %v4902 = vpop.f32.mrb[0].mxu0
    %4903 = vmatprep.mubr.bf16.mxu0 0
    %4904 = vmatmul.mubr.bf16.gmra.mrb[0].mxu0 %v4465
    %v4905 = vpop.f32.mrb[0].mxu0
    %v4906 = vadd.f32 %v4198, %v4905
    %v4907 = vpop.f32.mrb[0].mxu0
    %v4908 = vpop.f32.mrb[0].mxu0
    %v4909 = vadd.f32 %v4198, %v4908
    %v4910 = vpop.f32.mrb[0].mxu0
    %4911 = vmatprep.mubr.bf16.mxu0 0
    %4912 = vmatmul.mubr.bf16.gmra.mrb[0].mxu0 %v4468
    %v4913 = vpop.f32.mrb[0].mxu0
    %v4914 = vadd.f32 %v4198, %v4913
    %v4915 = vpop.f32.mrb[0].mxu0
    %v4916 = vpop.f32.mrb[0].mxu0
    %v4917 = vadd.f32 %v4198, %v4916
    %v4918 = vpop.f32.mrb[0].mxu0
    %4919 = vmatprep.mubr.bf16.mxu0 0
    %4920 = vmatmul.mubr.bf16.gmra.mrb[0].mxu0 %v4471
    %v4921 = vpop.f32.mrb[0].mxu0
    %v4922 = vadd.f32 %v4198, %v4921
    %v4923 = vpop.f32.mrb[0].mxu0
    %v4924 = vpop.f32.mrb[0].mxu0
    %v4925 = vadd.f32 %v4198, %v4924
    %v4926 = vpop.f32.mrb[0].mxu0
    %4927 = vmatprep.mubr.bf16.mxu0 0
    %4928 = vmatmul.mubr.bf16.gmra.mrb[0].mxu0 %v4474
    %v4929 = vpop.f32.mrb[0].mxu0
    %v4930 = vadd.f32 %v4198, %v4929
    %v4931 = vpop.f32.mrb[0].mxu0
    %v4932 = vpop.f32.mrb[0].mxu0
    %v4933 = vadd.f32 %v4198, %v4932
    %v4934 = vpop.f32.mrb[0].mxu0
    %4935 = vmatprep.mubr.bf16.mxu0 0
    %4936 = vmatmul.mubr.bf16.gmra.mrb[0].mxu0 %v4477
    %v4937 = vpop.f32.mrb[0].mxu0
    %v4938 = vadd.f32 %v4198, %v4937
    %v4939 = vpop.f32.mrb[0].mxu0
    %v4940 = vpop.f32.mrb[0].mxu0
    %v4941 = vadd.f32 %v4198, %v4940
    %v4942 = vpop.f32.mrb[0].mxu0
    %4943 = vmatprep.mubr.bf16.mxu0 0
    %4944 = vmatmul.mubr.bf16.gmra.mrb[0].mxu0 %v4480
    %v4945 = vpop.f32.mrb[0].mxu0
    %v4946 = vadd.f32 %v4198, %v4945
    %v4947 = vpop.f32.mrb[0].mxu0
    %v4948 = vpop.f32.mrb[0].mxu0
    %v4949 = vadd.f32 %v4198, %v4948
    %v4950 = vpop.f32.mrb[0].mxu0
    %4951 = vmatprep.mubr.bf16.mxu0 0
    %4952 = vmatmul.mubr.bf16.gmra.mrb[0].mxu0 %v4483
    %v4953 = vpop.f32.mrb[0].mxu0
    %v4954 = vadd.f32 %v4198, %v4953
    %v4955 = vpop.f32.mrb[0].mxu0
    %v4956 = vpop.f32.mrb[0].mxu0
    %v4957 = vadd.f32 %v4198, %v4956
    %v4958 = vpop.f32.mrb[0].mxu0
    %4959 = vmatprep.mubr.bf16.mxu0 0
    %4960 = vmatmul.mubr.bf16.gmra.mrb[0].mxu0 %v4486
    %v4961 = vpop.f32.mrb[0].mxu0
    %v4962 = vadd.f32 %v4198, %v4961
    %v4963 = vpop.f32.mrb[0].mxu0
    %v4964 = vpop.f32.mrb[0].mxu0
    %v4965 = vadd.f32 %v4198, %v4964
    %v4966 = vpop.f32.mrb[0].mxu0
    %4967 = vmatprep.mubr.bf16.mxu0 0
    %4968 = vmatmul.mubr.bf16.gmra.mrb[0].mxu0 %v4489
    %v4969 = vpop.f32.mrb[0].mxu0
    %v4970 = vadd.f32 %v4198, %v4969
    %v4971 = vpop.f32.mrb[0].mxu0
    %v4972 = vpop.f32.mrb[0].mxu0
    %v4973 = vadd.f32 %v4198, %v4972
    %v4974 = vpop.f32.mrb[0].mxu0
    %4975 = vmatprep.mubr.bf16.mxu0 0
    %4976 = vmatmul.mubr.bf16.gmra.mrb[0].mxu0 %v4492
    %v4977 = vpop.f32.mrb[0].mxu0
    %v4978 = vadd.f32 %v4198, %v4977
    %v4979 = vpop.f32.mrb[0].mxu0
    %v4980 = vpop.f32.mrb[0].mxu0
    %v4981 = vadd.f32 %v4198, %v4980
    %v4982 = vpop.f32.mrb[0].mxu0
    %4983 = vmatprep.mubr.bf16.mxu0 0
    %4984 = vmatmul.mubr.bf16.gmra.mrb[0].mxu0 %v4495
    %v4985 = vpop.f32.mrb[0].mxu0
    %v4986 = vadd.f32 %v4198, %v4985
    %v4987 = vpop.f32.mrb[0].mxu0
    %v4988 = vpop.f32.mrb[0].mxu0
    %v4989 = vadd.f32 %v4198, %v4988
    %v4990 = vpop.f32.mrb[0].mxu0
    %4991 = vmatprep.mubr.bf16.mxu0 0
    %4992 = vmatmul.mubr.bf16.gmra.mrb[0].mxu0 %v4498
    %v4993 = vpop.f32.mrb[0].mxu0
    %v4994 = vadd.f32 %v4198, %v4993
    %v4995 = vpop.f32.mrb[0].mxu0
    %v4996 = vpop.f32.mrb[0].mxu0
    %v4997 = vadd.f32 %v4198, %v4996
    %v4998 = vpop.f32.mrb[0].mxu0
    %4999 = vmatprep.mubr.bf16.mxu0 0
    %5000 = vmatmul.mubr.bf16.gmra.mrb[0].mxu0 %v4501
    %v5001 = vpop.f32.mrb[0].mxu0
    %v5002 = vadd.f32 %v4198, %v5001
    %v5003 = vpop.f32.mrb[0].mxu0
    %v5004 = vpop.f32.mrb[0].mxu0
    %v5005 = vadd.f32 %v4198, %v5004
    %v5006 = vpop.f32.mrb[0].mxu0
    %5007 = vmatprep.mubr.bf16.mxu0 0
    %5008 = vmatmul.mubr.bf16.gmra.mrb[0].mxu0 %v4504
    %v5009 = vpop.f32.mrb[0].mxu0
    %v5010 = vadd.f32 %v4198, %v5009
    %v5011 = vpop.f32.mrb[0].mxu0
    %v5012 = vpop.f32.mrb[0].mxu0
    %v5013 = vadd.f32 %v4198, %v5012
    %v5014 = vpop.f32.mrb[0].mxu0
    %5015 = vmatprep.mubr.bf16.mxu0 0
    %5016 = vmatmul.mubr.bf16.gmra.mrb[0].mxu0 %v4507
    %v5017 = vpop.f32.mrb[0].mxu0
    %v5018 = vadd.f32 %v4198, %v5017
    %v5019 = vpop.f32.mrb[0].mxu0
    %v5020 = vpop.f32.mrb[0].mxu0
    %v5021 = vadd.f32 %v4198, %v5020
    %v5022 = vpop.f32.mrb[0].mxu0
    %5023 = vmatprep.mubr.bf16.mxu0 0
    %5024 = vmatmul.mubr.bf16.gmra.mrb[0].mxu0 %v4510
    %v5025 = vpop.f32.mrb[0].mxu0
    %v5026 = vadd.f32 %v4198, %v5025
    %v5027 = vpop.f32.mrb[0].mxu0
    %v5028 = vpop.f32.mrb[0].mxu0
    %v5029 = vadd.f32 %v4198, %v5028
    %v5030 = vpop.f32.mrb[0].mxu0
    %5031 = vmatprep.mubr.bf16.mxu0 0
    %5032 = vmatmul.mubr.bf16.gmra.mrb[0].mxu0 %v4513
    %v5033 = vpop.f32.mrb[0].mxu0
    %v5034 = vadd.f32 %v4198, %v5033
    %v5035 = vpop.f32.mrb[0].mxu0
    %v5036 = vpop.f32.mrb[0].mxu0
    %v5037 = vadd.f32 %v4198, %v5036
    %v5038 = vpop.f32.mrb[0].mxu0
    %5039 = vmatprep.mubr.bf16.mxu0 0
    %5040 = vmatmul.mubr.bf16.gmra.mrb[0].mxu0 %v4516
    %v5041 = vpop.f32.mrb[0].mxu0
    %v5042 = vadd.f32 %v4198, %v5041
    %v5043 = vpop.f32.mrb[0].mxu0
    %v5044 = vpop.f32.mrb[0].mxu0
    %v5045 = vadd.f32 %v4198, %v5044
    %v5046 = vpop.f32.mrb[0].mxu0
    %5047 = vmatprep.mubr.bf16.mxu0 0
    %5048 = vmatmul.mubr.bf16.gmra.mrb[0].mxu0 %v4519
    %v5049 = vpop.f32.mrb[0].mxu0
    %v5050 = vadd.f32 %v4198, %v5049
    %v5051 = vpop.f32.mrb[0].mxu0
    %v5052 = vpop.f32.mrb[0].mxu0
    %v5053 = vadd.f32 %v4198, %v5052
    %v5054 = vpop.f32.mrb[0].mxu0
    %5055 = vmatprep.mubr.bf16.mxu0 0
    %5056 = vmatmul.mubr.bf16.gmra.mrb[0].mxu0 %v4522
    %v5057 = vpop.f32.mrb[0].mxu0
    %v5058 = vadd.f32 %v4198, %v5057
    %v5059 = vpop.f32.mrb[0].mxu0
    %v5060 = vpop.f32.mrb[0].mxu0
    %v5061 = vadd.f32 %v4198, %v5060
    %v5062 = vpop.f32.mrb[0].mxu0
    %5063 = vmatprep.mubr.bf16.mxu0 0
    %5064 = vmatmul.mubr.bf16.gmra.mrb[0].mxu0 %v4525
    %v5065 = vpop.f32.mrb[0].mxu0
    %v5066 = vadd.f32 %v4198, %v5065
    %v5067 = vpop.f32.mrb[0].mxu0
    %v5068 = vpop.f32.mrb[0].mxu0
    %v5069 = vadd.f32 %v4198, %v5068
    %v5070 = vpop.f32.mrb[0].mxu0
    %5071 = vdwg.mxu0
    %5072 = vst.msk [vmem:[#allocation11] sm:$0xff] %vm553, %v4562
    %5073 = vst.msk [vmem:[#allocation11 + $0x8] sm:$0xff] %vm553, %v4565
    %5074 = vst.msk [vmem:[#allocation11 + $0x10] sm:$0xff] %vm553, %v4570
    %5075 = vst.msk [vmem:[#allocation11 + $0x18] sm:$0xff] %vm553, %v4573
    %5076 = vst.msk [vmem:[#allocation11 + $0x20] sm:$0xff] %vm553, %v4578
    %5077 = vst.msk [vmem:[#allocation11 + $0x28] sm:$0xff] %vm553, %v4581
    %5078 = vst.msk [vmem:[#allocation11 + $0x30] sm:$0xff] %vm553, %v4586
    %5079 = vst.msk [vmem:[#allocation11 + $0x38] sm:$0xff] %vm553, %v4589
    %5080 = vst.msk [vmem:[#allocation11 + $0x40] sm:$0xff] %vm553, %v4594
    %5081 = vst.msk [vmem:[#allocation11 + $0x48] sm:$0xff] %vm553, %v4597
    %5082 = vst.msk [vmem:[#allocation11 + $0x50] sm:$0xff] %vm553, %v4602
    %5083 = vst.msk [vmem:[#allocation11 + $0x58] sm:$0xff] %vm553, %v4605
    %5084 = vst.msk [vmem:[#allocation11 + $0x60] sm:$0xff] %vm553, %v4610
    %5085 = vst.msk [vmem:[#allocation11 + $0x68] sm:$0xff] %vm553, %v4613
    %5086 = vst.msk [vmem:[#allocation11 + $0x70] sm:$0xff] %vm553, %v4618
    %5087 = vst.msk [vmem:[#allocation11 + $0x78] sm:$0xff] %vm553, %v4621
    %5088 = vst.msk [vmem:[#allocation11 + $0x80] sm:$0xff] %vm553, %v4626
    %5089 = vst.msk [vmem:[#allocation11 + $0x88] sm:$0xff] %vm553, %v4629
    %5090 = vst.msk [vmem:[#allocation11 + $0x90] sm:$0xff] %vm553, %v4634
    %5091 = vst.msk [vmem:[#allocation11 + $0x98] sm:$0xff] %vm553, %v4637
    %5092 = vst.msk [vmem:[#allocation11 + $0xa0] sm:$0xff] %vm553, %v4642
    %5093 = vst.msk [vmem:[#allocation11 + $0xa8] sm:$0xff] %vm553, %v4645
    %5094 = vst.msk [vmem:[#allocation11 + $0xb0] sm:$0xff] %vm553, %v4650
    %5095 = vst.msk [vmem:[#allocation11 + $0xb8] sm:$0xff] %vm553, %v4653
    %5096 = vst.msk [vmem:[#allocation11 + $0xc0] sm:$0xff] %vm553, %v4658
    %5097 = vst.msk [vmem:[#allocation11 + $0xc8] sm:$0xff] %vm553, %v4661
    %5098 = vst.msk [vmem:[#allocation11 + $0xd0] sm:$0xff] %vm553, %v4666
    %5099 = vst.msk [vmem:[#allocation11 + $0xd8] sm:$0xff] %vm553, %v4669
    %5100 = vst.msk [vmem:[#allocation11 + $0xe0] sm:$0xff] %vm553, %v4674
    %5101 = vst.msk [vmem:[#allocation11 + $0xe8] sm:$0xff] %vm553, %v4677
    %5102 = vst.msk [vmem:[#allocation11 + $0xf0] sm:$0xff] %vm553, %v4682
    %5103 = vst.msk [vmem:[#allocation11 + $0xf8] sm:$0xff] %vm553, %v4685
    %5104 = vst.msk [vmem:[#allocation11 + $0x100] sm:$0xff] %vm553, %v4690
    %5105 = vst.msk [vmem:[#allocation11 + $0x108] sm:$0xff] %vm553, %v4693
    %5106 = vst.msk [vmem:[#allocation11 + $0x110] sm:$0xff] %vm553, %v4698
    %5107 = vst.msk [vmem:[#allocation11 + $0x118] sm:$0xff] %vm553, %v4701
    %5108 = vst.msk [vmem:[#allocation11 + $0x120] sm:$0xff] %vm553, %v4706
    %5109 = vst.msk [vmem:[#allocation11 + $0x128] sm:$0xff] %vm553, %v4709
    %5110 = vst.msk [vmem:[#allocation11 + $0x130] sm:$0xff] %vm553, %v4714
    %5111 = vst.msk [vmem:[#allocation11 + $0x138] sm:$0xff] %vm553, %v4717
    %5112 = vst.msk [vmem:[#allocation11 + $0x140] sm:$0xff] %vm553, %v4722
    %5113 = vst.msk [vmem:[#allocation11 + $0x148] sm:$0xff] %vm553, %v4725
    %5114 = vst.msk [vmem:[#allocation11 + $0x150] sm:$0xff] %vm553, %v4730
    %5115 = vst.msk [vmem:[#allocation11 + $0x158] sm:$0xff] %vm553, %v4733
    %5116 = vst.msk [vmem:[#allocation11 + $0x160] sm:$0xff] %vm553, %v4738
    %5117 = vst.msk [vmem:[#allocation11 + $0x168] sm:$0xff] %vm553, %v4741
    %5118 = vst.msk [vmem:[#allocation11 + $0x170] sm:$0xff] %vm553, %v4746
    %5119 = vst.msk [vmem:[#allocation11 + $0x178] sm:$0xff] %vm553, %v4749
    %5120 = vst.msk [vmem:[#allocation11 + $0x180] sm:$0xff] %vm553, %v4754
    %5121 = vst.msk [vmem:[#allocation11 + $0x188] sm:$0xff] %vm553, %v4757
    %5122 = vst.msk [vmem:[#allocation11 + $0x190] sm:$0xff] %vm553, %v4762
    %5123 = vst.msk [vmem:[#allocation11 + $0x198] sm:$0xff] %vm553, %v4765
    %5124 = vst.msk [vmem:[#allocation11 + $0x1a0] sm:$0xff] %vm553, %v4770
    %5125 = vst.msk [vmem:[#allocation11 + $0x1a8] sm:$0xff] %vm553, %v4773
    %5126 = vst.msk [vmem:[#allocation11 + $0x1b0] sm:$0xff] %vm553, %v4778
    %5127 = vst.msk [vmem:[#allocation11 + $0x1b8] sm:$0xff] %vm553, %v4781
    %5128 = vst.msk [vmem:[#allocation11 + $0x1c0] sm:$0xff] %vm553, %v4786
    %5129 = vst.msk [vmem:[#allocation11 + $0x1c8] sm:$0xff] %vm553, %v4789
    %5130 = vst.msk [vmem:[#allocation11 + $0x1d0] sm:$0xff] %vm553, %v4794
    %5131 = vst.msk [vmem:[#allocation11 + $0x1d8] sm:$0xff] %vm553, %v4797
    %5132 = vst.msk [vmem:[#allocation11 + $0x1e0] sm:$0xff] %vm553, %v4802
    %5133 = vst.msk [vmem:[#allocation11 + $0x1e8] sm:$0xff] %vm553, %v4805
    %5134 = vst.msk [vmem:[#allocation11 + $0x1f0] sm:$0xff] %vm553, %v4810
    %5135 = vst.msk [vmem:[#allocation11 + $0x1f8] sm:$0xff] %vm553, %v4813
    %5136 = vst.msk [vmem:[#allocation11 + $0x200] sm:$0xff] %vm553, %v4818
    %5137 = vst.msk [vmem:[#allocation11 + $0x208] sm:$0xff] %vm553, %v4821
    %5138 = vst.msk [vmem:[#allocation11 + $0x210] sm:$0xff] %vm553, %v4826
    %5139 = vst.msk [vmem:[#allocation11 + $0x218] sm:$0xff] %vm553, %v4829
    %5140 = vst.msk [vmem:[#allocation11 + $0x220] sm:$0xff] %vm553, %v4834
    %5141 = vst.msk [vmem:[#allocation11 + $0x228] sm:$0xff] %vm553, %v4837
    %5142 = vst.msk [vmem:[#allocation11 + $0x230] sm:$0xff] %vm553, %v4842
    %5143 = vst.msk [vmem:[#allocation11 + $0x238] sm:$0xff] %vm553, %v4845
    %5144 = vst.msk [vmem:[#allocation11 + $0x240] sm:$0xff] %vm553, %v4850
    %5145 = vst.msk [vmem:[#allocation11 + $0x248] sm:$0xff] %vm553, %v4853
    %5146 = vst.msk [vmem:[#allocation11 + $0x250] sm:$0xff] %vm553, %v4858
    %5147 = vst.msk [vmem:[#allocation11 + $0x258] sm:$0xff] %vm553, %v4861
    %5148 = vst.msk [vmem:[#allocation11 + $0x260] sm:$0xff] %vm553, %v4866
    %5149 = vst.msk [vmem:[#allocation11 + $0x268] sm:$0xff] %vm553, %v4869
    %5150 = vst.msk [vmem:[#allocation11 + $0x270] sm:$0xff] %vm553, %v4874
    %5151 = vst.msk [vmem:[#allocation11 + $0x278] sm:$0xff] %vm553, %v4877
    %5152 = vst.msk [vmem:[#allocation11 + $0x280] sm:$0xff] %vm553, %v4882
    %5153 = vst.msk [vmem:[#allocation11 + $0x288] sm:$0xff] %vm553, %v4885
    %5154 = vst.msk [vmem:[#allocation11 + $0x290] sm:$0xff] %vm553, %v4890
    %5155 = vst.msk [vmem:[#allocation11 + $0x298] sm:$0xff] %vm553, %v4893
    %5156 = vst.msk [vmem:[#allocation11 + $0x2a0] sm:$0xff] %vm553, %v4898
    %5157 = vst.msk [vmem:[#allocation11 + $0x2a8] sm:$0xff] %vm553, %v4901
    %5158 = vst.msk [vmem:[#allocation11 + $0x2b0] sm:$0xff] %vm553, %v4906
    %5159 = vst.msk [vmem:[#allocation11 + $0x2b8] sm:$0xff] %vm553, %v4909
    %5160 = vst.msk [vmem:[#allocation11 + $0x2c0] sm:$0xff] %vm553, %v4914
    %5161 = vst.msk [vmem:[#allocation11 + $0x2c8] sm:$0xff] %vm553, %v4917
    %5162 = vst.msk [vmem:[#allocation11 + $0x2d0] sm:$0xff] %vm553, %v4922
    %5163 = vst.msk [vmem:[#allocation11 + $0x2d8] sm:$0xff] %vm553, %v4925
    %5164 = vst.msk [vmem:[#allocation11 + $0x2e0] sm:$0xff] %vm553, %v4930
    %5165 = vst.msk [vmem:[#allocation11 + $0x2e8] sm:$0xff] %vm553, %v4933
    %5166 = vst.msk [vmem:[#allocation11 + $0x2f0] sm:$0xff] %vm553, %v4938
    %5167 = vst.msk [vmem:[#allocation11 + $0x2f8] sm:$0xff] %vm553, %v4941
    %5168 = vst.msk [vmem:[#allocation11 + $0x300] sm:$0xff] %vm553, %v4946
    %5169 = vst.msk [vmem:[#allocation11 + $0x308] sm:$0xff] %vm553, %v4949
    %5170 = vst.msk [vmem:[#allocation11 + $0x310] sm:$0xff] %vm553, %v4954
    %5171 = vst.msk [vmem:[#allocation11 + $0x318] sm:$0xff] %vm553, %v4957
    %5172 = vst.msk [vmem:[#allocation11 + $0x320] sm:$0xff] %vm553, %v4962
    %5173 = vst.msk [vmem:[#allocation11 + $0x328] sm:$0xff] %vm553, %v4965
    %5174 = vst.msk [vmem:[#allocation11 + $0x330] sm:$0xff] %vm553, %v4970
    %5175 = vst.msk [vmem:[#allocation11 + $0x338] sm:$0xff] %vm553, %v4973
    %5176 = vst.msk [vmem:[#allocation11 + $0x340] sm:$0xff] %vm553, %v4978
    %5177 = vst.msk [vmem:[#allocation11 + $0x348] sm:$0xff] %vm553, %v4981
    %5178 = vst.msk [vmem:[#allocation11 + $0x350] sm:$0xff] %vm553, %v4986
    %5179 = vst.msk [vmem:[#allocation11 + $0x358] sm:$0xff] %vm553, %v4989
    %5180 = vst.msk [vmem:[#allocation11 + $0x360] sm:$0xff] %vm553, %v4994
    %5181 = vst.msk [vmem:[#allocation11 + $0x368] sm:$0xff] %vm553, %v4997
    %5182 = vst.msk [vmem:[#allocation11 + $0x370] sm:$0xff] %vm553, %v5002
    %5183 = vst.msk [vmem:[#allocation11 + $0x378] sm:$0xff] %vm553, %v5005
    %5184 = vst.msk [vmem:[#allocation11 + $0x380] sm:$0xff] %vm553, %v5010
    %5185 = vst.msk [vmem:[#allocation11 + $0x388] sm:$0xff] %vm553, %v5013
    %5186 = vst.msk [vmem:[#allocation11 + $0x390] sm:$0xff] %vm553, %v5018
    %5187 = vst.msk [vmem:[#allocation11 + $0x398] sm:$0xff] %vm553, %v5021
    %5188 = vst.msk [vmem:[#allocation11 + $0x3a0] sm:$0xff] %vm553, %v5026
    %5189 = vst.msk [vmem:[#allocation11 + $0x3a8] sm:$0xff] %vm553, %v5029
    %5190 = vst.msk [vmem:[#allocation11 + $0x3b0] sm:$0xff] %vm553, %v5034
    %5191 = vst.msk [vmem:[#allocation11 + $0x3b8] sm:$0xff] %vm553, %v5037
    %5192 = vst.msk [vmem:[#allocation11 + $0x3c0] sm:$0xff] %vm553, %v5042
    %5193 = vst.msk [vmem:[#allocation11 + $0x3c8] sm:$0xff] %vm553, %v5045
    %5194 = vst.msk [vmem:[#allocation11 + $0x3d0] sm:$0xff] %vm553, %v5050
    %5195 = vst.msk [vmem:[#allocation11 + $0x3d8] sm:$0xff] %vm553, %v5053
    %5196 = vst.msk [vmem:[#allocation11 + $0x3e0] sm:$0xff] %vm553, %v5058
    %5197 = vst.msk [vmem:[#allocation11 + $0x3e8] sm:$0xff] %vm553, %v5061
    %5198 = vst.msk [vmem:[#allocation11 + $0x3f0] sm:$0xff] %vm553, %v5066
    %5199 = vst.msk [vmem:[#allocation11 + $0x3f8] sm:$0xff] %vm553, %v5069
    // Predicated region
    $region42: #{tpu_custom_call.1} parent=1 // pred_check
      _
    $region43: #{tpu_custom_call.1} parent=1 // pred_check_branch
      %5201 = sbr.rel (0) target = $region45
    $region44: #{tpu_custom_call.1} parent=1 // pred_region
      %s5203 = ssub.s32 16384, 14464
      %5204 = vsyncadd [#allocation4], %s5203
      %s5205 = sshll.u32 [#allocation11], 4
      %s5206 = int_to_ptr.vmem [resolvable:$true] %s5205
      %5211 = dma.vmem_to_hbm [thread:$0]  %s5206, 14464, %s5, [#allocation4], 128, 128, 8
    $region45: #{tpu_custom_call.1} parent=1 // pred_fallthru
      _
    // Predicated region
    $region46: #{tpu_custom_call.1} parent=1 // pred_check
      _
    $region47: #{tpu_custom_call.1} parent=1 // pred_check_branch
      %5213 = sbr.rel (0) target = $region49
    $region48: #{tpu_custom_call.1} parent=1 // pred_region
      %5214 = dma.done [#allocation4], 16384
    $region49: #{tpu_custom_call.1} parent=1 // pred_fallthru
      _
    %5215 = vsyncpa [#allocation3], 1
    %5216 = vsyncpa [#allocation6], 1
    %5217 = vsyncpa [#allocation9], 1
    %5218 = vsyncpa [#allocation4], 1

</llo_original>
